<compile_context>
chip_gen: v5e
topology: v5e:2x2
jax: 0.10.0
libtpu: 0.0.40
codegen_flags: <defaults>
</compile_context>

<pallas_src>
import math
import functools

import jax
import jax.numpy as jnp
from jax.experimental import pallas as pl
from jax.experimental.pallas import tpu as pltpu


# --------------------------------- helpers ---------------------------------

def _layernorm(x, gamma, beta, eps=1e-5):
    mu = jnp.mean(x, axis=-1, keepdims=True)
    var = jnp.mean((x - mu) ** 2, axis=-1, keepdims=True)
    return (x - mu) * jax.lax.rsqrt(var + eps) * gamma + beta


# ----------------------------- fused SepAction kernel -----------------------------

def _make_sep_action_kernel(*, N, L, T, D, d_ff, n_layers, n_heads, threshold):
    d_k = D // n_heads
    scale = 1.0 / math.sqrt(d_k)
    bf16 = jnp.bfloat16
    f32 = jnp.float32

    def kernel(x_obs_ref, x_act_ref,
               obs_in_w, obs_in_b, act_in_w, act_in_b, rtok, pos,
               Wq, Bq, Wk, Bk, Wv, Bv, Wo, Bo,
               G1, Bt1, W1, B1, W2, B2, G2, Bt2,
               obs_out_w, obs_out_b, rew_out_w, rew_out_b,
               pred_obs_ref, pred_rew_ref, eta_ref, asum_ref):

        # ---- input projections (fused) ----
        obs_tok = jnp.dot(x_obs_ref[...].astype(bf16), obs_in_w[...],
                          preferred_element_type=f32) + obs_in_b[...]      # (N*L, D)
        act_tok = jnp.dot(x_act_ref[...].astype(bf16), act_in_w[...],
                          preferred_element_type=f32) + act_in_b[...]      # (N, D)
        rew_tok = rtok[...]                                                # (1, D)
        pos_e = pos[...]                                                   # (T, D)

        # build [obs tokens | action token | reward token] per batch, add
        # positional embedding, flatten to one (N*T, D) slab.
        xb_list = []
        for b in range(N):
            xb = jnp.concatenate(
                [obs_tok[b * L:(b + 1) * L], act_tok[b:b + 1], rew_tok], axis=0)
            xb_list.append(xb + pos_e)
        x = jnp.concatenate(xb_list, axis=0)                               # (N*T, D)

        # eta / attention_sum state kept in VMEM (values) across layers.
        eye = (jax.lax.broadcasted_iota(jnp.int32, (T, T), 0)
               == jax.lax.broadcasted_iota(jnp.int32, (T, T), 1)).astype(f32)
        eta = [eye for _ in range(N)]
        asum = [jnp.zeros((T, T), f32) for _ in range(N)]

        # ---- transformer layers (all weights resident in VMEM) ----
        for l in range(n_layers):
            x_bf = x.astype(bf16)
            ctx = [[None] * n_heads for _ in range(N)]
            amask_layer = [jnp.zeros((T, T), f32) for _ in range(N)]

            for h in range(n_heads):
                # head-major stacked weights: leading-axis indexing only,
                # no lane slicing of activations or weights.
                q = jnp.dot(x_bf, Wq[l, h], preferred_element_type=f32) + Bq[l, h]
                k = jnp.dot(x_bf, Wk[l, h], preferred_element_type=f32) + Bk[l, h]
                v = jnp.dot(x_bf, Wv[l, h], preferred_element_type=f32) + Bv[l, h]
                for b in range(N):
                    qb = q[b * T:(b + 1) * T].astype(bf16)        # (T, d_k)
                    kb = k[b * T:(b + 1) * T].astype(bf16)
                    vb = v[b * T:(b + 1) * T].astype(bf16)
                    s = jnp.dot(qb, kb.T, preferred_element_type=f32) * scale
                    m = jnp.max(s, axis=-1, keepdims=True)
                    e = jnp.exp(s - m)
                    denom = jnp.sum(e, axis=-1, keepdims=True)
                    probs = e * pl.reciprocal(denom, approx=True)  # EUP divide
                    keep = probs >= threshold          # ~low_attention_mask
                    probs_kept = jnp.where(keep, probs, 0.0)
                    ctx[b][h] = jnp.dot(probs_kept.astype(bf16), vb,
                                        preferred_element_type=f32)  # (T, d_k)
                    asum[b] = asum[b] + probs
                    amask_layer[b] = amask_layer[b] + keep.astype(f32)

            # merge heads (lane concat) and batches, then ONE output projection.
            merged = jnp.concatenate(
                [jnp.concatenate(ctx[b], axis=-1) for b in range(N)], axis=0)
            attn = jnp.dot(merged.astype(bf16), Wo[l],
                           preferred_element_type=f32) + Bo[l]

            # dropout = identity (inference); residual + LayerNorm 1
            x1 = _layernorm(x + attn, G1[l], Bt1[l])

            # position-wise FFN (relu MLP)
            h1 = jnp.maximum(
                jnp.dot(x1.astype(bf16), W1[l], preferred_element_type=f32)
                + B1[l], 0.0)
            ffn = jnp.dot(h1.astype(bf16), W2[l], preferred_element_type=f32) + B2[l]

            # dropout = identity; residual + LayerNorm 2
            x = _layernorm(x1 + ffn, G2[l], Bt2[l])

            # eta / attention-mask recurrence, fused in-kernel (tiny TxT matmuls)
            for b in range(N):
                eta_b = eta[b] + jnp.dot(amask_layer[b], eta[b],
                                         preferred_element_type=f32)
                eta[b] = jnp.where(eta_b != 0, 1.0, eta_b)

        # ---- output projections (fused) ----
        obs_rows = jnp.concatenate([x[b * T:b * T + L] for b in range(N)], axis=0)
        rew_rows = jnp.concatenate(
            [x[b * T + T - 1:b * T + T] for b in range(N)], axis=0)
        pred_obs_ref[...] = jnp.dot(obs_rows.astype(bf16), obs_out_w[...],
                                    preferred_element_type=f32) + obs_out_b[...]
        pred_rew_ref[...] = jnp.dot(rew_rows.astype(bf16), rew_out_w[...],
                                    preferred_element_type=f32) + rew_out_b[...]
        for b in range(N):
            eta_ref[b] = eta[b]
            asum_ref[b] = asum[b]

    return kernel


# ------------------------------- parameter setup -------------------------------

def init_params(key, *, in_obs_shape, out_obs_shape, action_dim, d_model,
                n_heads, n_layers, d_ff):
    H, W, C_in = in_obs_shape
    C_out = out_obs_shape[-1]
    T = H * W + 2
    keys = jax.random.split(key, 8 + n_layers)
    s = 0.05

    def lin(k, din, dout):
        return (jax.random.normal(k, (din, dout), jnp.float32) * s,
                jnp.zeros((dout,), jnp.float32))

    p = {}
    p["obs_in_w"], p["obs_in_b"] = lin(keys[0], C_in, d_model)
    p["act_in_w"], p["act_in_b"] = lin(keys[1], action_dim, d_model)
    p["obs_out_w"], p["obs_out_b"] = lin(keys[2], d_model, C_out)
    p["rew_out_w"], p["rew_out_b"] = lin(keys[3], d_model, 1)
    p["reward_token"] = jax.random.normal(keys[4], (1, 1, d_model), jnp.float32) * 0.02
    p["pos_embedding"] = jax.random.normal(keys[5], (1, T, d_model), jnp.float32) * 0.02

    layers = []
    for li in range(n_layers):
        lk = jax.random.split(keys[8 + li], 6)
        lp = {}
        lp["wq"], lp["bq"] = lin(lk[0], d_model, d_model)
        lp["wk"], lp["bk"] = lin(lk[1], d_model, d_model)
        lp["wv"], lp["bv"] = lin(lk[2], d_model, d_model)
        lp["wo"], lp["bo"] = lin(lk[3], d_model, d_model)
        lp["w1"], lp["b1"] = lin(lk[4], d_model, d_ff)
        lp["w2"], lp["b2"] = lin(lk[5], d_ff, d_model)
        lp["ln1_g"] = jnp.ones((d_model,), jnp.float32)
        lp["ln1_b"] = jnp.zeros((d_model,), jnp.float32)
        lp["ln2_g"] = jnp.ones((d_model,), jnp.float32)
        lp["ln2_b"] = jnp.zeros((d_model,), jnp.float32)
        layers.append(lp)
    p["layers"] = layers
    return p


# --------------------------------- forward pass ---------------------------------

def sep_action_forward(params, x_obs, x_action, *, in_obs_shape, out_obs_shape,
                       n_heads, threshold):
    H, W, C_in = in_obs_shape
    C_out = out_obs_shape[-1]
    N = x_obs.shape[0]
    L = H * W
    T = L + 2
    D = params["pos_embedding"].shape[-1]
    d_ff = params["layers"][0]["w1"].shape[1]
    n_layers = len(params["layers"])
    d_k = D // n_heads
    bf16 = jnp.bfloat16

    # ---- pack / stack parameters (host-side layout plumbing, free) ----
    def head_major(w):   # (D, D) -> (n_heads, D, d_k)
        return w.reshape(D, n_heads, d_k).transpose(1, 0, 2)

    def head_bias(b):    # (D,) -> (n_heads, 1, d_k)
        return b.reshape(n_heads, 1, d_k)

    Ls = params["layers"]
    Wq = jnp.stack([head_major(p["wq"]) for p in Ls]).astype(bf16)
    Bq = jnp.stack([head_bias(p["bq"]) for p in Ls])
    Wk = jnp.stack([head_major(p["wk"]) for p in Ls]).astype(bf16)
    Bk = jnp.stack([head_bias(p["bk"]) for p in Ls])
    Wv = jnp.stack([head_major(p["wv"]) for p in Ls]).astype(bf16)
    Bv = jnp.stack([head_bias(p["bv"]) for p in Ls])
    Wo = jnp.stack([p["wo"] for p in Ls]).astype(bf16)
    Bo = jnp.stack([p["bo"].reshape(1, D) for p in Ls])
    G1 = jnp.stack([p["ln1_g"].reshape(1, D) for p in Ls])
    Bt1 = jnp.stack([p["ln1_b"].reshape(1, D) for p in Ls])
    W1 = jnp.stack([p["w1"] for p in Ls]).astype(bf16)
    B1 = jnp.stack([p["b1"].reshape(1, d_ff) for p in Ls])
    W2 = jnp.stack([p["w2"] for p in Ls]).astype(bf16)
    B2 = jnp.stack([p["b2"].reshape(1, D) for p in Ls])
    G2 = jnp.stack([p["ln2_g"].reshape(1, D) for p in Ls])
    Bt2 = jnp.stack([p["ln2_b"].reshape(1, D) for p in Ls])

    x_obs_flat = x_obs.astype(jnp.float32).reshape(N * L, C_in)
    x_act = x_action.astype(jnp.float32)

    kernel = _make_sep_action_kernel(N=N, L=L, T=T, D=D, d_ff=d_ff,
                                     n_layers=n_layers, n_heads=n_heads,
                                     threshold=threshold)

    out_shape = (
        jax.ShapeDtypeStruct((N * L, C_out), jnp.float32),   # pred_obs (flat)
        jax.ShapeDtypeStruct((N, 1), jnp.float32),           # pred_reward
        jax.ShapeDtypeStruct((N, T, T), jnp.float32),        # eta
        jax.ShapeDtypeStruct((N, T, T), jnp.float32),        # attention_sum
    )

    args = (
        x_obs_flat, x_act,
        params["obs_in_w"].astype(bf16), params["obs_in_b"].reshape(1, D),
        params["act_in_w"].astype(bf16), params["act_in_b"].reshape(1, D),
        params["reward_token"].reshape(1, D),
        params["pos_embedding"].reshape(T, D),
        Wq, Bq, Wk, Bk, Wv, Bv, Wo, Bo,
        G1, Bt1, W1, B1, W2, B2, G2, Bt2,
        params["obs_out_w"].astype(bf16), params["obs_out_b"].reshape(1, C_out),
        params["rew_out_w"].astype(bf16), params["rew_out_b"].reshape(1, 1),
    )

    pred_obs_flat, pred_reward, eta, attention_sum = pl.pallas_call(
        kernel,
        out_shape=out_shape,
        compiler_params=pltpu.CompilerParams(vmem_limit_bytes=64 << 20),
    )(*args)

    return {"pred_obs": pred_obs_flat.reshape(N, H, W, C_out),
            "pred_reward": pred_reward,
            "eta": eta,
            "attention_sum": attention_sum}


# ------------------------------------- main -------------------------------------

if __name__ == "__main__":
    # small shapes consistent with the module
    in_obs_shape = (4, 4, 3)     # (H, W, C_in)
    out_obs_shape = (4, 4, 3)    # (H, W, C_out)
    action_dim = 6
    d_model = 32
    n_heads = 2
    n_layers = 2
    d_ff = 64
    threshold = 0.1
    N = 2

    key = jax.random.PRNGKey(0)
    k_param, k_obs, k_act = jax.random.split(key, 3)

    params = init_params(k_param, in_obs_shape=in_obs_shape,
                         out_obs_shape=out_obs_shape, action_dim=action_dim,
                         d_model=d_model, n_heads=n_heads, n_layers=n_layers,
                         d_ff=d_ff)

    x_obs = jax.random.normal(k_obs, (N, *in_obs_shape), jnp.float32)
    x_action = jax.random.normal(k_act, (N, action_dim), jnp.float32)

    fwd = functools.partial(sep_action_forward, in_obs_shape=in_obs_shape,
                            out_obs_shape=out_obs_shape, n_heads=n_heads,
                            threshold=threshold)

    out = fwd(params, x_obs, x_action)
    jax.block_until_ready(out)

    assert out["pred_obs"].shape == (N, *out_obs_shape)
    assert out["pred_reward"].shape == (N, 1)
    T = in_obs_shape[0] * in_obs_shape[1] + 2
    assert out["eta"].shape == (N, T, T)
    assert out["attention_sum"].shape == (N, T, T)

    # TODO(synk): dropout layers are treated as identity (inference mode); no
    # stochastic dropout is implemented in the kernel.
    print("KERNEL_OK")
</pallas_src>

<mosaic_0001>
module attributes {stable_mosaic.version = 11 : i64} {
  func.func @kernel(%arg0: memref<32x3xf32, #tpu.memory_space<vmem>>, %arg1: memref<2x6xf32, #tpu.memory_space<vmem>>, %arg2: memref<3x32xbf16, #tpu.memory_space<vmem>>, %arg3: memref<1x32xf32, #tpu.memory_space<vmem>>, %arg4: memref<6x32xbf16, #tpu.memory_space<vmem>>, %arg5: memref<1x32xf32, #tpu.memory_space<vmem>>, %arg6: memref<1x32xf32, #tpu.memory_space<vmem>>, %arg7: memref<18x32xf32, #tpu.memory_space<vmem>>, %arg8: memref<2x2x32x16xbf16, #tpu.memory_space<vmem>>, %arg9: memref<2x2x1x16xf32, #tpu.memory_space<vmem>>, %arg10: memref<2x2x32x16xbf16, #tpu.memory_space<vmem>>, %arg11: memref<2x2x1x16xf32, #tpu.memory_space<vmem>>, %arg12: memref<2x2x32x16xbf16, #tpu.memory_space<vmem>>, %arg13: memref<2x2x1x16xf32, #tpu.memory_space<vmem>>, %arg14: memref<2x32x32xbf16, #tpu.memory_space<vmem>>, %arg15: memref<2x1x32xf32, #tpu.memory_space<vmem>>, %arg16: memref<2x1x32xf32, #tpu.memory_space<vmem>>, %arg17: memref<2x1x32xf32, #tpu.memory_space<vmem>>, %arg18: memref<2x32x64xbf16, #tpu.memory_space<vmem>>, %arg19: memref<2x1x64xf32, #tpu.memory_space<vmem>>, %arg20: memref<2x64x32xbf16, #tpu.memory_space<vmem>>, %arg21: memref<2x1x32xf32, #tpu.memory_space<vmem>>, %arg22: memref<2x1x32xf32, #tpu.memory_space<vmem>>, %arg23: memref<2x1x32xf32, #tpu.memory_space<vmem>>, %arg24: memref<32x3xbf16, #tpu.memory_space<vmem>>, %arg25: memref<1x3xf32, #tpu.memory_space<vmem>>, %arg26: memref<32x1xbf16, #tpu.memory_space<vmem>>, %arg27: memref<1x1xf32, #tpu.memory_space<vmem>>, %arg28: memref<32x3xf32, #tpu.memory_space<vmem>>, %arg29: memref<2x1xf32, #tpu.memory_space<vmem>>, %arg30: memref<2x18x18xf32, #tpu.memory_space<vmem>>, %arg31: memref<2x18x18xf32, #tpu.memory_space<vmem>>) attributes {dimension_semantics = [], scalar_prefetch = 0 : i64, scratch_operands = 0 : i64, tpu.core_type = #tpu.core_type<tc>} {
    %c0 = arith.constant 0 : index
    %c0_0 = arith.constant 0 : index
    %0 = vector.load %arg0[%c0, %c0_0] : memref<32x3xf32, #tpu.memory_space<vmem>>, vector<32x3xf32>
    %1 = arith.truncf %0 : vector<32x3xf32> to vector<32x3xbf16>
    %c0_1 = arith.constant 0 : index
    %c0_2 = arith.constant 0 : index
    %2 = vector.load %arg2[%c0_1, %c0_2] : memref<3x32xbf16, #tpu.memory_space<vmem>>, vector<3x32xbf16>
    %cst = arith.constant dense<0.000000e+00> : vector<32x32xf32>
    %3 = tpu.matmul %1, %2, %cst {dimension_numbers = #tpu.dot_dimension_numbers<[1], [0], [0], [1], [0, 0, 1, 1], [], []>} : vector<32x3xbf16>, vector<3x32xbf16>, vector<32x32xf32> -> vector<32x32xf32>
    %c0_3 = arith.constant 0 : index
    %c0_4 = arith.constant 0 : index
    %4 = vector.load %arg3[%c0_3, %c0_4] : memref<1x32xf32, #tpu.memory_space<vmem>>, vector<1x32xf32>
    %5 = vector.broadcast %4 : vector<1x32xf32> to vector<32x32xf32>
    %6 = arith.addf %3, %5 : vector<32x32xf32>
    %c0_5 = arith.constant 0 : index
    %c0_6 = arith.constant 0 : index
    %7 = vector.load %arg1[%c0_5, %c0_6] : memref<2x6xf32, #tpu.memory_space<vmem>>, vector<2x6xf32>
    %8 = arith.truncf %7 : vector<2x6xf32> to vector<2x6xbf16>
    %c0_7 = arith.constant 0 : index
    %c0_8 = arith.constant 0 : index
    %9 = vector.load %arg4[%c0_7, %c0_8] : memref<6x32xbf16, #tpu.memory_space<vmem>>, vector<6x32xbf16>
    %cst_9 = arith.constant dense<0.000000e+00> : vector<2x32xf32>
    %10 = tpu.matmul %8, %9, %cst_9 {dimension_numbers = #tpu.dot_dimension_numbers<[1], [0], [0], [1], [0, 0, 1, 1], [], []>} : vector<2x6xbf16>, vector<6x32xbf16>, vector<2x32xf32> -> vector<2x32xf32>
    %c0_10 = arith.constant 0 : index
    %c0_11 = arith.constant 0 : index
    %11 = vector.load %arg5[%c0_10, %c0_11] : memref<1x32xf32, #tpu.memory_space<vmem>>, vector<1x32xf32>
    %12 = vector.broadcast %11 : vector<1x32xf32> to vector<2x32xf32>
    %13 = arith.addf %10, %12 : vector<2x32xf32>
    %c0_12 = arith.constant 0 : index
    %c0_13 = arith.constant 0 : index
    %14 = vector.load %arg6[%c0_12, %c0_13] : memref<1x32xf32, #tpu.memory_space<vmem>>, vector<1x32xf32>
    %c0_14 = arith.constant 0 : index
    %c0_15 = arith.constant 0 : index
    %15 = vector.load %arg7[%c0_14, %c0_15] : memref<18x32xf32, #tpu.memory_space<vmem>>, vector<18x32xf32>
    %16 = vector.extract_strided_slice %6 {offsets = [0, 0], sizes = [16, 32], strides = [1, 1]} : vector<32x32xf32> to vector<16x32xf32>
    %17 = vector.extract_strided_slice %13 {offsets = [0, 0], sizes = [1, 32], strides = [1, 1]} : vector<2x32xf32> to vector<1x32xf32>
    %18 = tpu.concatenate %16, %17, %14 in 0 : vector<16x32xf32>, vector<1x32xf32>, vector<1x32xf32> -> vector<18x32xf32>
    %19 = arith.addf %18, %15 : vector<18x32xf32>
    %20 = vector.extract_strided_slice %6 {offsets = [16, 0], sizes = [16, 32], strides = [1, 1]} : vector<32x32xf32> to vector<16x32xf32>
    %21 = vector.extract_strided_slice %13 {offsets = [1, 0], sizes = [1, 32], strides = [1, 1]} : vector<2x32xf32> to vector<1x32xf32>
    %22 = tpu.concatenate %20, %21, %14 in 0 : vector<16x32xf32>, vector<1x32xf32>, vector<1x32xf32> -> vector<18x32xf32>
    %23 = arith.addf %22, %15 : vector<18x32xf32>
    %24 = tpu.concatenate %19, %23 in 0 : vector<18x32xf32>, vector<18x32xf32> -> vector<36x32xf32>
    %25 = tpu.iota {dimensions = array<i32: 0>} : vector<18x18xi32>
    %26 = tpu.iota {dimensions = array<i32: 1>} : vector<18x18xi32>
    %27 = arith.cmpi eq, %25, %26 : vector<18x18xi32>
    %28 = arith.extui %27 : vector<18x18xi1> to vector<18x18xi32>
    %29 = arith.sitofp %28 : vector<18x18xi32> to vector<18x18xf32>
    %cst_16 = arith.constant 0.000000e+00 : f32
    %30 = vector.broadcast %cst_16 : f32 to vector<18x18xf32>
    %cst_17 = arith.constant 0.000000e+00 : f32
    %31 = vector.broadcast %cst_17 : f32 to vector<18x18xf32>
    %32 = arith.truncf %24 : vector<36x32xf32> to vector<36x32xbf16>
    %cst_18 = arith.constant 0.000000e+00 : f32
    %33 = vector.broadcast %cst_18 : f32 to vector<18x18xf32>
    %cst_19 = arith.constant 0.000000e+00 : f32
    %34 = vector.broadcast %cst_19 : f32 to vector<18x18xf32>
    %c0_20 = arith.constant 0 : index
    %c0_21 = arith.constant 0 : index
    %c0_22 = arith.constant 0 : index
    %c0_23 = arith.constant 0 : index
    %35 = vector.load %arg8[%c0_20, %c0_21, %c0_22, %c0_23] : memref<2x2x32x16xbf16, #tpu.memory_space<vmem>>, vector<1x1x32x16xbf16>
    %36 = vector.shape_cast %35 : vector<1x1x32x16xbf16> to vector<32x16xbf16>
    %cst_24 = arith.constant dense<0.000000e+00> : vector<36x16xf32>
    %37 = tpu.matmul %32, %36, %cst_24 {dimension_numbers = #tpu.dot_dimension_numbers<[1], [0], [0], [1], [0, 0, 1, 1], [], []>} : vector<36x32xbf16>, vector<32x16xbf16>, vector<36x16xf32> -> vector<36x16xf32>
    %c0_25 = arith.constant 0 : index
    %c0_26 = arith.constant 0 : index
    %c0_27 = arith.constant 0 : index
    %c0_28 = arith.constant 0 : index
    %38 = vector.load %arg9[%c0_25, %c0_26, %c0_27, %c0_28] : memref<2x2x1x16xf32, #tpu.memory_space<vmem>>, vector<1x1x1x16xf32>
    %39 = vector.shape_cast %38 : vector<1x1x1x16xf32> to vector<1x16xf32>
    %40 = vector.broadcast %39 : vector<1x16xf32> to vector<36x16xf32>
    %41 = arith.addf %37, %40 : vector<36x16xf32>
    %c0_29 = arith.constant 0 : index
    %c0_30 = arith.constant 0 : index
    %c0_31 = arith.constant 0 : index
    %c0_32 = arith.constant 0 : index
    %42 = vector.load %arg10[%c0_29, %c0_30, %c0_31, %c0_32] : memref<2x2x32x16xbf16, #tpu.memory_space<vmem>>, vector<1x1x32x16xbf16>
    %43 = vector.shape_cast %42 : vector<1x1x32x16xbf16> to vector<32x16xbf16>
    %cst_33 = arith.constant dense<0.000000e+00> : vector<36x16xf32>
    %44 = tpu.matmul %32, %43, %cst_33 {dimension_numbers = #tpu.dot_dimension_numbers<[1], [0], [0], [1], [0, 0, 1, 1], [], []>} : vector<36x32xbf16>, vector<32x16xbf16>, vector<36x16xf32> -> vector<36x16xf32>
    %c0_34 = arith.constant 0 : index
    %c0_35 = arith.constant 0 : index
    %c0_36 = arith.constant 0 : index
    %c0_37 = arith.constant 0 : index
    %45 = vector.load %arg11[%c0_34, %c0_35, %c0_36, %c0_37] : memref<2x2x1x16xf32, #tpu.memory_space<vmem>>, vector<1x1x1x16xf32>
    %46 = vector.shape_cast %45 : vector<1x1x1x16xf32> to vector<1x16xf32>
    %47 = vector.broadcast %46 : vector<1x16xf32> to vector<36x16xf32>
    %48 = arith.addf %44, %47 : vector<36x16xf32>
    %c0_38 = arith.constant 0 : index
    %c0_39 = arith.constant 0 : index
    %c0_40 = arith.constant 0 : index
    %c0_41 = arith.constant 0 : index
    %49 = vector.load %arg12[%c0_38, %c0_39, %c0_40, %c0_41] : memref<2x2x32x16xbf16, #tpu.memory_space<vmem>>, vector<1x1x32x16xbf16>
    %50 = vector.shape_cast %49 : vector<1x1x32x16xbf16> to vector<32x16xbf16>
    %cst_42 = arith.constant dense<0.000000e+00> : vector<36x16xf32>
    %51 = tpu.matmul %32, %50, %cst_42 {dimension_numbers = #tpu.dot_dimension_numbers<[1], [0], [0], [1], [0, 0, 1, 1], [], []>} : vector<36x32xbf16>, vector<32x16xbf16>, vector<36x16xf32> -> vector<36x16xf32>
    %c0_43 = arith.constant 0 : index
    %c0_44 = arith.constant 0 : index
    %c0_45 = arith.constant 0 : index
    %c0_46 = arith.constant 0 : index
    %52 = vector.load %arg13[%c0_43, %c0_44, %c0_45, %c0_46] : memref<2x2x1x16xf32, #tpu.memory_space<vmem>>, vector<1x1x1x16xf32>
    %53 = vector.shape_cast %52 : vector<1x1x1x16xf32> to vector<1x16xf32>
    %54 = vector.broadcast %53 : vector<1x16xf32> to vector<36x16xf32>
    %55 = arith.addf %51, %54 : vector<36x16xf32>
    %56 = vector.extract_strided_slice %41 {offsets = [0, 0], sizes = [18, 16], strides = [1, 1]} : vector<36x16xf32> to vector<18x16xf32>
    %57 = arith.truncf %56 : vector<18x16xf32> to vector<18x16xbf16>
    %58 = vector.extract_strided_slice %48 {offsets = [0, 0], sizes = [18, 16], strides = [1, 1]} : vector<36x16xf32> to vector<18x16xf32>
    %59 = arith.truncf %58 : vector<18x16xf32> to vector<18x16xbf16>
    %60 = vector.extract_strided_slice %55 {offsets = [0, 0], sizes = [18, 16], strides = [1, 1]} : vector<36x16xf32> to vector<18x16xf32>
    %61 = arith.truncf %60 : vector<18x16xf32> to vector<18x16xbf16>
    %62 = tpu.transpose %59, [1, 0] : vector<18x16xbf16> -> vector<16x18xbf16>
    %cst_47 = arith.constant dense<0.000000e+00> : vector<18x18xf32>
    %63 = tpu.matmul %57, %62, %cst_47 {dimension_numbers = #tpu.dot_dimension_numbers<[1], [0], [0], [1], [0, 0, 1, 1], [], []>} : vector<18x16xbf16>, vector<16x18xbf16>, vector<18x18xf32> -> vector<18x18xf32>
    %cst_48 = arith.constant 2.500000e-01 : f32
    %64 = vector.broadcast %cst_48 : f32 to vector<18x18xf32>
    %65 = arith.mulf %63, %64 : vector<18x18xf32>
    %cst_49 = arith.constant dense<0xFF800000> : vector<18xf32>
    %66 = vector.multi_reduction <maximumf>, %65, %cst_49 [1] : vector<18x18xf32> to vector<18xf32>
    %67 = vector.shape_cast %66 : vector<18xf32> to vector<18x1xf32>
    %68 = vector.broadcast %67 : vector<18x1xf32> to vector<18x18xf32>
    %69 = arith.subf %65, %68 : vector<18x18xf32>
    %70 = math.exp %69 : vector<18x18xf32>
    %cst_50 = arith.constant dense<0.000000e+00> : vector<18xf32>
    %71 = vector.multi_reduction <add>, %70, %cst_50 [1] : vector<18x18xf32> to vector<18xf32>
    %72 = vector.shape_cast %71 : vector<18xf32> to vector<18x1xf32>
    %73 = tpu.reciprocal %72 {approx = true} : vector<18x1xf32> -> vector<18x1xf32>
    %74 = vector.broadcast %73 : vector<18x1xf32> to vector<18x18xf32>
    %75 = arith.mulf %70, %74 : vector<18x18xf32>
    %cst_51 = arith.constant 1.000000e-01 : f32
    %76 = vector.broadcast %cst_51 : f32 to vector<18x18xf32>
    %77 = arith.cmpf oge, %75, %76 : vector<18x18xf32>
    %cst_52 = arith.constant 0.000000e+00 : f32
    %78 = vector.broadcast %cst_52 : f32 to vector<18x18xf32>
    %79 = arith.select %77, %75, %78 : vector<18x18xi1>, vector<18x18xf32>
    %80 = arith.truncf %79 : vector<18x18xf32> to vector<18x18xbf16>
    %cst_53 = arith.constant dense<0.000000e+00> : vector<18x16xf32>
    %81 = tpu.matmul %80, %61, %cst_53 {dimension_numbers = #tpu.dot_dimension_numbers<[1], [0], [0], [1], [0, 0, 1, 1], [], []>} : vector<18x18xbf16>, vector<18x16xbf16>, vector<18x16xf32> -> vector<18x16xf32>
    %82 = arith.addf %30, %75 : vector<18x18xf32>
    %83 = arith.extui %77 : vector<18x18xi1> to vector<18x18xi32>
    %84 = arith.sitofp %83 : vector<18x18xi32> to vector<18x18xf32>
    %85 = arith.addf %33, %84 : vector<18x18xf32>
    %86 = vector.extract_strided_slice %41 {offsets = [18, 0], sizes = [18, 16], strides = [1, 1]} : vector<36x16xf32> to vector<18x16xf32>
    %87 = arith.truncf %86 : vector<18x16xf32> to vector<18x16xbf16>
    %88 = vector.extract_strided_slice %48 {offsets = [18, 0], sizes = [18, 16], strides = [1, 1]} : vector<36x16xf32> to vector<18x16xf32>
    %89 = arith.truncf %88 : vector<18x16xf32> to vector<18x16xbf16>
    %90 = vector.extract_strided_slice %55 {offsets = [18, 0], sizes = [18, 16], strides = [1, 1]} : vector<36x16xf32> to vector<18x16xf32>
    %91 = arith.truncf %90 : vector<18x16xf32> to vector<18x16xbf16>
    %92 = tpu.transpose %89, [1, 0] : vector<18x16xbf16> -> vector<16x18xbf16>
    %cst_54 = arith.constant dense<0.000000e+00> : vector<18x18xf32>
    %93 = tpu.matmul %87, %92, %cst_54 {dimension_numbers = #tpu.dot_dimension_numbers<[1], [0], [0], [1], [0, 0, 1, 1], [], []>} : vector<18x16xbf16>, vector<16x18xbf16>, vector<18x18xf32> -> vector<18x18xf32>
    %cst_55 = arith.constant 2.500000e-01 : f32
    %94 = vector.broadcast %cst_55 : f32 to vector<18x18xf32>
    %95 = arith.mulf %93, %94 : vector<18x18xf32>
    %cst_56 = arith.constant dense<0xFF800000> : vector<18xf32>
    %96 = vector.multi_reduction <maximumf>, %95, %cst_56 [1] : vector<18x18xf32> to vector<18xf32>
    %97 = vector.shape_cast %96 : vector<18xf32> to vector<18x1xf32>
    %98 = vector.broadcast %97 : vector<18x1xf32> to vector<18x18xf32>
    %99 = arith.subf %95, %98 : vector<18x18xf32>
    %100 = math.exp %99 : vector<18x18xf32>
    %cst_57 = arith.constant dense<0.000000e+00> : vector<18xf32>
    %101 = vector.multi_reduction <add>, %100, %cst_57 [1] : vector<18x18xf32> to vector<18xf32>
    %102 = vector.shape_cast %101 : vector<18xf32> to vector<18x1xf32>
    %103 = tpu.reciprocal %102 {approx = true} : vector<18x1xf32> -> vector<18x1xf32>
    %104 = vector.broadcast %103 : vector<18x1xf32> to vector<18x18xf32>
    %105 = arith.mulf %100, %104 : vector<18x18xf32>
    %cst_58 = arith.constant 1.000000e-01 : f32
    %106 = vector.broadcast %cst_58 : f32 to vector<18x18xf32>
    %107 = arith.cmpf oge, %105, %106 : vector<18x18xf32>
    %cst_59 = arith.constant 0.000000e+00 : f32
    %108 = vector.broadcast %cst_59 : f32 to vector<18x18xf32>
    %109 = arith.select %107, %105, %108 : vector<18x18xi1>, vector<18x18xf32>
    %110 = arith.truncf %109 : vector<18x18xf32> to vector<18x18xbf16>
    %cst_60 = arith.constant dense<0.000000e+00> : vector<18x16xf32>
    %111 = tpu.matmul %110, %91, %cst_60 {dimension_numbers = #tpu.dot_dimension_numbers<[1], [0], [0], [1], [0, 0, 1, 1], [], []>} : vector<18x18xbf16>, vector<18x16xbf16>, vector<18x16xf32> -> vector<18x16xf32>
    %112 = arith.addf %31, %105 : vector<18x18xf32>
    %113 = arith.extui %107 : vector<18x18xi1> to vector<18x18xi32>
    %114 = arith.sitofp %113 : vector<18x18xi32> to vector<18x18xf32>
    %115 = arith.addf %34, %114 : vector<18x18xf32>
    %c0_61 = arith.constant 0 : index
    %c1 = arith.constant 1 : index
    %c0_62 = arith.constant 0 : index
    %c0_63 = arith.constant 0 : index
    %116 = vector.load %arg8[%c0_61, %c1, %c0_62, %c0_63] : memref<2x2x32x16xbf16, #tpu.memory_space<vmem>>, vector<1x1x32x16xbf16>
    %117 = vector.shape_cast %116 : vector<1x1x32x16xbf16> to vector<32x16xbf16>
    %cst_64 = arith.constant dense<0.000000e+00> : vector<36x16xf32>
    %118 = tpu.matmul %32, %117, %cst_64 {dimension_numbers = #tpu.dot_dimension_numbers<[1], [0], [0], [1], [0, 0, 1, 1], [], []>} : vector<36x32xbf16>, vector<32x16xbf16>, vector<36x16xf32> -> vector<36x16xf32>
    %c0_65 = arith.constant 0 : index
    %c1_66 = arith.constant 1 : index
    %c0_67 = arith.constant 0 : index
    %c0_68 = arith.constant 0 : index
    %119 = vector.load %arg9[%c0_65, %c1_66, %c0_67, %c0_68] : memref<2x2x1x16xf32, #tpu.memory_space<vmem>>, vector<1x1x1x16xf32>
    %120 = vector.shape_cast %119 : vector<1x1x1x16xf32> to vector<1x16xf32>
    %121 = vector.broadcast %120 : vector<1x16xf32> to vector<36x16xf32>
    %122 = arith.addf %118, %121 : vector<36x16xf32>
    %c0_69 = arith.constant 0 : index
    %c1_70 = arith.constant 1 : index
    %c0_71 = arith.constant 0 : index
    %c0_72 = arith.constant 0 : index
    %123 = vector.load %arg10[%c0_69, %c1_70, %c0_71, %c0_72] : memref<2x2x32x16xbf16, #tpu.memory_space<vmem>>, vector<1x1x32x16xbf16>
    %124 = vector.shape_cast %123 : vector<1x1x32x16xbf16> to vector<32x16xbf16>
    %cst_73 = arith.constant dense<0.000000e+00> : vector<36x16xf32>
    %125 = tpu.matmul %32, %124, %cst_73 {dimension_numbers = #tpu.dot_dimension_numbers<[1], [0], [0], [1], [0, 0, 1, 1], [], []>} : vector<36x32xbf16>, vector<32x16xbf16>, vector<36x16xf32> -> vector<36x16xf32>
    %c0_74 = arith.constant 0 : index
    %c1_75 = arith.constant 1 : index
    %c0_76 = arith.constant 0 : index
    %c0_77 = arith.constant 0 : index
    %126 = vector.load %arg11[%c0_74, %c1_75, %c0_76, %c0_77] : memref<2x2x1x16xf32, #tpu.memory_space<vmem>>, vector<1x1x1x16xf32>
    %127 = vector.shape_cast %126 : vector<1x1x1x16xf32> to vector<1x16xf32>
    %128 = vector.broadcast %127 : vector<1x16xf32> to vector<36x16xf32>
    %129 = arith.addf %125, %128 : vector<36x16xf32>
    %c0_78 = arith.constant 0 : index
    %c1_79 = arith.constant 1 : index
    %c0_80 = arith.constant 0 : index
    %c0_81 = arith.constant 0 : index
    %130 = vector.load %arg12[%c0_78, %c1_79, %c0_80, %c0_81] : memref<2x2x32x16xbf16, #tpu.memory_space<vmem>>, vector<1x1x32x16xbf16>
    %131 = vector.shape_cast %130 : vector<1x1x32x16xbf16> to vector<32x16xbf16>
    %cst_82 = arith.constant dense<0.000000e+00> : vector<36x16xf32>
    %132 = tpu.matmul %32, %131, %cst_82 {dimension_numbers = #tpu.dot_dimension_numbers<[1], [0], [0], [1], [0, 0, 1, 1], [], []>} : vector<36x32xbf16>, vector<32x16xbf16>, vector<36x16xf32> -> vector<36x16xf32>
    %c0_83 = arith.constant 0 : index
    %c1_84 = arith.constant 1 : index
    %c0_85 = arith.constant 0 : index
    %c0_86 = arith.constant 0 : index
    %133 = vector.load %arg13[%c0_83, %c1_84, %c0_85, %c0_86] : memref<2x2x1x16xf32, #tpu.memory_space<vmem>>, vector<1x1x1x16xf32>
    %134 = vector.shape_cast %133 : vector<1x1x1x16xf32> to vector<1x16xf32>
    %135 = vector.broadcast %134 : vector<1x16xf32> to vector<36x16xf32>
    %136 = arith.addf %132, %135 : vector<36x16xf32>
    %137 = vector.extract_strided_slice %122 {offsets = [0, 0], sizes = [18, 16], strides = [1, 1]} : vector<36x16xf32> to vector<18x16xf32>
    %138 = arith.truncf %137 : vector<18x16xf32> to vector<18x16xbf16>
    %139 = vector.extract_strided_slice %129 {offsets = [0, 0], sizes = [18, 16], strides = [1, 1]} : vector<36x16xf32> to vector<18x16xf32>
    %140 = arith.truncf %139 : vector<18x16xf32> to vector<18x16xbf16>
    %141 = vector.extract_strided_slice %136 {offsets = [0, 0], sizes = [18, 16], strides = [1, 1]} : vector<36x16xf32> to vector<18x16xf32>
    %142 = arith.truncf %141 : vector<18x16xf32> to vector<18x16xbf16>
    %143 = tpu.transpose %140, [1, 0] : vector<18x16xbf16> -> vector<16x18xbf16>
    %cst_87 = arith.constant dense<0.000000e+00> : vector<18x18xf32>
    %144 = tpu.matmul %138, %143, %cst_87 {dimension_numbers = #tpu.dot_dimension_numbers<[1], [0], [0], [1], [0, 0, 1, 1], [], []>} : vector<18x16xbf16>, vector<16x18xbf16>, vector<18x18xf32> -> vector<18x18xf32>
    %cst_88 = arith.constant 2.500000e-01 : f32
    %145 = vector.broadcast %cst_88 : f32 to vector<18x18xf32>
    %146 = arith.mulf %144, %145 : vector<18x18xf32>
    %cst_89 = arith.constant dense<0xFF800000> : vector<18xf32>
    %147 = vector.multi_reduction <maximumf>, %146, %cst_89 [1] : vector<18x18xf32> to vector<18xf32>
    %148 = vector.shape_cast %147 : vector<18xf32> to vector<18x1xf32>
    %149 = vector.broadcast %148 : vector<18x1xf32> to vector<18x18xf32>
    %150 = arith.subf %146, %149 : vector<18x18xf32>
    %151 = math.exp %150 : vector<18x18xf32>
    %cst_90 = arith.constant dense<0.000000e+00> : vector<18xf32>
    %152 = vector.multi_reduction <add>, %151, %cst_90 [1] : vector<18x18xf32> to vector<18xf32>
    %153 = vector.shape_cast %152 : vector<18xf32> to vector<18x1xf32>
    %154 = tpu.reciprocal %153 {approx = true} : vector<18x1xf32> -> vector<18x1xf32>
    %155 = vector.broadcast %154 : vector<18x1xf32> to vector<18x18xf32>
    %156 = arith.mulf %151, %155 : vector<18x18xf32>
    %cst_91 = arith.constant 1.000000e-01 : f32
    %157 = vector.broadcast %cst_91 : f32 to vector<18x18xf32>
    %158 = arith.cmpf oge, %156, %157 : vector<18x18xf32>
    %cst_92 = arith.constant 0.000000e+00 : f32
    %159 = vector.broadcast %cst_92 : f32 to vector<18x18xf32>
    %160 = arith.select %158, %156, %159 : vector<18x18xi1>, vector<18x18xf32>
    %161 = arith.truncf %160 : vector<18x18xf32> to vector<18x18xbf16>
    %cst_93 = arith.constant dense<0.000000e+00> : vector<18x16xf32>
    %162 = tpu.matmul %161, %142, %cst_93 {dimension_numbers = #tpu.dot_dimension_numbers<[1], [0], [0], [1], [0, 0, 1, 1], [], []>} : vector<18x18xbf16>, vector<18x16xbf16>, vector<18x16xf32> -> vector<18x16xf32>
    %163 = arith.addf %82, %156 : vector<18x18xf32>
    %164 = arith.extui %158 : vector<18x18xi1> to vector<18x18xi32>
    %165 = arith.sitofp %164 : vector<18x18xi32> to vector<18x18xf32>
    %166 = arith.addf %85, %165 : vector<18x18xf32>
    %167 = vector.extract_strided_slice %122 {offsets = [18, 0], sizes = [18, 16], strides = [1, 1]} : vector<36x16xf32> to vector<18x16xf32>
    %168 = arith.truncf %167 : vector<18x16xf32> to vector<18x16xbf16>
    %169 = vector.extract_strided_slice %129 {offsets = [18, 0], sizes = [18, 16], strides = [1, 1]} : vector<36x16xf32> to vector<18x16xf32>
    %170 = arith.truncf %169 : vector<18x16xf32> to vector<18x16xbf16>
    %171 = vector.extract_strided_slice %136 {offsets = [18, 0], sizes = [18, 16], strides = [1, 1]} : vector<36x16xf32> to vector<18x16xf32>
    %172 = arith.truncf %171 : vector<18x16xf32> to vector<18x16xbf16>
    %173 = tpu.transpose %170, [1, 0] : vector<18x16xbf16> -> vector<16x18xbf16>
    %cst_94 = arith.constant dense<0.000000e+00> : vector<18x18xf32>
    %174 = tpu.matmul %168, %173, %cst_94 {dimension_numbers = #tpu.dot_dimension_numbers<[1], [0], [0], [1], [0, 0, 1, 1], [], []>} : vector<18x16xbf16>, vector<16x18xbf16>, vector<18x18xf32> -> vector<18x18xf32>
    %cst_95 = arith.constant 2.500000e-01 : f32
    %175 = vector.broadcast %cst_95 : f32 to vector<18x18xf32>
    %176 = arith.mulf %174, %175 : vector<18x18xf32>
    %cst_96 = arith.constant dense<0xFF800000> : vector<18xf32>
    %177 = vector.multi_reduction <maximumf>, %176, %cst_96 [1] : vector<18x18xf32> to vector<18xf32>
    %178 = vector.shape_cast %177 : vector<18xf32> to vector<18x1xf32>
    %179 = vector.broadcast %178 : vector<18x1xf32> to vector<18x18xf32>
    %180 = arith.subf %176, %179 : vector<18x18xf32>
    %181 = math.exp %180 : vector<18x18xf32>
    %cst_97 = arith.constant dense<0.000000e+00> : vector<18xf32>
    %182 = vector.multi_reduction <add>, %181, %cst_97 [1] : vector<18x18xf32> to vector<18xf32>
    %183 = vector.shape_cast %182 : vector<18xf32> to vector<18x1xf32>
    %184 = tpu.reciprocal %183 {approx = true} : vector<18x1xf32> -> vector<18x1xf32>
    %185 = vector.broadcast %184 : vector<18x1xf32> to vector<18x18xf32>
    %186 = arith.mulf %181, %185 : vector<18x18xf32>
    %cst_98 = arith.constant 1.000000e-01 : f32
    %187 = vector.broadcast %cst_98 : f32 to vector<18x18xf32>
    %188 = arith.cmpf oge, %186, %187 : vector<18x18xf32>
    %cst_99 = arith.constant 0.000000e+00 : f32
    %189 = vector.broadcast %cst_99 : f32 to vector<18x18xf32>
    %190 = arith.select %188, %186, %189 : vector<18x18xi1>, vector<18x18xf32>
    %191 = arith.truncf %190 : vector<18x18xf32> to vector<18x18xbf16>
    %cst_100 = arith.constant dense<0.000000e+00> : vector<18x16xf32>
    %192 = tpu.matmul %191, %172, %cst_100 {dimension_numbers = #tpu.dot_dimension_numbers<[1], [0], [0], [1], [0, 0, 1, 1], [], []>} : vector<18x18xbf16>, vector<18x16xbf16>, vector<18x16xf32> -> vector<18x16xf32>
    %193 = arith.addf %112, %186 : vector<18x18xf32>
    %194 = arith.extui %188 : vector<18x18xi1> to vector<18x18xi32>
    %195 = arith.sitofp %194 : vector<18x18xi32> to vector<18x18xf32>
    %196 = arith.addf %115, %195 : vector<18x18xf32>
    %197 = tpu.concatenate %81, %162 in 1 : vector<18x16xf32>, vector<18x16xf32> -> vector<18x32xf32>
    %198 = tpu.concatenate %111, %192 in 1 : vector<18x16xf32>, vector<18x16xf32> -> vector<18x32xf32>
    %199 = tpu.concatenate %197, %198 in 0 : vector<18x32xf32>, vector<18x32xf32> -> vector<36x32xf32>
    %200 = arith.truncf %199 : vector<36x32xf32> to vector<36x32xbf16>
    %c0_101 = arith.constant 0 : index
    %c0_102 = arith.constant 0 : index
    %c0_103 = arith.constant 0 : index
    %201 = vector.load %arg14[%c0_101, %c0_102, %c0_103] : memref<2x32x32xbf16, #tpu.memory_space<vmem>>, vector<1x32x32xbf16>
    %202 = vector.shape_cast %201 : vector<1x32x32xbf16> to vector<32x32xbf16>
    %cst_104 = arith.constant dense<0.000000e+00> : vector<36x32xf32>
    %203 = tpu.matmul %200, %202, %cst_104 {dimension_numbers = #tpu.dot_dimension_numbers<[1], [0], [0], [1], [0, 0, 1, 1], [], []>} : vector<36x32xbf16>, vector<32x32xbf16>, vector<36x32xf32> -> vector<36x32xf32>
    %c0_105 = arith.constant 0 : index
    %c0_106 = arith.constant 0 : index
    %c0_107 = arith.constant 0 : index
    %204 = vector.load %arg15[%c0_105, %c0_106, %c0_107] : memref<2x1x32xf32, #tpu.memory_space<vmem>>, vector<1x1x32xf32>
    %205 = vector.shape_cast %204 : vector<1x1x32xf32> to vector<1x32xf32>
    %206 = vector.broadcast %205 : vector<1x32xf32> to vector<36x32xf32>
    %207 = arith.addf %203, %206 : vector<36x32xf32>
    %208 = arith.addf %24, %207 : vector<36x32xf32>
    %c0_108 = arith.constant 0 : index
    %c0_109 = arith.constant 0 : index
    %c0_110 = arith.constant 0 : index
    %209 = vector.load %arg16[%c0_108, %c0_109, %c0_110] : memref<2x1x32xf32, #tpu.memory_space<vmem>>, vector<1x1x32xf32>
    %210 = vector.shape_cast %209 : vector<1x1x32xf32> to vector<1x32xf32>
    %c0_111 = arith.constant 0 : index
    %c0_112 = arith.constant 0 : index
    %c0_113 = arith.constant 0 : index
    %211 = vector.load %arg17[%c0_111, %c0_112, %c0_113] : memref<2x1x32xf32, #tpu.memory_space<vmem>>, vector<1x1x32xf32>
    %212 = vector.shape_cast %211 : vector<1x1x32xf32> to vector<1x32xf32>
    %cst_114 = arith.constant dense<0.000000e+00> : vector<36xf32>
    %213 = vector.multi_reduction <add>, %208, %cst_114 [1] : vector<36x32xf32> to vector<36xf32>
    %214 = vector.shape_cast %213 : vector<36xf32> to vector<36x1xf32>
    %cst_115 = arith.constant 3.200000e+01 : f32
    %215 = vector.broadcast %cst_115 : f32 to vector<36x1xf32>
    %216 = arith.divf %214, %215 : vector<36x1xf32>
    %217 = vector.broadcast %216 : vector<36x1xf32> to vector<36x32xf32>
    %218 = arith.subf %208, %217 : vector<36x32xf32>
    %219 = arith.mulf %218, %218 : vector<36x32xf32>
    %cst_116 = arith.constant dense<0.000000e+00> : vector<36xf32>
    %220 = vector.multi_reduction <add>, %219, %cst_116 [1] : vector<36x32xf32> to vector<36xf32>
    %221 = vector.shape_cast %220 : vector<36xf32> to vector<36x1xf32>
    %cst_117 = arith.constant 3.200000e+01 : f32
    %222 = vector.broadcast %cst_117 : f32 to vector<36x1xf32>
    %223 = arith.divf %221, %222 : vector<36x1xf32>
    %224 = vector.broadcast %216 : vector<36x1xf32> to vector<36x32xf32>
    %225 = arith.subf %208, %224 : vector<36x32xf32>
    %cst_118 = arith.constant 9.99999974E-6 : f32
    %226 = vector.broadcast %cst_118 : f32 to vector<36x1xf32>
    %227 = arith.addf %223, %226 : vector<36x1xf32>
    %228 = math.rsqrt %227 : vector<36x1xf32>
    %229 = vector.broadcast %228 : vector<36x1xf32> to vector<36x32xf32>
    %230 = arith.mulf %225, %229 : vector<36x32xf32>
    %231 = vector.broadcast %210 : vector<1x32xf32> to vector<36x32xf32>
    %232 = arith.mulf %230, %231 : vector<36x32xf32>
    %233 = vector.broadcast %212 : vector<1x32xf32> to vector<36x32xf32>
    %234 = arith.addf %232, %233 : vector<36x32xf32>
    %235 = arith.truncf %234 : vector<36x32xf32> to vector<36x32xbf16>
    %c0_119 = arith.constant 0 : index
    %c0_120 = arith.constant 0 : index
    %c0_121 = arith.constant 0 : index
    %236 = vector.load %arg18[%c0_119, %c0_120, %c0_121] : memref<2x32x64xbf16, #tpu.memory_space<vmem>>, vector<1x32x64xbf16>
    %237 = vector.shape_cast %236 : vector<1x32x64xbf16> to vector<32x64xbf16>
    %cst_122 = arith.constant dense<0.000000e+00> : vector<36x64xf32>
    %238 = tpu.matmul %235, %237, %cst_122 {dimension_numbers = #tpu.dot_dimension_numbers<[1], [0], [0], [1], [0, 0, 1, 1], [], []>} : vector<36x32xbf16>, vector<32x64xbf16>, vector<36x64xf32> -> vector<36x64xf32>
    %c0_123 = arith.constant 0 : index
    %c0_124 = arith.constant 0 : index
    %c0_125 = arith.constant 0 : index
    %239 = vector.load %arg19[%c0_123, %c0_124, %c0_125] : memref<2x1x64xf32, #tpu.memory_space<vmem>>, vector<1x1x64xf32>
    %240 = vector.shape_cast %239 : vector<1x1x64xf32> to vector<1x64xf32>
    %241 = vector.broadcast %240 : vector<1x64xf32> to vector<36x64xf32>
    %242 = arith.addf %238, %241 : vector<36x64xf32>
    %cst_126 = arith.constant 0.000000e+00 : f32
    %243 = vector.broadcast %cst_126 : f32 to vector<36x64xf32>
    %244 = arith.maximumf %242, %243 : vector<36x64xf32>
    %245 = arith.truncf %244 : vector<36x64xf32> to vector<36x64xbf16>
    %c0_127 = arith.constant 0 : index
    %c0_128 = arith.constant 0 : index
    %c0_129 = arith.constant 0 : index
    %246 = vector.load %arg20[%c0_127, %c0_128, %c0_129] : memref<2x64x32xbf16, #tpu.memory_space<vmem>>, vector<1x64x32xbf16>
    %247 = vector.shape_cast %246 : vector<1x64x32xbf16> to vector<64x32xbf16>
    %cst_130 = arith.constant dense<0.000000e+00> : vector<36x32xf32>
    %248 = tpu.matmul %245, %247, %cst_130 {dimension_numbers = #tpu.dot_dimension_numbers<[1], [0], [0], [1], [0, 0, 1, 1], [], []>} : vector<36x64xbf16>, vector<64x32xbf16>, vector<36x32xf32> -> vector<36x32xf32>
    %c0_131 = arith.constant 0 : index
    %c0_132 = arith.constant 0 : index
    %c0_133 = arith.constant 0 : index
    %249 = vector.load %arg21[%c0_131, %c0_132, %c0_133] : memref<2x1x32xf32, #tpu.memory_space<vmem>>, vector<1x1x32xf32>
    %250 = vector.shape_cast %249 : vector<1x1x32xf32> to vector<1x32xf32>
    %251 = vector.broadcast %250 : vector<1x32xf32> to vector<36x32xf32>
    %252 = arith.addf %248, %251 : vector<36x32xf32>
    %253 = arith.addf %234, %252 : vector<36x32xf32>
    %c0_134 = arith.constant 0 : index
    %c0_135 = arith.constant 0 : index
    %c0_136 = arith.constant 0 : index
    %254 = vector.load %arg22[%c0_134, %c0_135, %c0_136] : memref<2x1x32xf32, #tpu.memory_space<vmem>>, vector<1x1x32xf32>
    %255 = vector.shape_cast %254 : vector<1x1x32xf32> to vector<1x32xf32>
    %c0_137 = arith.constant 0 : index
    %c0_138 = arith.constant 0 : index
    %c0_139 = arith.constant 0 : index
    %256 = vector.load %arg23[%c0_137, %c0_138, %c0_139] : memref<2x1x32xf32, #tpu.memory_space<vmem>>, vector<1x1x32xf32>
    %257 = vector.shape_cast %256 : vector<1x1x32xf32> to vector<1x32xf32>
    %cst_140 = arith.constant dense<0.000000e+00> : vector<36xf32>
    %258 = vector.multi_reduction <add>, %253, %cst_140 [1] : vector<36x32xf32> to vector<36xf32>
    %259 = vector.shape_cast %258 : vector<36xf32> to vector<36x1xf32>
    %cst_141 = arith.constant 3.200000e+01 : f32
    %260 = vector.broadcast %cst_141 : f32 to vector<36x1xf32>
    %261 = arith.divf %259, %260 : vector<36x1xf32>
    %262 = vector.broadcast %261 : vector<36x1xf32> to vector<36x32xf32>
    %263 = arith.subf %253, %262 : vector<36x32xf32>
    %264 = arith.mulf %263, %263 : vector<36x32xf32>
    %cst_142 = arith.constant dense<0.000000e+00> : vector<36xf32>
    %265 = vector.multi_reduction <add>, %264, %cst_142 [1] : vector<36x32xf32> to vector<36xf32>
    %266 = vector.shape_cast %265 : vector<36xf32> to vector<36x1xf32>
    %cst_143 = arith.constant 3.200000e+01 : f32
    %267 = vector.broadcast %cst_143 : f32 to vector<36x1xf32>
    %268 = arith.divf %266, %267 : vector<36x1xf32>
    %269 = vector.broadcast %261 : vector<36x1xf32> to vector<36x32xf32>
    %270 = arith.subf %253, %269 : vector<36x32xf32>
    %cst_144 = arith.constant 9.99999974E-6 : f32
    %271 = vector.broadcast %cst_144 : f32 to vector<36x1xf32>
    %272 = arith.addf %268, %271 : vector<36x1xf32>
    %273 = math.rsqrt %272 : vector<36x1xf32>
    %274 = vector.broadcast %273 : vector<36x1xf32> to vector<36x32xf32>
    %275 = arith.mulf %270, %274 : vector<36x32xf32>
    %276 = vector.broadcast %255 : vector<1x32xf32> to vector<36x32xf32>
    %277 = arith.mulf %275, %276 : vector<36x32xf32>
    %278 = vector.broadcast %257 : vector<1x32xf32> to vector<36x32xf32>
    %279 = arith.addf %277, %278 : vector<36x32xf32>
    %cst_145 = arith.constant dense<0.000000e+00> : vector<18x18xf32>
    %280 = tpu.matmul %166, %29, %cst_145 {dimension_numbers = #tpu.dot_dimension_numbers<[1], [0], [0], [1], [0, 0, 1, 1], [], []>} : vector<18x18xf32>, vector<18x18xf32>, vector<18x18xf32> -> vector<18x18xf32>
    %281 = arith.addf %29, %280 : vector<18x18xf32>
    %cst_146 = arith.constant 0.000000e+00 : f32
    %282 = vector.broadcast %cst_146 : f32 to vector<18x18xf32>
    %283 = arith.cmpf one, %281, %282 : vector<18x18xf32>
    %cst_147 = arith.constant 1.000000e+00 : f32
    %284 = vector.broadcast %cst_147 : f32 to vector<18x18xf32>
    %285 = arith.select %283, %284, %281 : vector<18x18xi1>, vector<18x18xf32>
    %cst_148 = arith.constant dense<0.000000e+00> : vector<18x18xf32>
    %286 = tpu.matmul %196, %29, %cst_148 {dimension_numbers = #tpu.dot_dimension_numbers<[1], [0], [0], [1], [0, 0, 1, 1], [], []>} : vector<18x18xf32>, vector<18x18xf32>, vector<18x18xf32> -> vector<18x18xf32>
    %287 = arith.addf %29, %286 : vector<18x18xf32>
    %cst_149 = arith.constant 0.000000e+00 : f32
    %288 = vector.broadcast %cst_149 : f32 to vector<18x18xf32>
    %289 = arith.cmpf one, %287, %288 : vector<18x18xf32>
    %cst_150 = arith.constant 1.000000e+00 : f32
    %290 = vector.broadcast %cst_150 : f32 to vector<18x18xf32>
    %291 = arith.select %289, %290, %287 : vector<18x18xi1>, vector<18x18xf32>
    %292 = arith.truncf %279 : vector<36x32xf32> to vector<36x32xbf16>
    %cst_151 = arith.constant 0.000000e+00 : f32
    %293 = vector.broadcast %cst_151 : f32 to vector<18x18xf32>
    %cst_152 = arith.constant 0.000000e+00 : f32
    %294 = vector.broadcast %cst_152 : f32 to vector<18x18xf32>
    %c1_153 = arith.constant 1 : index
    %c0_154 = arith.constant 0 : index
    %c0_155 = arith.constant 0 : index
    %c0_156 = arith.constant 0 : index
    %295 = vector.load %arg8[%c1_153, %c0_154, %c0_155, %c0_156] : memref<2x2x32x16xbf16, #tpu.memory_space<vmem>>, vector<1x1x32x16xbf16>
    %296 = vector.shape_cast %295 : vector<1x1x32x16xbf16> to vector<32x16xbf16>
    %cst_157 = arith.constant dense<0.000000e+00> : vector<36x16xf32>
    %297 = tpu.matmul %292, %296, %cst_157 {dimension_numbers = #tpu.dot_dimension_numbers<[1], [0], [0], [1], [0, 0, 1, 1], [], []>} : vector<36x32xbf16>, vector<32x16xbf16>, vector<36x16xf32> -> vector<36x16xf32>
    %c1_158 = arith.constant 1 : index
    %c0_159 = arith.constant 0 : index
    %c0_160 = arith.constant 0 : index
    %c0_161 = arith.constant 0 : index
    %298 = vector.load %arg9[%c1_158, %c0_159, %c0_160, %c0_161] : memref<2x2x1x16xf32, #tpu.memory_space<vmem>>, vector<1x1x1x16xf32>
    %299 = vector.shape_cast %298 : vector<1x1x1x16xf32> to vector<1x16xf32>
    %300 = vector.broadcast %299 : vector<1x16xf32> to vector<36x16xf32>
    %301 = arith.addf %297, %300 : vector<36x16xf32>
    %c1_162 = arith.constant 1 : index
    %c0_163 = arith.constant 0 : index
    %c0_164 = arith.constant 0 : index
    %c0_165 = arith.constant 0 : index
    %302 = vector.load %arg10[%c1_162, %c0_163, %c0_164, %c0_165] : memref<2x2x32x16xbf16, #tpu.memory_space<vmem>>, vector<1x1x32x16xbf16>
    %303 = vector.shape_cast %302 : vector<1x1x32x16xbf16> to vector<32x16xbf16>
    %cst_166 = arith.constant dense<0.000000e+00> : vector<36x16xf32>
    %304 = tpu.matmul %292, %303, %cst_166 {dimension_numbers = #tpu.dot_dimension_numbers<[1], [0], [0], [1], [0, 0, 1, 1], [], []>} : vector<36x32xbf16>, vector<32x16xbf16>, vector<36x16xf32> -> vector<36x16xf32>
    %c1_167 = arith.constant 1 : index
    %c0_168 = arith.constant 0 : index
    %c0_169 = arith.constant 0 : index
    %c0_170 = arith.constant 0 : index
    %305 = vector.load %arg11[%c1_167, %c0_168, %c0_169, %c0_170] : memref<2x2x1x16xf32, #tpu.memory_space<vmem>>, vector<1x1x1x16xf32>
    %306 = vector.shape_cast %305 : vector<1x1x1x16xf32> to vector<1x16xf32>
    %307 = vector.broadcast %306 : vector<1x16xf32> to vector<36x16xf32>
    %308 = arith.addf %304, %307 : vector<36x16xf32>
    %c1_171 = arith.constant 1 : index
    %c0_172 = arith.constant 0 : index
    %c0_173 = arith.constant 0 : index
    %c0_174 = arith.constant 0 : index
    %309 = vector.load %arg12[%c1_171, %c0_172, %c0_173, %c0_174] : memref<2x2x32x16xbf16, #tpu.memory_space<vmem>>, vector<1x1x32x16xbf16>
    %310 = vector.shape_cast %309 : vector<1x1x32x16xbf16> to vector<32x16xbf16>
    %cst_175 = arith.constant dense<0.000000e+00> : vector<36x16xf32>
    %311 = tpu.matmul %292, %310, %cst_175 {dimension_numbers = #tpu.dot_dimension_numbers<[1], [0], [0], [1], [0, 0, 1, 1], [], []>} : vector<36x32xbf16>, vector<32x16xbf16>, vector<36x16xf32> -> vector<36x16xf32>
    %c1_176 = arith.constant 1 : index
    %c0_177 = arith.constant 0 : index
    %c0_178 = arith.constant 0 : index
    %c0_179 = arith.constant 0 : index
    %312 = vector.load %arg13[%c1_176, %c0_177, %c0_178, %c0_179] : memref<2x2x1x16xf32, #tpu.memory_space<vmem>>, vector<1x1x1x16xf32>
    %313 = vector.shape_cast %312 : vector<1x1x1x16xf32> to vector<1x16xf32>
    %314 = vector.broadcast %313 : vector<1x16xf32> to vector<36x16xf32>
    %315 = arith.addf %311, %314 : vector<36x16xf32>
    %316 = vector.extract_strided_slice %301 {offsets = [0, 0], sizes = [18, 16], strides = [1, 1]} : vector<36x16xf32> to vector<18x16xf32>
    %317 = arith.truncf %316 : vector<18x16xf32> to vector<18x16xbf16>
    %318 = vector.extract_strided_slice %308 {offsets = [0, 0], sizes = [18, 16], strides = [1, 1]} : vector<36x16xf32> to vector<18x16xf32>
    %319 = arith.truncf %318 : vector<18x16xf32> to vector<18x16xbf16>
    %320 = vector.extract_strided_slice %315 {offsets = [0, 0], sizes = [18, 16], strides = [1, 1]} : vector<36x16xf32> to vector<18x16xf32>
    %321 = arith.truncf %320 : vector<18x16xf32> to vector<18x16xbf16>
    %322 = tpu.transpose %319, [1, 0] : vector<18x16xbf16> -> vector<16x18xbf16>
    %cst_180 = arith.constant dense<0.000000e+00> : vector<18x18xf32>
    %323 = tpu.matmul %317, %322, %cst_180 {dimension_numbers = #tpu.dot_dimension_numbers<[1], [0], [0], [1], [0, 0, 1, 1], [], []>} : vector<18x16xbf16>, vector<16x18xbf16>, vector<18x18xf32> -> vector<18x18xf32>
    %cst_181 = arith.constant 2.500000e-01 : f32
    %324 = vector.broadcast %cst_181 : f32 to vector<18x18xf32>
    %325 = arith.mulf %323, %324 : vector<18x18xf32>
    %cst_182 = arith.constant dense<0xFF800000> : vector<18xf32>
    %326 = vector.multi_reduction <maximumf>, %325, %cst_182 [1] : vector<18x18xf32> to vector<18xf32>
    %327 = vector.shape_cast %326 : vector<18xf32> to vector<18x1xf32>
    %328 = vector.broadcast %327 : vector<18x1xf32> to vector<18x18xf32>
    %329 = arith.subf %325, %328 : vector<18x18xf32>
    %330 = math.exp %329 : vector<18x18xf32>
    %cst_183 = arith.constant dense<0.000000e+00> : vector<18xf32>
    %331 = vector.multi_reduction <add>, %330, %cst_183 [1] : vector<18x18xf32> to vector<18xf32>
    %332 = vector.shape_cast %331 : vector<18xf32> to vector<18x1xf32>
    %333 = tpu.reciprocal %332 {approx = true} : vector<18x1xf32> -> vector<18x1xf32>
    %334 = vector.broadcast %333 : vector<18x1xf32> to vector<18x18xf32>
    %335 = arith.mulf %330, %334 : vector<18x18xf32>
    %cst_184 = arith.constant 1.000000e-01 : f32
    %336 = vector.broadcast %cst_184 : f32 to vector<18x18xf32>
    %337 = arith.cmpf oge, %335, %336 : vector<18x18xf32>
    %cst_185 = arith.constant 0.000000e+00 : f32
    %338 = vector.broadcast %cst_185 : f32 to vector<18x18xf32>
    %339 = arith.select %337, %335, %338 : vector<18x18xi1>, vector<18x18xf32>
    %340 = arith.truncf %339 : vector<18x18xf32> to vector<18x18xbf16>
    %cst_186 = arith.constant dense<0.000000e+00> : vector<18x16xf32>
    %341 = tpu.matmul %340, %321, %cst_186 {dimension_numbers = #tpu.dot_dimension_numbers<[1], [0], [0], [1], [0, 0, 1, 1], [], []>} : vector<18x18xbf16>, vector<18x16xbf16>, vector<18x16xf32> -> vector<18x16xf32>
    %342 = arith.addf %163, %335 : vector<18x18xf32>
    %343 = arith.extui %337 : vector<18x18xi1> to vector<18x18xi32>
    %344 = arith.sitofp %343 : vector<18x18xi32> to vector<18x18xf32>
    %345 = arith.addf %293, %344 : vector<18x18xf32>
    %346 = vector.extract_strided_slice %301 {offsets = [18, 0], sizes = [18, 16], strides = [1, 1]} : vector<36x16xf32> to vector<18x16xf32>
    %347 = arith.truncf %346 : vector<18x16xf32> to vector<18x16xbf16>
    %348 = vector.extract_strided_slice %308 {offsets = [18, 0], sizes = [18, 16], strides = [1, 1]} : vector<36x16xf32> to vector<18x16xf32>
    %349 = arith.truncf %348 : vector<18x16xf32> to vector<18x16xbf16>
    %350 = vector.extract_strided_slice %315 {offsets = [18, 0], sizes = [18, 16], strides = [1, 1]} : vector<36x16xf32> to vector<18x16xf32>
    %351 = arith.truncf %350 : vector<18x16xf32> to vector<18x16xbf16>
    %352 = tpu.transpose %349, [1, 0] : vector<18x16xbf16> -> vector<16x18xbf16>
    %cst_187 = arith.constant dense<0.000000e+00> : vector<18x18xf32>
    %353 = tpu.matmul %347, %352, %cst_187 {dimension_numbers = #tpu.dot_dimension_numbers<[1], [0], [0], [1], [0, 0, 1, 1], [], []>} : vector<18x16xbf16>, vector<16x18xbf16>, vector<18x18xf32> -> vector<18x18xf32>
    %cst_188 = arith.constant 2.500000e-01 : f32
    %354 = vector.broadcast %cst_188 : f32 to vector<18x18xf32>
    %355 = arith.mulf %353, %354 : vector<18x18xf32>
    %cst_189 = arith.constant dense<0xFF800000> : vector<18xf32>
    %356 = vector.multi_reduction <maximumf>, %355, %cst_189 [1] : vector<18x18xf32> to vector<18xf32>
    %357 = vector.shape_cast %356 : vector<18xf32> to vector<18x1xf32>
    %358 = vector.broadcast %357 : vector<18x1xf32> to vector<18x18xf32>
    %359 = arith.subf %355, %358 : vector<18x18xf32>
    %360 = math.exp %359 : vector<18x18xf32>
    %cst_190 = arith.constant dense<0.000000e+00> : vector<18xf32>
    %361 = vector.multi_reduction <add>, %360, %cst_190 [1] : vector<18x18xf32> to vector<18xf32>
    %362 = vector.shape_cast %361 : vector<18xf32> to vector<18x1xf32>
    %363 = tpu.reciprocal %362 {approx = true} : vector<18x1xf32> -> vector<18x1xf32>
    %364 = vector.broadcast %363 : vector<18x1xf32> to vector<18x18xf32>
    %365 = arith.mulf %360, %364 : vector<18x18xf32>
    %cst_191 = arith.constant 1.000000e-01 : f32
    %366 = vector.broadcast %cst_191 : f32 to vector<18x18xf32>
    %367 = arith.cmpf oge, %365, %366 : vector<18x18xf32>
    %cst_192 = arith.constant 0.000000e+00 : f32
    %368 = vector.broadcast %cst_192 : f32 to vector<18x18xf32>
    %369 = arith.select %367, %365, %368 : vector<18x18xi1>, vector<18x18xf32>
    %370 = arith.truncf %369 : vector<18x18xf32> to vector<18x18xbf16>
    %cst_193 = arith.constant dense<0.000000e+00> : vector<18x16xf32>
    %371 = tpu.matmul %370, %351, %cst_193 {dimension_numbers = #tpu.dot_dimension_numbers<[1], [0], [0], [1], [0, 0, 1, 1], [], []>} : vector<18x18xbf16>, vector<18x16xbf16>, vector<18x16xf32> -> vector<18x16xf32>
    %372 = arith.addf %193, %365 : vector<18x18xf32>
    %373 = arith.extui %367 : vector<18x18xi1> to vector<18x18xi32>
    %374 = arith.sitofp %373 : vector<18x18xi32> to vector<18x18xf32>
    %375 = arith.addf %294, %374 : vector<18x18xf32>
    %c1_194 = arith.constant 1 : index
    %c1_195 = arith.constant 1 : index
    %c0_196 = arith.constant 0 : index
    %c0_197 = arith.constant 0 : index
    %376 = vector.load %arg8[%c1_194, %c1_195, %c0_196, %c0_197] : memref<2x2x32x16xbf16, #tpu.memory_space<vmem>>, vector<1x1x32x16xbf16>
    %377 = vector.shape_cast %376 : vector<1x1x32x16xbf16> to vector<32x16xbf16>
    %cst_198 = arith.constant dense<0.000000e+00> : vector<36x16xf32>
    %378 = tpu.matmul %292, %377, %cst_198 {dimension_numbers = #tpu.dot_dimension_numbers<[1], [0], [0], [1], [0, 0, 1, 1], [], []>} : vector<36x32xbf16>, vector<32x16xbf16>, vector<36x16xf32> -> vector<36x16xf32>
    %c1_199 = arith.constant 1 : index
    %c1_200 = arith.constant 1 : index
    %c0_201 = arith.constant 0 : index
    %c0_202 = arith.constant 0 : index
    %379 = vector.load %arg9[%c1_199, %c1_200, %c0_201, %c0_202] : memref<2x2x1x16xf32, #tpu.memory_space<vmem>>, vector<1x1x1x16xf32>
    %380 = vector.shape_cast %379 : vector<1x1x1x16xf32> to vector<1x16xf32>
    %381 = vector.broadcast %380 : vector<1x16xf32> to vector<36x16xf32>
    %382 = arith.addf %378, %381 : vector<36x16xf32>
    %c1_203 = arith.constant 1 : index
    %c1_204 = arith.constant 1 : index
    %c0_205 = arith.constant 0 : index
    %c0_206 = arith.constant 0 : index
    %383 = vector.load %arg10[%c1_203, %c1_204, %c0_205, %c0_206] : memref<2x2x32x16xbf16, #tpu.memory_space<vmem>>, vector<1x1x32x16xbf16>
    %384 = vector.shape_cast %383 : vector<1x1x32x16xbf16> to vector<32x16xbf16>
    %cst_207 = arith.constant dense<0.000000e+00> : vector<36x16xf32>
    %385 = tpu.matmul %292, %384, %cst_207 {dimension_numbers = #tpu.dot_dimension_numbers<[1], [0], [0], [1], [0, 0, 1, 1], [], []>} : vector<36x32xbf16>, vector<32x16xbf16>, vector<36x16xf32> -> vector<36x16xf32>
    %c1_208 = arith.constant 1 : index
    %c1_209 = arith.constant 1 : index
    %c0_210 = arith.constant 0 : index
    %c0_211 = arith.constant 0 : index
    %386 = vector.load %arg11[%c1_208, %c1_209, %c0_210, %c0_211] : memref<2x2x1x16xf32, #tpu.memory_space<vmem>>, vector<1x1x1x16xf32>
    %387 = vector.shape_cast %386 : vector<1x1x1x16xf32> to vector<1x16xf32>
    %388 = vector.broadcast %387 : vector<1x16xf32> to vector<36x16xf32>
    %389 = arith.addf %385, %388 : vector<36x16xf32>
    %c1_212 = arith.constant 1 : index
    %c1_213 = arith.constant 1 : index
    %c0_214 = arith.constant 0 : index
    %c0_215 = arith.constant 0 : index
    %390 = vector.load %arg12[%c1_212, %c1_213, %c0_214, %c0_215] : memref<2x2x32x16xbf16, #tpu.memory_space<vmem>>, vector<1x1x32x16xbf16>
    %391 = vector.shape_cast %390 : vector<1x1x32x16xbf16> to vector<32x16xbf16>
    %cst_216 = arith.constant dense<0.000000e+00> : vector<36x16xf32>
    %392 = tpu.matmul %292, %391, %cst_216 {dimension_numbers = #tpu.dot_dimension_numbers<[1], [0], [0], [1], [0, 0, 1, 1], [], []>} : vector<36x32xbf16>, vector<32x16xbf16>, vector<36x16xf32> -> vector<36x16xf32>
    %c1_217 = arith.constant 1 : index
    %c1_218 = arith.constant 1 : index
    %c0_219 = arith.constant 0 : index
    %c0_220 = arith.constant 0 : index
    %393 = vector.load %arg13[%c1_217, %c1_218, %c0_219, %c0_220] : memref<2x2x1x16xf32, #tpu.memory_space<vmem>>, vector<1x1x1x16xf32>
    %394 = vector.shape_cast %393 : vector<1x1x1x16xf32> to vector<1x16xf32>
    %395 = vector.broadcast %394 : vector<1x16xf32> to vector<36x16xf32>
    %396 = arith.addf %392, %395 : vector<36x16xf32>
    %397 = vector.extract_strided_slice %382 {offsets = [0, 0], sizes = [18, 16], strides = [1, 1]} : vector<36x16xf32> to vector<18x16xf32>
    %398 = arith.truncf %397 : vector<18x16xf32> to vector<18x16xbf16>
    %399 = vector.extract_strided_slice %389 {offsets = [0, 0], sizes = [18, 16], strides = [1, 1]} : vector<36x16xf32> to vector<18x16xf32>
    %400 = arith.truncf %399 : vector<18x16xf32> to vector<18x16xbf16>
    %401 = vector.extract_strided_slice %396 {offsets = [0, 0], sizes = [18, 16], strides = [1, 1]} : vector<36x16xf32> to vector<18x16xf32>
    %402 = arith.truncf %401 : vector<18x16xf32> to vector<18x16xbf16>
    %403 = tpu.transpose %400, [1, 0] : vector<18x16xbf16> -> vector<16x18xbf16>
    %cst_221 = arith.constant dense<0.000000e+00> : vector<18x18xf32>
    %404 = tpu.matmul %398, %403, %cst_221 {dimension_numbers = #tpu.dot_dimension_numbers<[1], [0], [0], [1], [0, 0, 1, 1], [], []>} : vector<18x16xbf16>, vector<16x18xbf16>, vector<18x18xf32> -> vector<18x18xf32>
    %cst_222 = arith.constant 2.500000e-01 : f32
    %405 = vector.broadcast %cst_222 : f32 to vector<18x18xf32>
    %406 = arith.mulf %404, %405 : vector<18x18xf32>
    %cst_223 = arith.constant dense<0xFF800000> : vector<18xf32>
    %407 = vector.multi_reduction <maximumf>, %406, %cst_223 [1] : vector<18x18xf32> to vector<18xf32>
    %408 = vector.shape_cast %407 : vector<18xf32> to vector<18x1xf32>
    %409 = vector.broadcast %408 : vector<18x1xf32> to vector<18x18xf32>
    %410 = arith.subf %406, %409 : vector<18x18xf32>
    %411 = math.exp %410 : vector<18x18xf32>
    %cst_224 = arith.constant dense<0.000000e+00> : vector<18xf32>
    %412 = vector.multi_reduction <add>, %411, %cst_224 [1] : vector<18x18xf32> to vector<18xf32>
    %413 = vector.shape_cast %412 : vector<18xf32> to vector<18x1xf32>
    %414 = tpu.reciprocal %413 {approx = true} : vector<18x1xf32> -> vector<18x1xf32>
    %415 = vector.broadcast %414 : vector<18x1xf32> to vector<18x18xf32>
    %416 = arith.mulf %411, %415 : vector<18x18xf32>
    %cst_225 = arith.constant 1.000000e-01 : f32
    %417 = vector.broadcast %cst_225 : f32 to vector<18x18xf32>
    %418 = arith.cmpf oge, %416, %417 : vector<18x18xf32>
    %cst_226 = arith.constant 0.000000e+00 : f32
    %419 = vector.broadcast %cst_226 : f32 to vector<18x18xf32>
    %420 = arith.select %418, %416, %419 : vector<18x18xi1>, vector<18x18xf32>
    %421 = arith.truncf %420 : vector<18x18xf32> to vector<18x18xbf16>
    %cst_227 = arith.constant dense<0.000000e+00> : vector<18x16xf32>
    %422 = tpu.matmul %421, %402, %cst_227 {dimension_numbers = #tpu.dot_dimension_numbers<[1], [0], [0], [1], [0, 0, 1, 1], [], []>} : vector<18x18xbf16>, vector<18x16xbf16>, vector<18x16xf32> -> vector<18x16xf32>
    %423 = arith.addf %342, %416 : vector<18x18xf32>
    %424 = arith.extui %418 : vector<18x18xi1> to vector<18x18xi32>
    %425 = arith.sitofp %424 : vector<18x18xi32> to vector<18x18xf32>
    %426 = arith.addf %345, %425 : vector<18x18xf32>
    %427 = vector.extract_strided_slice %382 {offsets = [18, 0], sizes = [18, 16], strides = [1, 1]} : vector<36x16xf32> to vector<18x16xf32>
    %428 = arith.truncf %427 : vector<18x16xf32> to vector<18x16xbf16>
    %429 = vector.extract_strided_slice %389 {offsets = [18, 0], sizes = [18, 16], strides = [1, 1]} : vector<36x16xf32> to vector<18x16xf32>
    %430 = arith.truncf %429 : vector<18x16xf32> to vector<18x16xbf16>
    %431 = vector.extract_strided_slice %396 {offsets = [18, 0], sizes = [18, 16], strides = [1, 1]} : vector<36x16xf32> to vector<18x16xf32>
    %432 = arith.truncf %431 : vector<18x16xf32> to vector<18x16xbf16>
    %433 = tpu.transpose %430, [1, 0] : vector<18x16xbf16> -> vector<16x18xbf16>
    %cst_228 = arith.constant dense<0.000000e+00> : vector<18x18xf32>
    %434 = tpu.matmul %428, %433, %cst_228 {dimension_numbers = #tpu.dot_dimension_numbers<[1], [0], [0], [1], [0, 0, 1, 1], [], []>} : vector<18x16xbf16>, vector<16x18xbf16>, vector<18x18xf32> -> vector<18x18xf32>
    %cst_229 = arith.constant 2.500000e-01 : f32
    %435 = vector.broadcast %cst_229 : f32 to vector<18x18xf32>
    %436 = arith.mulf %434, %435 : vector<18x18xf32>
    %cst_230 = arith.constant dense<0xFF800000> : vector<18xf32>
    %437 = vector.multi_reduction <maximumf>, %436, %cst_230 [1] : vector<18x18xf32> to vector<18xf32>
    %438 = vector.shape_cast %437 : vector<18xf32> to vector<18x1xf32>
    %439 = vector.broadcast %438 : vector<18x1xf32> to vector<18x18xf32>
    %440 = arith.subf %436, %439 : vector<18x18xf32>
    %441 = math.exp %440 : vector<18x18xf32>
    %cst_231 = arith.constant dense<0.000000e+00> : vector<18xf32>
    %442 = vector.multi_reduction <add>, %441, %cst_231 [1] : vector<18x18xf32> to vector<18xf32>
    %443 = vector.shape_cast %442 : vector<18xf32> to vector<18x1xf32>
    %444 = tpu.reciprocal %443 {approx = true} : vector<18x1xf32> -> vector<18x1xf32>
    %445 = vector.broadcast %444 : vector<18x1xf32> to vector<18x18xf32>
    %446 = arith.mulf %441, %445 : vector<18x18xf32>
    %cst_232 = arith.constant 1.000000e-01 : f32
    %447 = vector.broadcast %cst_232 : f32 to vector<18x18xf32>
    %448 = arith.cmpf oge, %446, %447 : vector<18x18xf32>
    %cst_233 = arith.constant 0.000000e+00 : f32
    %449 = vector.broadcast %cst_233 : f32 to vector<18x18xf32>
    %450 = arith.select %448, %446, %449 : vector<18x18xi1>, vector<18x18xf32>
    %451 = arith.truncf %450 : vector<18x18xf32> to vector<18x18xbf16>
    %cst_234 = arith.constant dense<0.000000e+00> : vector<18x16xf32>
    %452 = tpu.matmul %451, %432, %cst_234 {dimension_numbers = #tpu.dot_dimension_numbers<[1], [0], [0], [1], [0, 0, 1, 1], [], []>} : vector<18x18xbf16>, vector<18x16xbf16>, vector<18x16xf32> -> vector<18x16xf32>
    %453 = arith.addf %372, %446 : vector<18x18xf32>
    %454 = arith.extui %448 : vector<18x18xi1> to vector<18x18xi32>
    %455 = arith.sitofp %454 : vector<18x18xi32> to vector<18x18xf32>
    %456 = arith.addf %375, %455 : vector<18x18xf32>
    %457 = tpu.concatenate %341, %422 in 1 : vector<18x16xf32>, vector<18x16xf32> -> vector<18x32xf32>
    %458 = tpu.concatenate %371, %452 in 1 : vector<18x16xf32>, vector<18x16xf32> -> vector<18x32xf32>
    %459 = tpu.concatenate %457, %458 in 0 : vector<18x32xf32>, vector<18x32xf32> -> vector<36x32xf32>
    %460 = arith.truncf %459 : vector<36x32xf32> to vector<36x32xbf16>
    %c1_235 = arith.constant 1 : index
    %c0_236 = arith.constant 0 : index
    %c0_237 = arith.constant 0 : index
    %461 = vector.load %arg14[%c1_235, %c0_236, %c0_237] : memref<2x32x32xbf16, #tpu.memory_space<vmem>>, vector<1x32x32xbf16>
    %462 = vector.shape_cast %461 : vector<1x32x32xbf16> to vector<32x32xbf16>
    %cst_238 = arith.constant dense<0.000000e+00> : vector<36x32xf32>
    %463 = tpu.matmul %460, %462, %cst_238 {dimension_numbers = #tpu.dot_dimension_numbers<[1], [0], [0], [1], [0, 0, 1, 1], [], []>} : vector<36x32xbf16>, vector<32x32xbf16>, vector<36x32xf32> -> vector<36x32xf32>
    %c1_239 = arith.constant 1 : index
    %c0_240 = arith.constant 0 : index
    %c0_241 = arith.constant 0 : index
    %464 = vector.load %arg15[%c1_239, %c0_240, %c0_241] : memref<2x1x32xf32, #tpu.memory_space<vmem>>, vector<1x1x32xf32>
    %465 = vector.shape_cast %464 : vector<1x1x32xf32> to vector<1x32xf32>
    %466 = vector.broadcast %465 : vector<1x32xf32> to vector<36x32xf32>
    %467 = arith.addf %463, %466 : vector<36x32xf32>
    %468 = arith.addf %279, %467 : vector<36x32xf32>
    %c1_242 = arith.constant 1 : index
    %c0_243 = arith.constant 0 : index
    %c0_244 = arith.constant 0 : index
    %469 = vector.load %arg16[%c1_242, %c0_243, %c0_244] : memref<2x1x32xf32, #tpu.memory_space<vmem>>, vector<1x1x32xf32>
    %470 = vector.shape_cast %469 : vector<1x1x32xf32> to vector<1x32xf32>
    %c1_245 = arith.constant 1 : index
    %c0_246 = arith.constant 0 : index
    %c0_247 = arith.constant 0 : index
    %471 = vector.load %arg17[%c1_245, %c0_246, %c0_247] : memref<2x1x32xf32, #tpu.memory_space<vmem>>, vector<1x1x32xf32>
    %472 = vector.shape_cast %471 : vector<1x1x32xf32> to vector<1x32xf32>
    %cst_248 = arith.constant dense<0.000000e+00> : vector<36xf32>
    %473 = vector.multi_reduction <add>, %468, %cst_248 [1] : vector<36x32xf32> to vector<36xf32>
    %474 = vector.shape_cast %473 : vector<36xf32> to vector<36x1xf32>
    %cst_249 = arith.constant 3.200000e+01 : f32
    %475 = vector.broadcast %cst_249 : f32 to vector<36x1xf32>
    %476 = arith.divf %474, %475 : vector<36x1xf32>
    %477 = vector.broadcast %476 : vector<36x1xf32> to vector<36x32xf32>
    %478 = arith.subf %468, %477 : vector<36x32xf32>
    %479 = arith.mulf %478, %478 : vector<36x32xf32>
    %cst_250 = arith.constant dense<0.000000e+00> : vector<36xf32>
    %480 = vector.multi_reduction <add>, %479, %cst_250 [1] : vector<36x32xf32> to vector<36xf32>
    %481 = vector.shape_cast %480 : vector<36xf32> to vector<36x1xf32>
    %cst_251 = arith.constant 3.200000e+01 : f32
    %482 = vector.broadcast %cst_251 : f32 to vector<36x1xf32>
    %483 = arith.divf %481, %482 : vector<36x1xf32>
    %484 = vector.broadcast %476 : vector<36x1xf32> to vector<36x32xf32>
    %485 = arith.subf %468, %484 : vector<36x32xf32>
    %cst_252 = arith.constant 9.99999974E-6 : f32
    %486 = vector.broadcast %cst_252 : f32 to vector<36x1xf32>
    %487 = arith.addf %483, %486 : vector<36x1xf32>
    %488 = math.rsqrt %487 : vector<36x1xf32>
    %489 = vector.broadcast %488 : vector<36x1xf32> to vector<36x32xf32>
    %490 = arith.mulf %485, %489 : vector<36x32xf32>
    %491 = vector.broadcast %470 : vector<1x32xf32> to vector<36x32xf32>
    %492 = arith.mulf %490, %491 : vector<36x32xf32>
    %493 = vector.broadcast %472 : vector<1x32xf32> to vector<36x32xf32>
    %494 = arith.addf %492, %493 : vector<36x32xf32>
    %495 = arith.truncf %494 : vector<36x32xf32> to vector<36x32xbf16>
    %c1_253 = arith.constant 1 : index
    %c0_254 = arith.constant 0 : index
    %c0_255 = arith.constant 0 : index
    %496 = vector.load %arg18[%c1_253, %c0_254, %c0_255] : memref<2x32x64xbf16, #tpu.memory_space<vmem>>, vector<1x32x64xbf16>
    %497 = vector.shape_cast %496 : vector<1x32x64xbf16> to vector<32x64xbf16>
    %cst_256 = arith.constant dense<0.000000e+00> : vector<36x64xf32>
    %498 = tpu.matmul %495, %497, %cst_256 {dimension_numbers = #tpu.dot_dimension_numbers<[1], [0], [0], [1], [0, 0, 1, 1], [], []>} : vector<36x32xbf16>, vector<32x64xbf16>, vector<36x64xf32> -> vector<36x64xf32>
    %c1_257 = arith.constant 1 : index
    %c0_258 = arith.constant 0 : index
    %c0_259 = arith.constant 0 : index
    %499 = vector.load %arg19[%c1_257, %c0_258, %c0_259] : memref<2x1x64xf32, #tpu.memory_space<vmem>>, vector<1x1x64xf32>
    %500 = vector.shape_cast %499 : vector<1x1x64xf32> to vector<1x64xf32>
    %501 = vector.broadcast %500 : vector<1x64xf32> to vector<36x64xf32>
    %502 = arith.addf %498, %501 : vector<36x64xf32>
    %cst_260 = arith.constant 0.000000e+00 : f32
    %503 = vector.broadcast %cst_260 : f32 to vector<36x64xf32>
    %504 = arith.maximumf %502, %503 : vector<36x64xf32>
    %505 = arith.truncf %504 : vector<36x64xf32> to vector<36x64xbf16>
    %c1_261 = arith.constant 1 : index
    %c0_262 = arith.constant 0 : index
    %c0_263 = arith.constant 0 : index
    %506 = vector.load %arg20[%c1_261, %c0_262, %c0_263] : memref<2x64x32xbf16, #tpu.memory_space<vmem>>, vector<1x64x32xbf16>
    %507 = vector.shape_cast %506 : vector<1x64x32xbf16> to vector<64x32xbf16>
    %cst_264 = arith.constant dense<0.000000e+00> : vector<36x32xf32>
    %508 = tpu.matmul %505, %507, %cst_264 {dimension_numbers = #tpu.dot_dimension_numbers<[1], [0], [0], [1], [0, 0, 1, 1], [], []>} : vector<36x64xbf16>, vector<64x32xbf16>, vector<36x32xf32> -> vector<36x32xf32>
    %c1_265 = arith.constant 1 : index
    %c0_266 = arith.constant 0 : index
    %c0_267 = arith.constant 0 : index
    %509 = vector.load %arg21[%c1_265, %c0_266, %c0_267] : memref<2x1x32xf32, #tpu.memory_space<vmem>>, vector<1x1x32xf32>
    %510 = vector.shape_cast %509 : vector<1x1x32xf32> to vector<1x32xf32>
    %511 = vector.broadcast %510 : vector<1x32xf32> to vector<36x32xf32>
    %512 = arith.addf %508, %511 : vector<36x32xf32>
    %513 = arith.addf %494, %512 : vector<36x32xf32>
    %c1_268 = arith.constant 1 : index
    %c0_269 = arith.constant 0 : index
    %c0_270 = arith.constant 0 : index
    %514 = vector.load %arg22[%c1_268, %c0_269, %c0_270] : memref<2x1x32xf32, #tpu.memory_space<vmem>>, vector<1x1x32xf32>
    %515 = vector.shape_cast %514 : vector<1x1x32xf32> to vector<1x32xf32>
    %c1_271 = arith.constant 1 : index
    %c0_272 = arith.constant 0 : index
    %c0_273 = arith.constant 0 : index
    %516 = vector.load %arg23[%c1_271, %c0_272, %c0_273] : memref<2x1x32xf32, #tpu.memory_space<vmem>>, vector<1x1x32xf32>
    %517 = vector.shape_cast %516 : vector<1x1x32xf32> to vector<1x32xf32>
    %cst_274 = arith.constant dense<0.000000e+00> : vector<36xf32>
    %518 = vector.multi_reduction <add>, %513, %cst_274 [1] : vector<36x32xf32> to vector<36xf32>
    %519 = vector.shape_cast %518 : vector<36xf32> to vector<36x1xf32>
    %cst_275 = arith.constant 3.200000e+01 : f32
    %520 = vector.broadcast %cst_275 : f32 to vector<36x1xf32>
    %521 = arith.divf %519, %520 : vector<36x1xf32>
    %522 = vector.broadcast %521 : vector<36x1xf32> to vector<36x32xf32>
    %523 = arith.subf %513, %522 : vector<36x32xf32>
    %524 = arith.mulf %523, %523 : vector<36x32xf32>
    %cst_276 = arith.constant dense<0.000000e+00> : vector<36xf32>
    %525 = vector.multi_reduction <add>, %524, %cst_276 [1] : vector<36x32xf32> to vector<36xf32>
    %526 = vector.shape_cast %525 : vector<36xf32> to vector<36x1xf32>
    %cst_277 = arith.constant 3.200000e+01 : f32
    %527 = vector.broadcast %cst_277 : f32 to vector<36x1xf32>
    %528 = arith.divf %526, %527 : vector<36x1xf32>
    %529 = vector.broadcast %521 : vector<36x1xf32> to vector<36x32xf32>
    %530 = arith.subf %513, %529 : vector<36x32xf32>
    %cst_278 = arith.constant 9.99999974E-6 : f32
    %531 = vector.broadcast %cst_278 : f32 to vector<36x1xf32>
    %532 = arith.addf %528, %531 : vector<36x1xf32>
    %533 = math.rsqrt %532 : vector<36x1xf32>
    %534 = vector.broadcast %533 : vector<36x1xf32> to vector<36x32xf32>
    %535 = arith.mulf %530, %534 : vector<36x32xf32>
    %536 = vector.broadcast %515 : vector<1x32xf32> to vector<36x32xf32>
    %537 = arith.mulf %535, %536 : vector<36x32xf32>
    %538 = vector.broadcast %517 : vector<1x32xf32> to vector<36x32xf32>
    %539 = arith.addf %537, %538 : vector<36x32xf32>
    %cst_279 = arith.constant dense<0.000000e+00> : vector<18x18xf32>
    %540 = tpu.matmul %426, %285, %cst_279 {dimension_numbers = #tpu.dot_dimension_numbers<[1], [0], [0], [1], [0, 0, 1, 1], [], []>} : vector<18x18xf32>, vector<18x18xf32>, vector<18x18xf32> -> vector<18x18xf32>
    %541 = arith.addf %285, %540 : vector<18x18xf32>
    %cst_280 = arith.constant 0.000000e+00 : f32
    %542 = vector.broadcast %cst_280 : f32 to vector<18x18xf32>
    %543 = arith.cmpf one, %541, %542 : vector<18x18xf32>
    %cst_281 = arith.constant 1.000000e+00 : f32
    %544 = vector.broadcast %cst_281 : f32 to vector<18x18xf32>
    %545 = arith.select %543, %544, %541 : vector<18x18xi1>, vector<18x18xf32>
    %cst_282 = arith.constant dense<0.000000e+00> : vector<18x18xf32>
    %546 = tpu.matmul %456, %291, %cst_282 {dimension_numbers = #tpu.dot_dimension_numbers<[1], [0], [0], [1], [0, 0, 1, 1], [], []>} : vector<18x18xf32>, vector<18x18xf32>, vector<18x18xf32> -> vector<18x18xf32>
    %547 = arith.addf %291, %546 : vector<18x18xf32>
    %cst_283 = arith.constant 0.000000e+00 : f32
    %548 = vector.broadcast %cst_283 : f32 to vector<18x18xf32>
    %549 = arith.cmpf one, %547, %548 : vector<18x18xf32>
    %cst_284 = arith.constant 1.000000e+00 : f32
    %550 = vector.broadcast %cst_284 : f32 to vector<18x18xf32>
    %551 = arith.select %549, %550, %547 : vector<18x18xi1>, vector<18x18xf32>
    %552 = vector.extract_strided_slice %539 {offsets = [0, 0], sizes = [16, 32], strides = [1, 1]} : vector<36x32xf32> to vector<16x32xf32>
    %553 = vector.extract_strided_slice %539 {offsets = [18, 0], sizes = [16, 32], strides = [1, 1]} : vector<36x32xf32> to vector<16x32xf32>
    %554 = tpu.concatenate %552, %553 in 0 : vector<16x32xf32>, vector<16x32xf32> -> vector<32x32xf32>
    %555 = vector.extract_strided_slice %539 {offsets = [17, 0], sizes = [1, 32], strides = [1, 1]} : vector<36x32xf32> to vector<1x32xf32>
    %556 = vector.extract_strided_slice %539 {offsets = [35, 0], sizes = [1, 32], strides = [1, 1]} : vector<36x32xf32> to vector<1x32xf32>
    %557 = tpu.concatenate %555, %556 in 0 : vector<1x32xf32>, vector<1x32xf32> -> vector<2x32xf32>
    %558 = arith.truncf %554 : vector<32x32xf32> to vector<32x32xbf16>
    %c0_285 = arith.constant 0 : index
    %c0_286 = arith.constant 0 : index
    %559 = vector.load %arg24[%c0_285, %c0_286] : memref<32x3xbf16, #tpu.memory_space<vmem>>, vector<32x3xbf16>
    %cst_287 = arith.constant dense<0.000000e+00> : vector<32x3xf32>
    %560 = tpu.matmul %558, %559, %cst_287 {dimension_numbers = #tpu.dot_dimension_numbers<[1], [0], [0], [1], [0, 0, 1, 1], [], []>} : vector<32x32xbf16>, vector<32x3xbf16>, vector<32x3xf32> -> vector<32x3xf32>
    %c0_288 = arith.constant 0 : index
    %c0_289 = arith.constant 0 : index
    %561 = vector.load %arg25[%c0_288, %c0_289] : memref<1x3xf32, #tpu.memory_space<vmem>>, vector<1x3xf32>
    %562 = vector.broadcast %561 : vector<1x3xf32> to vector<32x3xf32>
    %563 = arith.addf %560, %562 : vector<32x3xf32>
    %c0_290 = arith.constant 0 : index
    %c0_291 = arith.constant 0 : index
    %564 = vector.load %arg28[%c0_290, %c0_291] : memref<32x3xf32, #tpu.memory_space<vmem>>, vector<32x3xf32>
    tpu.vector_store %arg28[%c0_290, %c0_291], %563 {strides = array<i32>} : memref<32x3xf32, #tpu.memory_space<vmem>>, vector<32x3xf32>,
    %565 = arith.truncf %557 : vector<2x32xf32> to vector<2x32xbf16>
    %c0_292 = arith.constant 0 : index
    %c0_293 = arith.constant 0 : index
    %566 = vector.load %arg26[%c0_292, %c0_293] : memref<32x1xbf16, #tpu.memory_space<vmem>>, vector<32x1xbf16>
    %cst_294 = arith.constant dense<0.000000e+00> : vector<2x1xf32>
    %567 = tpu.matmul %565, %566, %cst_294 {dimension_numbers = #tpu.dot_dimension_numbers<[1], [0], [0], [1], [0, 0, 1, 1], [], []>} : vector<2x32xbf16>, vector<32x1xbf16>, vector<2x1xf32> -> vector<2x1xf32>
    %c0_295 = arith.constant 0 : index
    %c0_296 = arith.constant 0 : index
    %568 = vector.load %arg27[%c0_295, %c0_296] : memref<1x1xf32, #tpu.memory_space<vmem>>, vector<1x1xf32>
    %569 = vector.broadcast %568 : vector<1x1xf32> to vector<2x1xf32>
    %570 = arith.addf %567, %569 : vector<2x1xf32>
    %c0_297 = arith.constant 0 : index
    %c0_298 = arith.constant 0 : index
    %571 = vector.load %arg29[%c0_297, %c0_298] : memref<2x1xf32, #tpu.memory_space<vmem>>, vector<2x1xf32>
    tpu.vector_store %arg29[%c0_297, %c0_298], %570 {strides = array<i32>} : memref<2x1xf32, #tpu.memory_space<vmem>>, vector<2x1xf32>,
    %c0_299 = arith.constant 0 : index
    %c0_300 = arith.constant 0 : index
    %c0_301 = arith.constant 0 : index
    %572 = vector.load %arg30[%c0_299, %c0_300, %c0_301] : memref<2x18x18xf32, #tpu.memory_space<vmem>>, vector<1x18x18xf32>
    %573 = vector.shape_cast %572 : vector<1x18x18xf32> to vector<18x18xf32>
    %574 = vector.shape_cast %545 : vector<18x18xf32> to vector<1x18x18xf32>
    tpu.vector_store %arg30[%c0_299, %c0_300, %c0_301], %574 {strides = array<i32>} : memref<2x18x18xf32, #tpu.memory_space<vmem>>, vector<1x18x18xf32>,
    %c0_302 = arith.constant 0 : index
    %c0_303 = arith.constant 0 : index
    %c0_304 = arith.constant 0 : index
    %575 = vector.load %arg31[%c0_302, %c0_303, %c0_304] : memref<2x18x18xf32, #tpu.memory_space<vmem>>, vector<1x18x18xf32>
    %576 = vector.shape_cast %575 : vector<1x18x18xf32> to vector<18x18xf32>
    %577 = vector.shape_cast %423 : vector<18x18xf32> to vector<1x18x18xf32>
    tpu.vector_store %arg31[%c0_302, %c0_303, %c0_304], %577 {strides = array<i32>} : memref<2x18x18xf32, #tpu.memory_space<vmem>>, vector<1x18x18xf32>,
    %c1_305 = arith.constant 1 : index
    %c0_306 = arith.constant 0 : index
    %c0_307 = arith.constant 0 : index
    %578 = vector.load %arg30[%c1_305, %c0_306, %c0_307] : memref<2x18x18xf32, #tpu.memory_space<vmem>>, vector<1x18x18xf32>
    %579 = vector.shape_cast %578 : vector<1x18x18xf32> to vector<18x18xf32>
    %580 = vector.shape_cast %551 : vector<18x18xf32> to vector<1x18x18xf32>
    tpu.vector_store %arg30[%c1_305, %c0_306, %c0_307], %580 {strides = array<i32>} : memref<2x18x18xf32, #tpu.memory_space<vmem>>, vector<1x18x18xf32>,
    %c1_308 = arith.constant 1 : index
    %c0_309 = arith.constant 0 : index
    %c0_310 = arith.constant 0 : index
    %581 = vector.load %arg31[%c1_308, %c0_309, %c0_310] : memref<2x18x18xf32, #tpu.memory_space<vmem>>, vector<1x18x18xf32>
    %582 = vector.shape_cast %581 : vector<1x18x18xf32> to vector<18x18xf32>
    %583 = vector.shape_cast %453 : vector<18x18xf32> to vector<1x18x18xf32>
    tpu.vector_store %arg31[%c1_308, %c0_309, %c0_310], %583 {strides = array<i32>} : memref<2x18x18xf32, #tpu.memory_space<vmem>>, vector<1x18x18xf32>,
    return
  }
}

</mosaic_0001>

<llo_original>
// kernel: tpu_custom_call.1
$region0: #{tpu_custom_call.1}
  #allocation0 [shape = 'u32[]', space=smem, size = 0x4, offset = 0x4, fixed_abs, tag = 'smem constant byte address 0x4 - core index']
  #allocation1 [shape = 'u32[72,128]{1,0:T(1,128)}', space=vmem, size = 0x9000, scoped, tag = 'internal scratch']
  #allocation2 [shape = 'f32[1,1]{1,0:T(1,128)S(1)}', space=vmem, size = 0x200, scoped, tag = 'scoped memory for tpu_custom_call.1']
  %s0 = inlined_call_operand.smem [shape: u32[32], index: -1, kind: input, shape index: {}]
  %s1 = sld [smem:[%s0]]
  %s2 = scalar_lea.smem %s0, 1
  %s3 = sld [smem:[%s2]]
  %s4 = scalar_lea.smem %s0, 2
  %s5 = sld [smem:[%s4]]
  %s6 = scalar_lea.smem %s0, 3
  %s7 = sld [smem:[%s6]]
  %s8 = scalar_lea.smem %s0, 4
  %s9 = sld [smem:[%s8]]
  %s10 = scalar_lea.smem %s0, 5
  %s11 = sld [smem:[%s10]]
  %s12 = scalar_lea.smem %s0, 6
  %s13 = sld [smem:[%s12]]
  %s14 = scalar_lea.smem %s0, 7
  %s15 = sld [smem:[%s14]]
  %s16 = scalar_lea.smem %s0, 8
  %s17 = sld [smem:[%s16]]
  %s18 = scalar_lea.smem %s0, 9
  %s19 = sld [smem:[%s18]]
  %s20 = scalar_lea.smem %s0, 10
  %s21 = sld [smem:[%s20]]
  %s22 = scalar_lea.smem %s0, 11
  %s23 = sld [smem:[%s22]]
  %s24 = scalar_lea.smem %s0, 12
  %s25 = sld [smem:[%s24]]
  %s26 = scalar_lea.smem %s0, 13
  %s27 = sld [smem:[%s26]]
  %s28 = scalar_lea.smem %s0, 14
  %s29 = sld [smem:[%s28]]
  %s30 = scalar_lea.smem %s0, 15
  %s31 = sld [smem:[%s30]]
  %s32 = scalar_lea.smem %s0, 16
  %s33 = sld [smem:[%s32]]
  %s34 = scalar_lea.smem %s0, 17
  %s35 = sld [smem:[%s34]]
  %s36 = scalar_lea.smem %s0, 18
  %s37 = sld [smem:[%s36]]
  %s38 = scalar_lea.smem %s0, 19
  %s39 = sld [smem:[%s38]]
  %s40 = scalar_lea.smem %s0, 20
  %s41 = sld [smem:[%s40]]
  %s42 = scalar_lea.smem %s0, 21
  %s43 = sld [smem:[%s42]]
  %s44 = scalar_lea.smem %s0, 22
  %s45 = sld [smem:[%s44]]
  %s46 = scalar_lea.smem %s0, 23
  %s47 = sld [smem:[%s46]]
  %s48 = scalar_lea.smem %s0, 24
  %s49 = sld [smem:[%s48]]
  %s50 = scalar_lea.smem %s0, 25
  %s51 = sld [smem:[%s50]]
  %s52 = scalar_lea.smem %s0, 26
  %s53 = sld [smem:[%s52]]
  %s54 = scalar_lea.smem %s0, 27
  %s55 = sld [smem:[%s54]]
  %s56 = scalar_lea.smem %s0, 28
  %s57 = sld [smem:[%s56]]
  %s58 = scalar_lea.smem %s0, 29
  %s59 = sld [smem:[%s58]]
  %s60 = scalar_lea.smem %s0, 30
  %s61 = sld [smem:[%s60]]
  %s62 = scalar_lea.smem %s0, 31
  %s63 = sld [smem:[%s62]]
  %64 = xla_tuple %s57, %s59, %s61, %s63
  %s65 = sld [smem:[#allocation0]]
  $region146: #{tpu_custom_call.1} parent=0
    _
  %s67 = ssub.s32 1, %s65
  %s68 = scalar_select 0, %s67, %s65
  %v69 = vstv %s55
  %70 = vst [vmem:[#allocation2] sm:$0x1] %v69
  // Predicated region
  $region2: #{tpu_custom_call.1} parent=0 // pred_check
    _
  $region3: #{tpu_custom_call.1} parent=0 // pred_check_branch
    %72 = sbr.rel (0) target = $region5
  $region4: #{tpu_custom_call.1} parent=0 // pred_region
    _
  $region5: #{tpu_custom_call.1} parent=0 // pred_fallthru
    _
  // Predicated region
  $region6: #{tpu_custom_call.1} parent=0 // pred_check
    _
  $region7: #{tpu_custom_call.1} parent=0 // pred_check_branch
    %74 = sbr.rel (0) target = $region9
  $region8: #{tpu_custom_call.1} parent=0 // pred_region
    _
  $region9: #{tpu_custom_call.1} parent=0 // pred_fallthru
    _
  // Predicated region
  $region10: #{tpu_custom_call.1} parent=0 // pred_check
    _
  $region11: #{tpu_custom_call.1} parent=0 // pred_check_branch
    %76 = sbr.rel (0) target = $region13
  $region12: #{tpu_custom_call.1} parent=0 // pred_region
    _
  $region13: #{tpu_custom_call.1} parent=0 // pred_fallthru
    _
  // Predicated region
  $region14: #{tpu_custom_call.1} parent=0 // pred_check
    _
  $region15: #{tpu_custom_call.1} parent=0 // pred_check_branch
    %78 = sbr.rel (0) target = $region17
  $region16: #{tpu_custom_call.1} parent=0 // pred_region
    _
  $region17: #{tpu_custom_call.1} parent=0 // pred_fallthru
    _
  // Predicated region
  $region18: #{tpu_custom_call.1} parent=0 // pred_check
    _
  $region19: #{tpu_custom_call.1} parent=0 // pred_check_branch
    %80 = sbr.rel (0) target = $region21
  $region20: #{tpu_custom_call.1} parent=0 // pred_region
    _
  $region21: #{tpu_custom_call.1} parent=0 // pred_fallthru
    _
  // Predicated region
  $region22: #{tpu_custom_call.1} parent=0 // pred_check
    _
  $region23: #{tpu_custom_call.1} parent=0 // pred_check_branch
    %82 = sbr.rel (0) target = $region25
  $region24: #{tpu_custom_call.1} parent=0 // pred_region
    _
  $region25: #{tpu_custom_call.1} parent=0 // pred_fallthru
    _
  // Predicated region
  $region26: #{tpu_custom_call.1} parent=0 // pred_check
    _
  $region27: #{tpu_custom_call.1} parent=0 // pred_check_branch
    %84 = sbr.rel (0) target = $region29
  $region28: #{tpu_custom_call.1} parent=0 // pred_region
    _
  $region29: #{tpu_custom_call.1} parent=0 // pred_fallthru
    _
  // Predicated region
  $region30: #{tpu_custom_call.1} parent=0 // pred_check
    _
  $region31: #{tpu_custom_call.1} parent=0 // pred_check_branch
    %86 = sbr.rel (0) target = $region33
  $region32: #{tpu_custom_call.1} parent=0 // pred_region
    _
  $region33: #{tpu_custom_call.1} parent=0 // pred_fallthru
    _
  // Predicated region
  $region34: #{tpu_custom_call.1} parent=0 // pred_check
    _
  $region35: #{tpu_custom_call.1} parent=0 // pred_check_branch
    %88 = sbr.rel (0) target = $region37
  $region36: #{tpu_custom_call.1} parent=0 // pred_region
    _
  $region37: #{tpu_custom_call.1} parent=0 // pred_fallthru
    _
  // Predicated region
  $region38: #{tpu_custom_call.1} parent=0 // pred_check
    _
  $region39: #{tpu_custom_call.1} parent=0 // pred_check_branch
    %90 = sbr.rel (0) target = $region41
  $region40: #{tpu_custom_call.1} parent=0 // pred_region
    _
  $region41: #{tpu_custom_call.1} parent=0 // pred_fallthru
    _
  // Predicated region
  $region42: #{tpu_custom_call.1} parent=0 // pred_check
    _
  $region43: #{tpu_custom_call.1} parent=0 // pred_check_branch
    %92 = sbr.rel (0) target = $region45
  $region44: #{tpu_custom_call.1} parent=0 // pred_region
    _
  $region45: #{tpu_custom_call.1} parent=0 // pred_fallthru
    _
  // Predicated region
  $region46: #{tpu_custom_call.1} parent=0 // pred_check
    _
  $region47: #{tpu_custom_call.1} parent=0 // pred_check_branch
    %94 = sbr.rel (0) target = $region49
  $region48: #{tpu_custom_call.1} parent=0 // pred_region
    _
  $region49: #{tpu_custom_call.1} parent=0 // pred_fallthru
    _
  // Predicated region
  $region50: #{tpu_custom_call.1} parent=0 // pred_check
    _
  $region51: #{tpu_custom_call.1} parent=0 // pred_check_branch
    %96 = sbr.rel (0) target = $region53
  $region52: #{tpu_custom_call.1} parent=0 // pred_region
    _
  $region53: #{tpu_custom_call.1} parent=0 // pred_fallthru
    _
  // Predicated region
  $region54: #{tpu_custom_call.1} parent=0 // pred_check
    _
  $region55: #{tpu_custom_call.1} parent=0 // pred_check_branch
    %98 = sbr.rel (0) target = $region57
  $region56: #{tpu_custom_call.1} parent=0 // pred_region
    _
  $region57: #{tpu_custom_call.1} parent=0 // pred_fallthru
    _
  // Predicated region
  $region58: #{tpu_custom_call.1} parent=0 // pred_check
    _
  $region59: #{tpu_custom_call.1} parent=0 // pred_check_branch
    %100 = sbr.rel (0) target = $region61
  $region60: #{tpu_custom_call.1} parent=0 // pred_region
    _
  $region61: #{tpu_custom_call.1} parent=0 // pred_fallthru
    _
  // Predicated region
  $region62: #{tpu_custom_call.1} parent=0 // pred_check
    _
  $region63: #{tpu_custom_call.1} parent=0 // pred_check_branch
    %102 = sbr.rel (0) target = $region65
  $region64: #{tpu_custom_call.1} parent=0 // pred_region
    _
  $region65: #{tpu_custom_call.1} parent=0 // pred_fallthru
    _
  // Predicated region
  $region66: #{tpu_custom_call.1} parent=0 // pred_check
    _
  $region67: #{tpu_custom_call.1} parent=0 // pred_check_branch
    %104 = sbr.rel (0) target = $region69
  $region68: #{tpu_custom_call.1} parent=0 // pred_region
    _
  $region69: #{tpu_custom_call.1} parent=0 // pred_fallthru
    _
  // Predicated region
  $region70: #{tpu_custom_call.1} parent=0 // pred_check
    _
  $region71: #{tpu_custom_call.1} parent=0 // pred_check_branch
    %106 = sbr.rel (0) target = $region73
  $region72: #{tpu_custom_call.1} parent=0 // pred_region
    _
  $region73: #{tpu_custom_call.1} parent=0 // pred_fallthru
    _
  // Predicated region
  $region74: #{tpu_custom_call.1} parent=0 // pred_check
    _
  $region75: #{tpu_custom_call.1} parent=0 // pred_check_branch
    %108 = sbr.rel (0) target = $region77
  $region76: #{tpu_custom_call.1} parent=0 // pred_region
    _
  $region77: #{tpu_custom_call.1} parent=0 // pred_fallthru
    _
  // Predicated region
  $region78: #{tpu_custom_call.1} parent=0 // pred_check
    _
  $region79: #{tpu_custom_call.1} parent=0 // pred_check_branch
    %110 = sbr.rel (0) target = $region81
  $region80: #{tpu_custom_call.1} parent=0 // pred_region
    _
  $region81: #{tpu_custom_call.1} parent=0 // pred_fallthru
    _
  // Predicated region
  $region82: #{tpu_custom_call.1} parent=0 // pred_check
    _
  $region83: #{tpu_custom_call.1} parent=0 // pred_check_branch
    %112 = sbr.rel (0) target = $region85
  $region84: #{tpu_custom_call.1} parent=0 // pred_region
    _
  $region85: #{tpu_custom_call.1} parent=0 // pred_fallthru
    _
  // Predicated region
  $region86: #{tpu_custom_call.1} parent=0 // pred_check
    _
  $region87: #{tpu_custom_call.1} parent=0 // pred_check_branch
    %114 = sbr.rel (0) target = $region89
  $region88: #{tpu_custom_call.1} parent=0 // pred_region
    _
  $region89: #{tpu_custom_call.1} parent=0 // pred_fallthru
    _
  // Predicated region
  $region90: #{tpu_custom_call.1} parent=0 // pred_check
    _
  $region91: #{tpu_custom_call.1} parent=0 // pred_check_branch
    %116 = sbr.rel (0) target = $region93
  $region92: #{tpu_custom_call.1} parent=0 // pred_region
    _
  $region93: #{tpu_custom_call.1} parent=0 // pred_fallthru
    _
  // Predicated region
  $region94: #{tpu_custom_call.1} parent=0 // pred_check
    _
  $region95: #{tpu_custom_call.1} parent=0 // pred_check_branch
    %118 = sbr.rel (0) target = $region97
  $region96: #{tpu_custom_call.1} parent=0 // pred_region
    _
  $region97: #{tpu_custom_call.1} parent=0 // pred_fallthru
    _
  // Predicated region
  $region98: #{tpu_custom_call.1} parent=0 // pred_check
    _
  $region99: #{tpu_custom_call.1} parent=0 // pred_check_branch
    %120 = sbr.rel (0) target = $region101
  $region100: #{tpu_custom_call.1} parent=0 // pred_region
    _
  $region101: #{tpu_custom_call.1} parent=0 // pred_fallthru
    _
  // Predicated region
  $region102: #{tpu_custom_call.1} parent=0 // pred_check
    _
  $region103: #{tpu_custom_call.1} parent=0 // pred_check_branch
    %122 = sbr.rel (0) target = $region105
  $region104: #{tpu_custom_call.1} parent=0 // pred_region
    _
  $region105: #{tpu_custom_call.1} parent=0 // pred_fallthru
    _
  // Predicated region
  $region106: #{tpu_custom_call.1} parent=0 // pred_check
    _
  $region107: #{tpu_custom_call.1} parent=0 // pred_check_branch
    %124 = sbr.rel (0) target = $region109
  $region108: #{tpu_custom_call.1} parent=0 // pred_region
    _
  $region109: #{tpu_custom_call.1} parent=0 // pred_fallthru
    _
  // Predicated region
  $region110: #{tpu_custom_call.1} parent=0 // pred_check
    _
  $region111: #{tpu_custom_call.1} parent=0 // pred_check_branch
    %126 = sbr.rel (0) target = $region113
  $region112: #{tpu_custom_call.1} parent=0 // pred_region
    _
  $region113: #{tpu_custom_call.1} parent=0 // pred_fallthru
    _
  %v128 = vld [vmem:[%s1] sm:$0xff]
  %v129 = vld [vmem:[%s1 + $0x8] sm:$0xff]
  %v130 = vld [vmem:[%s1 + $0x10] sm:$0xff]
  %v131 = vld [vmem:[%s1 + $0x18] sm:$0xff]
  %v132 = vpack.c.bf16 %v129, %v128
  %v133 = vpack.c.bf16 %v131, %v130
  %v134 = vld [vmem:[%s5] sm:$0x3]
  %v135 = vld [vmem:[%s7] sm:$0x1]
  %v137 = vperm.slane %v135, 0
  %vm139 = vcmask 23552
  %v141 = vsel %vm139, %v132, 0
  %v144 = vsel %vm139, %v133, 0
  %vm146 = vcmask 1040384
  %vm147 = vcmask 1041408
  %v148 = vsel %vm146, 4294967295, 65535
  %v149 = vsel %vm147, %v148, 0
  %v151 = vand.u32 %v134, %v149
  %153 = vmatpush.bf16.msra.mxu0 0
  %154 = vmatpush.bf16.msra.mxu0 0
  %155 = vmatpush.bf16.msra.mxu0 0
  %156 = vmatpush.bf16.msra.mxu0 0
  %157 = vmatpush.bf16.msra.mxu0 0
  %158 = vmatpush.bf16.msra.mxu0 0
  %159 = vmatpush.bf16.msra.mxu0 0
  %160 = vmatpush.bf16.msra.mxu0 %v151
  %161 = vmatmul.bf16.gmra.mxu0 %v141
  %v162 = vpop.f32.mrf.mxu0
  %v163 = vadd.f32 %v137, %v162
  %v164 = vpop.f32.mrf.mxu0
  %v165 = vadd.f32 %v137, %v164
  %166 = vmatmul.bf16.gmra.mxu0 %v144
  %v167 = vpop.f32.mrf.mxu0
  %v168 = vadd.f32 %v137, %v167
  %v169 = vpop.f32.mrf.mxu0
  %v170 = vadd.f32 %v137, %v169
  %171 = vdwg.mxu0
  %v172 = vld [vmem:[%s3] sm:$0x3]
  %v173 = vpack.c.bf16 %v172, %v172
  %v174 = vld [vmem:[%s9] sm:$0x7]
  %v175 = vld [vmem:[%s11] sm:$0x1]
  %v177 = vperm.slane %v175, 0
  %vm179 = vcmask 48128
  %v181 = vsel %vm179, %v173, 0
  %vm183 = vcmask 1042432
  %v185 = vsel %vm183, %v174, 0
  %187 = vmatpush.bf16.msra.mxu0 0
  %188 = vmatpush.bf16.msra.mxu0 0
  %189 = vmatpush.bf16.msra.mxu0 0
  %190 = vmatpush.bf16.msra.mxu0 0
  %191 = vmatpush.bf16.msra.mxu0 0
  %192 = vmatpush.bf16.msra.mxu0 0
  %193 = vmatpush.bf16.msra.mxu0 0
  %194 = vmatpush.bf16.msra.mxu0 %v185
  %195 = vmatmul.bf16.gmra.mxu0 %v181
  %v196 = vpop.f32.mrf.mxu0
  %v197 = vadd.f32 %v177, %v196
  %v198 = vpop.f32.mrf.mxu0
  %199 = vdwg.mxu0
  %v200 = vld [vmem:[%s13] sm:$0x1]
  %v201 = vld [vmem:[%s15] sm:$0xff]
  %v202 = vld [vmem:[%s15 + $0x8] sm:$0xff]
  %v203 = vld [vmem:[%s15 + $0x10] sm:$0x3]
  %v205 = vperm.slane %v200, 0
  %v207 = vsel %vm146, %v197, %v205
  %v208 = vadd.f32 %v163, %v201
  %v209 = vadd.f32 %v165, %v202
  %v210 = vadd.f32 %v207, %v203
  %v212 = vrot.slane %v197, 1
  %v214 = vsel %vm146, %v212, %v205
  %v215 = vadd.f32 %v168, %v201
  %v216 = vadd.f32 %v170, %v202
  %v217 = vadd.f32 %v214, %v203
  %v221 = vrot.slane %v215, 6
  %v222 = vrot.slane %v216, 6
  %v223 = vsel %vm147, %v221, %v222
  %v224 = vrot.slane %v217, 6
  %v225 = vsel %vm147, %v222, %v224
  %v229 = vsel %vm147, %v210, %v221
  %v230 = vlaneseq
  %v231 = vshrl.u32 %v230, 7
  %v232 = vadd.s32 %v231, 8
  %v233 = vadd.s32 %v231, 16
  %v234 = vlaneseq
  %v235 = vand.u32 %v234, 127
  %vm236 = vcmp.eq.s32.totalorder %v231, %v235
  %vm237 = vcmp.eq.s32.totalorder %v232, %v235
  %vm238 = vcmp.eq.s32.totalorder %v233, %v235
  %v239 = vsel %vm236, 1, 0
  %v240 = vsel %vm237, 1, 0
  %v241 = vsel %vm238, 1, 0
  %v242 = vcvt.s32.f32 %v239
  %v243 = vcvt.s32.f32 %v240
  %v244 = vcvt.s32.f32 %v241
  %v245 = vpack.c.bf16 %v209, %v208
  %v246 = vpack.c.bf16 %v223, %v229
  %v247 = vpack.c.bf16 %v225, %v225
  %v248 = vld [vmem:[%s17] sm:$0xf]
  %v249 = vld [vmem:[%s17 + $0x4] sm:$0xf]
  %v250 = vld [vmem:[%s17 + $0x8] sm:$0xf]
  %v251 = vld [vmem:[%s17 + $0xc] sm:$0xf]
  %v252 = vld [vmem:[%s19] sm:$0x1]
  %v254 = vperm.slane %v252, 0
  %v260 = vunpack.c.l.b16 %v248
  %v261 = vunpack.c.l.b16 %v249
  %v262 = vunpack.c.l.b16 %v250
  %v263 = vunpack.c.l.b16 %v251
  %v264 = vpack.c.b16 %v261, %v260
  %v265 = vpack.c.b16 %v263, %v262
  %vm268 = vcmask 261120
  %v270 = vsel %vm268, %v245, 0
  %v273 = vsel %vm268, %v246, 0
  %v276 = vsel %vm268, %v247, 0
  %278 = vmatpush.bf16.msra.mxu0 0
  %279 = vmatpush.bf16.msra.mxu0 0
  %280 = vmatpush.bf16.msra.mxu0 0
  %281 = vmatpush.bf16.msra.mxu0 0
  %282 = vmatpush.bf16.msra.mxu0 0
  %283 = vmatpush.bf16.msra.mxu0 0
  %284 = vmatpush.bf16.msra.mxu0 %v265
  %285 = vmatpush.bf16.msra.mxu0 %v264
  %286 = vmatmul.bf16.gmra.mxu0 %v270
  %v287 = vpop.f32.mrf.mxu0
  %v288 = vadd.f32 %v254, %v287
  %v289 = vpop.f32.mrf.mxu0
  %v290 = vadd.f32 %v254, %v289
  %291 = vmatmul.bf16.gmra.mxu0 %v273
  %v292 = vpop.f32.mrf.mxu0
  %v293 = vadd.f32 %v254, %v292
  %v294 = vpop.f32.mrf.mxu0
  %v295 = vadd.f32 %v254, %v294
  %296 = vmatmul.bf16.gmra.mxu0 %v276
  %v297 = vpop.f32.mrf.mxu0
  %v298 = vadd.f32 %v254, %v297
  %v299 = vpop.f32.mrf.mxu0
  %300 = vdwg.mxu0
  %v301 = vld [vmem:[%s21] sm:$0xf]
  %v302 = vld [vmem:[%s21 + $0x4] sm:$0xf]
  %v303 = vld [vmem:[%s21 + $0x8] sm:$0xf]
  %v304 = vld [vmem:[%s21 + $0xc] sm:$0xf]
  %v305 = vld [vmem:[%s23] sm:$0x1]
  %v307 = vperm.slane %v305, 0
  %v313 = vunpack.c.l.b16 %v301
  %v314 = vunpack.c.l.b16 %v302
  %v315 = vunpack.c.l.b16 %v303
  %v316 = vunpack.c.l.b16 %v304
  %v317 = vpack.c.b16 %v314, %v313
  %v318 = vpack.c.b16 %v316, %v315
  %321 = vmatpush.bf16.msra.mxu0 0
  %322 = vmatpush.bf16.msra.mxu0 0
  %323 = vmatpush.bf16.msra.mxu0 0
  %324 = vmatpush.bf16.msra.mxu0 0
  %325 = vmatpush.bf16.msra.mxu0 0
  %326 = vmatpush.bf16.msra.mxu0 0
  %327 = vmatpush.bf16.msra.mxu0 %v318
  %328 = vmatpush.bf16.msra.mxu0 %v317
  %329 = vmatmul.bf16.gmra.mxu0 %v270
  %v330 = vpop.f32.mrf.mxu0
  %v331 = vadd.f32 %v307, %v330
  %v332 = vpop.f32.mrf.mxu0
  %v333 = vadd.f32 %v307, %v332
  %334 = vmatmul.bf16.gmra.mxu0 %v273
  %v335 = vpop.f32.mrf.mxu0
  %v336 = vadd.f32 %v307, %v335
  %v337 = vpop.f32.mrf.mxu0
  %v338 = vadd.f32 %v307, %v337
  %339 = vmatmul.bf16.gmra.mxu0 %v276
  %v340 = vpop.f32.mrf.mxu0
  %v341 = vadd.f32 %v307, %v340
  %v342 = vpop.f32.mrf.mxu0
  %343 = vdwg.mxu0
  %v344 = vld [vmem:[%s25] sm:$0xf]
  %v345 = vld [vmem:[%s25 + $0x4] sm:$0xf]
  %v346 = vld [vmem:[%s25 + $0x8] sm:$0xf]
  %v347 = vld [vmem:[%s25 + $0xc] sm:$0xf]
  %v348 = vld [vmem:[%s27] sm:$0x1]
  %v350 = vperm.slane %v348, 0
  %v356 = vunpack.c.l.b16 %v344
  %v357 = vunpack.c.l.b16 %v345
  %v358 = vunpack.c.l.b16 %v346
  %v359 = vunpack.c.l.b16 %v347
  %v360 = vpack.c.b16 %v357, %v356
  %v361 = vpack.c.b16 %v359, %v358
  %364 = vmatpush.bf16.msra.mxu0 0
  %365 = vmatpush.bf16.msra.mxu0 0
  %366 = vmatpush.bf16.msra.mxu0 0
  %367 = vmatpush.bf16.msra.mxu0 0
  %368 = vmatpush.bf16.msra.mxu0 0
  %369 = vmatpush.bf16.msra.mxu0 0
  %370 = vmatpush.bf16.msra.mxu0 %v361
  %371 = vmatpush.bf16.msra.mxu0 %v360
  %372 = vmatmul.bf16.gmra.mxu0 %v270
  %v373 = vpop.f32.mrf.mxu0
  %v374 = vadd.f32 %v350, %v373
  %v375 = vpop.f32.mrf.mxu0
  %v376 = vadd.f32 %v350, %v375
  %377 = vmatmul.bf16.gmra.mxu0 %v273
  %v378 = vpop.f32.mrf.mxu0
  %v379 = vadd.f32 %v350, %v378
  %v380 = vpop.f32.mrf.mxu0
  %v381 = vadd.f32 %v350, %v380
  %382 = vmatmul.bf16.gmra.mxu0 %v276
  %v383 = vpop.f32.mrf.mxu0
  %v384 = vadd.f32 %v350, %v383
  %v385 = vpop.f32.mrf.mxu0
  %386 = vdwg.mxu0
  %v387 = vpack.c.bf16 %v290, %v288
  %v388 = vpack.c.bf16 %v293, %v293
  %v389 = vpack.c.bf16 %v333, %v331
  %v390 = vpack.c.bf16 %v336, %v336
  %v391 = vpack.c.bf16 %v376, %v374
  %v392 = vpack.c.bf16 %v379, %v379
  %vm393 = vcmask 130048
  %v395 = vsel %vm393, %v387, 0
  %v398 = vsel %vm393, %v388, 0
  %v401 = vsel %vm393, %v389, 0
  %v404 = vsel %vm393, %v390, 0
  %406 = vmatpush.bf16.xpose.msra.mxu0 0
  %407 = vmatpush.bf16.xpose.msra.mxu0 0
  %408 = vmatpush.bf16.xpose.msra.mxu0 0
  %409 = vmatpush.bf16.xpose.msra.mxu0 0
  %410 = vmatpush.bf16.xpose.msra.mxu0 0
  %411 = vmatpush.bf16.xpose.msra.mxu0 0
  %412 = vmatpush.bf16.xpose.msra.mxu0 %v404
  %413 = vmatpush.bf16.xpose.msra.mxu0 %v401
  %414 = vmatmul.bf16.gmra.mxu0 %v395
  %v415 = vpop.f32.mrf.mxu0
  %v416 = vadd.f32 0.0, %v415
  %v417 = vpop.f32.mrf.mxu0
  %v418 = vadd.f32 0.0, %v417
  %419 = vmatmul.bf16.gmra.mxu0 %v398
  %v420 = vpop.f32.mrf.mxu0
  %v421 = vadd.f32 0.0, %v420
  %v422 = vpop.f32.mrf.mxu0
  %423 = vdwg.mxu0
  %v424 = vmul.f32 %v416, 0.25
  %v425 = vmul.f32 %v418, 0.25
  %v426 = vmul.f32 %v421, 0.25
  %vm427 = vcmask 146432
  %v428 = vsel %vm427, %v424, -inf
  %429 = vmax.xlane.f32.xlu0 %v428
  %v430 = vpop.xlane.xlu0 %429
  %v431 = vsel %vm427, %v425, -inf
  %432 = vmax.xlane.f32.xlu0 %v431
  %v433 = vpop.xlane.xlu0 %432
  %vm434 = vcmask 140288
  %v435 = vsel %vm434, %v426, -inf
  %436 = vmax.xlane.f32.xlu0 %v435
  %v437 = vpop.xlane.xlu0 %436
  %v438 = vsub.f32 %v424, %v430
  %v439 = vsub.f32 %v425, %v433
  %v440 = vsub.f32 %v426, %v437
  %v441 = vmul.f32 %v438, 1.442695
  %v442 = vpow.pop %v441
  %v443 = vmul.f32 %v439, 1.442695
  %v444 = vpow.pop %v443
  %v445 = vmul.f32 %v440, 1.442695
  %v446 = vpow.pop %v445
  %v447 = vsel %vm427, %v442, 0.0
  %448 = vadd.xlane.f32.xlu0 %v447
  %v449 = vpop.xlane.xlu0 %448
  %v450 = vsel %vm427, %v444, 0.0
  %451 = vadd.xlane.f32.xlu0 %v450
  %v452 = vpop.xlane.xlu0 %451
  %v453 = vsel %vm434, %v446, 0.0
  %454 = vadd.xlane.f32.xlu0 %v453
  %v455 = vpop.xlane.xlu0 %454
  %v456 = vrcp.pop %v449
  %v457 = vrcp.pop %v452
  %v458 = vrcp.pop %v455
  %v459 = vmul.f32 %v442, %v456
  %v460 = vmul.f32 %v444, %v457
  %v461 = vmul.f32 %v446, %v458
  %vm462 = vcmp.ge.f32.partialorder %v459, 0.1
  %vm463 = vcmp.ge.f32.partialorder %v460, 0.1
  %vm464 = vcmp.ge.f32.partialorder %v461, 0.1
  %v465 = vsel %vm462, %v459, 0.0
  %v466 = vsel %vm463, %v460, 0.0
  %v467 = vsel %vm464, %v461, 0.0
  %v468 = vpack.c.bf16 %v466, %v465
  %v469 = vpack.c.bf16 %v467, %v467
  %v471 = vsel %vm427, %v468, 0
  %v474 = vsel %vm427, %v469, 0
  %v477 = vsel %vm146, %v392, 0
  %479 = vmatpush.bf16.msra.mxu0 0
  %480 = vmatpush.bf16.msra.mxu0 0
  %481 = vmatpush.bf16.msra.mxu0 0
  %482 = vmatpush.bf16.msra.mxu0 0
  %483 = vmatpush.bf16.msra.mxu0 0
  %484 = vmatpush.bf16.msra.mxu0 0
  %485 = vmatpush.bf16.msra.mxu0 %v477
  %486 = vmatpush.bf16.msra.mxu0 %v391
  %487 = vmatmul.bf16.gmra.mxu0 %v471
  %v488 = vpop.f32.mrf.mxu0
  %v489 = vadd.f32 0.0, %v488
  %v490 = vpop.f32.mrf.mxu0
  %v491 = vadd.f32 0.0, %v490
  %492 = vmatmul.bf16.gmra.mxu0 %v474
  %v493 = vpop.f32.mrf.mxu0
  %v494 = vadd.f32 0.0, %v493
  %v495 = vpop.f32.mrf.mxu0
  %496 = vdwg.mxu0
  %v497 = vadd.f32 %v459, 0.0
  %v498 = vadd.f32 %v460, 0.0
  %v499 = vadd.f32 %v461, 0.0
  %v500 = vsel %vm462, 1, 0
  %v501 = vsel %vm463, 1, 0
  %v502 = vsel %vm464, 1, 0
  %v503 = vcvt.s32.f32 %v500
  %v504 = vcvt.s32.f32 %v501
  %v505 = vcvt.s32.f32 %v502
  %v506 = vadd.f32 %v503, 0.0
  %v507 = vadd.f32 %v504, 0.0
  %v508 = vadd.f32 %v505, 0.0
  %v509 = vpack.c.bf16 %v295, %v293
  %v510 = vpack.c.bf16 %v298, %v298
  %v511 = vpack.c.bf16 %v338, %v336
  %v512 = vpack.c.bf16 %v341, %v341
  %v513 = vpack.c.bf16 %v381, %v379
  %v514 = vpack.c.bf16 %v384, %v384
  %vm517 = vcmask 1046528
  %v518 = vrot.slane %v509, 1
  %v519 = vrot.slane %v510, 1
  %v520 = vsel %vm517, %v518, %v519
  %v523 = vrot.slane %v511, 1
  %v524 = vrot.slane %v512, 1
  %v525 = vsel %vm517, %v523, %v524
  %v527 = vsel %vm393, %v520, 0
  %v530 = vsel %vm393, %v519, 0
  %v533 = vsel %vm393, %v525, 0
  %v536 = vsel %vm393, %v524, 0
  %538 = vmatpush.bf16.xpose.msra.mxu0 0
  %539 = vmatpush.bf16.xpose.msra.mxu0 0
  %540 = vmatpush.bf16.xpose.msra.mxu0 0
  %541 = vmatpush.bf16.xpose.msra.mxu0 0
  %542 = vmatpush.bf16.xpose.msra.mxu0 0
  %543 = vmatpush.bf16.xpose.msra.mxu0 0
  %544 = vmatpush.bf16.xpose.msra.mxu0 %v536
  %545 = vmatpush.bf16.xpose.msra.mxu0 %v533
  %546 = vmatmul.bf16.gmra.mxu0 %v527
  %v547 = vpop.f32.mrf.mxu0
  %v548 = vadd.f32 0.0, %v547
  %v549 = vpop.f32.mrf.mxu0
  %v550 = vadd.f32 0.0, %v549
  %551 = vmatmul.bf16.gmra.mxu0 %v530
  %v552 = vpop.f32.mrf.mxu0
  %v553 = vadd.f32 0.0, %v552
  %v554 = vpop.f32.mrf.mxu0
  %555 = vdwg.mxu0
  %v556 = vmul.f32 %v548, 0.25
  %v557 = vmul.f32 %v550, 0.25
  %v558 = vmul.f32 %v553, 0.25
  %v559 = vsel %vm427, %v556, -inf
  %560 = vmax.xlane.f32.xlu0 %v559
  %v561 = vpop.xlane.xlu0 %560
  %v562 = vsel %vm427, %v557, -inf
  %563 = vmax.xlane.f32.xlu0 %v562
  %v564 = vpop.xlane.xlu0 %563
  %v565 = vsel %vm434, %v558, -inf
  %566 = vmax.xlane.f32.xlu0 %v565
  %v567 = vpop.xlane.xlu0 %566
  %v568 = vsub.f32 %v556, %v561
  %v569 = vsub.f32 %v557, %v564
  %v570 = vsub.f32 %v558, %v567
  %v571 = vmul.f32 %v568, 1.442695
  %v572 = vpow.pop %v571
  %v573 = vmul.f32 %v569, 1.442695
  %v574 = vpow.pop %v573
  %v575 = vmul.f32 %v570, 1.442695
  %v576 = vpow.pop %v575
  %v577 = vsel %vm427, %v572, 0.0
  %578 = vadd.xlane.f32.xlu0 %v577
  %v579 = vpop.xlane.xlu0 %578
  %v580 = vsel %vm427, %v574, 0.0
  %581 = vadd.xlane.f32.xlu0 %v580
  %v582 = vpop.xlane.xlu0 %581
  %v583 = vsel %vm434, %v576, 0.0
  %584 = vadd.xlane.f32.xlu0 %v583
  %v585 = vpop.xlane.xlu0 %584
  %v586 = vrcp.pop %v579
  %v587 = vrcp.pop %v582
  %v588 = vrcp.pop %v585
  %v589 = vmul.f32 %v572, %v586
  %v590 = vmul.f32 %v574, %v587
  %v591 = vmul.f32 %v576, %v588
  %vm592 = vcmp.ge.f32.partialorder %v589, 0.1
  %vm593 = vcmp.ge.f32.partialorder %v590, 0.1
  %vm594 = vcmp.ge.f32.partialorder %v591, 0.1
  %v595 = vsel %vm592, %v589, 0.0
  %v596 = vsel %vm593, %v590, 0.0
  %v597 = vsel %vm594, %v591, 0.0
  %v598 = vpack.c.bf16 %v596, %v595
  %v599 = vpack.c.bf16 %v597, %v597
  %v602 = vrot.slane %v513, 1
  %v603 = vrot.slane %v514, 1
  %v604 = vsel %vm517, %v602, %v603
  %v607 = vsel %vm427, %v598, 0
  %v610 = vsel %vm427, %v599, 0
  %v613 = vsel %vm146, %v603, 0
  %615 = vmatpush.bf16.msra.mxu0 0
  %616 = vmatpush.bf16.msra.mxu0 0
  %617 = vmatpush.bf16.msra.mxu0 0
  %618 = vmatpush.bf16.msra.mxu0 0
  %619 = vmatpush.bf16.msra.mxu0 0
  %620 = vmatpush.bf16.msra.mxu0 0
  %621 = vmatpush.bf16.msra.mxu0 %v613
  %622 = vmatpush.bf16.msra.mxu0 %v604
  %623 = vmatmul.bf16.gmra.mxu0 %v607
  %v624 = vpop.f32.mrf.mxu0
  %v625 = vadd.f32 0.0, %v624
  %v626 = vpop.f32.mrf.mxu0
  %v627 = vadd.f32 0.0, %v626
  %628 = vmatmul.bf16.gmra.mxu0 %v610
  %v629 = vpop.f32.mrf.mxu0
  %v630 = vadd.f32 0.0, %v629
  %v631 = vpop.f32.mrf.mxu0
  %632 = vdwg.mxu0
  %v633 = vadd.f32 %v589, 0.0
  %v634 = vadd.f32 %v590, 0.0
  %v635 = vadd.f32 %v591, 0.0
  %v636 = vsel %vm592, 1, 0
  %v637 = vsel %vm593, 1, 0
  %v638 = vsel %vm594, 1, 0
  %v639 = vcvt.s32.f32 %v636
  %v640 = vcvt.s32.f32 %v637
  %v641 = vcvt.s32.f32 %v638
  %v642 = vadd.f32 %v639, 0.0
  %v643 = vadd.f32 %v640, 0.0
  %v644 = vadd.f32 %v641, 0.0
  %s645 = scalar_lea.vmem %s17, 16
  %v646 = vld [vmem:[%s645] sm:$0xf]
  %v647 = vld [vmem:[%s645 + $0x4] sm:$0xf]
  %v648 = vld [vmem:[%s645 + $0x8] sm:$0xf]
  %v649 = vld [vmem:[%s645 + $0xc] sm:$0xf]
  %s650 = scalar_lea.vmem %s19, 1
  %v651 = vld [vmem:[%s650] sm:$0x1]
  %v653 = vperm.slane %v651, 0
  %v659 = vunpack.c.l.b16 %v646
  %v660 = vunpack.c.l.b16 %v647
  %v661 = vunpack.c.l.b16 %v648
  %v662 = vunpack.c.l.b16 %v649
  %v663 = vpack.c.b16 %v660, %v659
  %v664 = vpack.c.b16 %v662, %v661
  %667 = vmatpush.bf16.msra.mxu0 0
  %668 = vmatpush.bf16.msra.mxu0 0
  %669 = vmatpush.bf16.msra.mxu0 0
  %670 = vmatpush.bf16.msra.mxu0 0
  %671 = vmatpush.bf16.msra.mxu0 0
  %672 = vmatpush.bf16.msra.mxu0 0
  %673 = vmatpush.bf16.msra.mxu0 %v664
  %674 = vmatpush.bf16.msra.mxu0 %v663
  %675 = vmatmul.bf16.gmra.mxu0 %v270
  %v676 = vpop.f32.mrf.mxu0
  %v677 = vadd.f32 %v653, %v676
  %v678 = vpop.f32.mrf.mxu0
  %v679 = vadd.f32 %v653, %v678
  %680 = vmatmul.bf16.gmra.mxu0 %v273
  %v681 = vpop.f32.mrf.mxu0
  %v682 = vadd.f32 %v653, %v681
  %v683 = vpop.f32.mrf.mxu0
  %v684 = vadd.f32 %v653, %v683
  %685 = vmatmul.bf16.gmra.mxu0 %v276
  %v686 = vpop.f32.mrf.mxu0
  %v687 = vadd.f32 %v653, %v686
  %v688 = vpop.f32.mrf.mxu0
  %689 = vdwg.mxu0
  %s690 = scalar_lea.vmem %s21, 16
  %v691 = vld [vmem:[%s690] sm:$0xf]
  %v692 = vld [vmem:[%s690 + $0x4] sm:$0xf]
  %v693 = vld [vmem:[%s690 + $0x8] sm:$0xf]
  %v694 = vld [vmem:[%s690 + $0xc] sm:$0xf]
  %s695 = scalar_lea.vmem %s23, 1
  %v696 = vld [vmem:[%s695] sm:$0x1]
  %v698 = vperm.slane %v696, 0
  %v704 = vunpack.c.l.b16 %v691
  %v705 = vunpack.c.l.b16 %v692
  %v706 = vunpack.c.l.b16 %v693
  %v707 = vunpack.c.l.b16 %v694
  %v708 = vpack.c.b16 %v705, %v704
  %v709 = vpack.c.b16 %v707, %v706
  %712 = vmatpush.bf16.msra.mxu0 0
  %713 = vmatpush.bf16.msra.mxu0 0
  %714 = vmatpush.bf16.msra.mxu0 0
  %715 = vmatpush.bf16.msra.mxu0 0
  %716 = vmatpush.bf16.msra.mxu0 0
  %717 = vmatpush.bf16.msra.mxu0 0
  %718 = vmatpush.bf16.msra.mxu0 %v709
  %719 = vmatpush.bf16.msra.mxu0 %v708
  %720 = vmatmul.bf16.gmra.mxu0 %v270
  %v721 = vpop.f32.mrf.mxu0
  %v722 = vadd.f32 %v698, %v721
  %v723 = vpop.f32.mrf.mxu0
  %v724 = vadd.f32 %v698, %v723
  %725 = vmatmul.bf16.gmra.mxu0 %v273
  %v726 = vpop.f32.mrf.mxu0
  %v727 = vadd.f32 %v698, %v726
  %v728 = vpop.f32.mrf.mxu0
  %v729 = vadd.f32 %v698, %v728
  %730 = vmatmul.bf16.gmra.mxu0 %v276
  %v731 = vpop.f32.mrf.mxu0
  %v732 = vadd.f32 %v698, %v731
  %v733 = vpop.f32.mrf.mxu0
  %734 = vdwg.mxu0
  %s735 = scalar_lea.vmem %s25, 16
  %v736 = vld [vmem:[%s735] sm:$0xf]
  %v737 = vld [vmem:[%s735 + $0x4] sm:$0xf]
  %v738 = vld [vmem:[%s735 + $0x8] sm:$0xf]
  %v739 = vld [vmem:[%s735 + $0xc] sm:$0xf]
  %s740 = scalar_lea.vmem %s27, 1
  %v741 = vld [vmem:[%s740] sm:$0x1]
  %v743 = vperm.slane %v741, 0
  %v749 = vunpack.c.l.b16 %v736
  %v750 = vunpack.c.l.b16 %v737
  %v751 = vunpack.c.l.b16 %v738
  %v752 = vunpack.c.l.b16 %v739
  %v753 = vpack.c.b16 %v750, %v749
  %v754 = vpack.c.b16 %v752, %v751
  %757 = vmatpush.bf16.msra.mxu0 0
  %758 = vmatpush.bf16.msra.mxu0 0
  %759 = vmatpush.bf16.msra.mxu0 0
  %760 = vmatpush.bf16.msra.mxu0 0
  %761 = vmatpush.bf16.msra.mxu0 0
  %762 = vmatpush.bf16.msra.mxu0 0
  %763 = vmatpush.bf16.msra.mxu0 %v754
  %764 = vmatpush.bf16.msra.mxu0 %v753
  %765 = vmatmul.bf16.gmra.mxu0 %v270
  %v766 = vpop.f32.mrf.mxu0
  %v767 = vadd.f32 %v743, %v766
  %v768 = vpop.f32.mrf.mxu0
  %v769 = vadd.f32 %v743, %v768
  %770 = vmatmul.bf16.gmra.mxu0 %v273
  %v771 = vpop.f32.mrf.mxu0
  %v772 = vadd.f32 %v743, %v771
  %v773 = vpop.f32.mrf.mxu0
  %v774 = vadd.f32 %v743, %v773
  %775 = vmatmul.bf16.gmra.mxu0 %v276
  %v776 = vpop.f32.mrf.mxu0
  %v777 = vadd.f32 %v743, %v776
  %v778 = vpop.f32.mrf.mxu0
  %779 = vdwg.mxu0
  %v780 = vpack.c.bf16 %v679, %v677
  %v781 = vpack.c.bf16 %v682, %v682
  %v782 = vpack.c.bf16 %v724, %v722
  %v783 = vpack.c.bf16 %v727, %v727
  %v784 = vpack.c.bf16 %v769, %v767
  %v785 = vpack.c.bf16 %v772, %v772
  %v787 = vsel %vm393, %v780, 0
  %v790 = vsel %vm393, %v781, 0
  %v793 = vsel %vm393, %v782, 0
  %v796 = vsel %vm393, %v783, 0
  %798 = vmatpush.bf16.xpose.msra.mxu0 0
  %799 = vmatpush.bf16.xpose.msra.mxu0 0
  %800 = vmatpush.bf16.xpose.msra.mxu0 0
  %801 = vmatpush.bf16.xpose.msra.mxu0 0
  %802 = vmatpush.bf16.xpose.msra.mxu0 0
  %803 = vmatpush.bf16.xpose.msra.mxu0 0
  %804 = vmatpush.bf16.xpose.msra.mxu0 %v796
  %805 = vmatpush.bf16.xpose.msra.mxu0 %v793
  %806 = vmatmul.bf16.gmra.mxu0 %v787
  %v807 = vpop.f32.mrf.mxu0
  %v808 = vadd.f32 0.0, %v807
  %v809 = vpop.f32.mrf.mxu0
  %v810 = vadd.f32 0.0, %v809
  %811 = vmatmul.bf16.gmra.mxu0 %v790
  %v812 = vpop.f32.mrf.mxu0
  %v813 = vadd.f32 0.0, %v812
  %v814 = vpop.f32.mrf.mxu0
  %815 = vdwg.mxu0
  %v816 = vmul.f32 %v808, 0.25
  %v817 = vmul.f32 %v810, 0.25
  %v818 = vmul.f32 %v813, 0.25
  %v819 = vsel %vm427, %v816, -inf
  %820 = vmax.xlane.f32.xlu0 %v819
  %v821 = vpop.xlane.xlu0 %820
  %v822 = vsel %vm427, %v817, -inf
  %823 = vmax.xlane.f32.xlu0 %v822
  %v824 = vpop.xlane.xlu0 %823
  %v825 = vsel %vm434, %v818, -inf
  %826 = vmax.xlane.f32.xlu0 %v825
  %v827 = vpop.xlane.xlu0 %826
  %v828 = vsub.f32 %v816, %v821
  %v829 = vsub.f32 %v817, %v824
  %v830 = vsub.f32 %v818, %v827
  %v831 = vmul.f32 %v828, 1.442695
  %v832 = vpow.pop %v831
  %v833 = vmul.f32 %v829, 1.442695
  %v834 = vpow.pop %v833
  %v835 = vmul.f32 %v830, 1.442695
  %v836 = vpow.pop %v835
  %v837 = vsel %vm427, %v832, 0.0
  %838 = vadd.xlane.f32.xlu0 %v837
  %v839 = vpop.xlane.xlu0 %838
  %v840 = vsel %vm427, %v834, 0.0
  %841 = vadd.xlane.f32.xlu0 %v840
  %v842 = vpop.xlane.xlu0 %841
  %v843 = vsel %vm434, %v836, 0.0
  %844 = vadd.xlane.f32.xlu0 %v843
  %v845 = vpop.xlane.xlu0 %844
  %v846 = vrcp.pop %v839
  %v847 = vrcp.pop %v842
  %v848 = vrcp.pop %v845
  %v849 = vmul.f32 %v832, %v846
  %v850 = vmul.f32 %v834, %v847
  %v851 = vmul.f32 %v836, %v848
  %vm852 = vcmp.ge.f32.partialorder %v849, 0.1
  %vm853 = vcmp.ge.f32.partialorder %v850, 0.1
  %vm854 = vcmp.ge.f32.partialorder %v851, 0.1
  %v855 = vsel %vm852, %v849, 0.0
  %v856 = vsel %vm853, %v850, 0.0
  %v857 = vsel %vm854, %v851, 0.0
  %v858 = vpack.c.bf16 %v856, %v855
  %v859 = vpack.c.bf16 %v857, %v857
  %v861 = vsel %vm427, %v858, 0
  %v864 = vsel %vm427, %v859, 0
  %v867 = vsel %vm146, %v785, 0
  %869 = vmatpush.bf16.msra.mxu0 0
  %870 = vmatpush.bf16.msra.mxu0 0
  %871 = vmatpush.bf16.msra.mxu0 0
  %872 = vmatpush.bf16.msra.mxu0 0
  %873 = vmatpush.bf16.msra.mxu0 0
  %874 = vmatpush.bf16.msra.mxu0 0
  %875 = vmatpush.bf16.msra.mxu0 %v867
  %876 = vmatpush.bf16.msra.mxu0 %v784
  %877 = vmatmul.bf16.gmra.mxu0 %v861
  %v878 = vpop.f32.mrf.mxu0
  %v879 = vadd.f32 0.0, %v878
  %v880 = vpop.f32.mrf.mxu0
  %v881 = vadd.f32 0.0, %v880
  %882 = vmatmul.bf16.gmra.mxu0 %v864
  %v883 = vpop.f32.mrf.mxu0
  %v884 = vadd.f32 0.0, %v883
  %v885 = vpop.f32.mrf.mxu0
  %886 = vdwg.mxu0
  %v887 = vadd.f32 %v497, %v849
  %v888 = vadd.f32 %v498, %v850
  %v889 = vadd.f32 %v499, %v851
  %v890 = vsel %vm852, 1, 0
  %v891 = vsel %vm853, 1, 0
  %v892 = vsel %vm854, 1, 0
  %v893 = vcvt.s32.f32 %v890
  %v894 = vcvt.s32.f32 %v891
  %v895 = vcvt.s32.f32 %v892
  %v896 = vadd.f32 %v506, %v893
  %v897 = vadd.f32 %v507, %v894
  %v898 = vadd.f32 %v508, %v895
  %v899 = vpack.c.bf16 %v684, %v682
  %v900 = vpack.c.bf16 %v687, %v687
  %v901 = vpack.c.bf16 %v729, %v727
  %v902 = vpack.c.bf16 %v732, %v732
  %v903 = vpack.c.bf16 %v774, %v772
  %v904 = vpack.c.bf16 %v777, %v777
  %v907 = vrot.slane %v899, 1
  %v908 = vrot.slane %v900, 1
  %v909 = vsel %vm517, %v907, %v908
  %v912 = vrot.slane %v901, 1
  %v913 = vrot.slane %v902, 1
  %v914 = vsel %vm517, %v912, %v913
  %v916 = vsel %vm393, %v909, 0
  %v919 = vsel %vm393, %v908, 0
  %v922 = vsel %vm393, %v914, 0
  %v925 = vsel %vm393, %v913, 0
  %927 = vmatpush.bf16.xpose.msra.mxu0 0
  %928 = vmatpush.bf16.xpose.msra.mxu0 0
  %929 = vmatpush.bf16.xpose.msra.mxu0 0
  %930 = vmatpush.bf16.xpose.msra.mxu0 0
  %931 = vmatpush.bf16.xpose.msra.mxu0 0
  %932 = vmatpush.bf16.xpose.msra.mxu0 0
  %933 = vmatpush.bf16.xpose.msra.mxu0 %v925
  %934 = vmatpush.bf16.xpose.msra.mxu0 %v922
  %935 = vmatmul.bf16.gmra.mxu0 %v916
  %v936 = vpop.f32.mrf.mxu0
  %v937 = vadd.f32 0.0, %v936
  %v938 = vpop.f32.mrf.mxu0
  %v939 = vadd.f32 0.0, %v938
  %940 = vmatmul.bf16.gmra.mxu0 %v919
  %v941 = vpop.f32.mrf.mxu0
  %v942 = vadd.f32 0.0, %v941
  %v943 = vpop.f32.mrf.mxu0
  %944 = vdwg.mxu0
  %v945 = vmul.f32 %v937, 0.25
  %v946 = vmul.f32 %v939, 0.25
  %v947 = vmul.f32 %v942, 0.25
  %v948 = vsel %vm427, %v945, -inf
  %949 = vmax.xlane.f32.xlu0 %v948
  %v950 = vpop.xlane.xlu0 %949
  %v951 = vsel %vm427, %v946, -inf
  %952 = vmax.xlane.f32.xlu0 %v951
  %v953 = vpop.xlane.xlu0 %952
  %v954 = vsel %vm434, %v947, -inf
  %955 = vmax.xlane.f32.xlu0 %v954
  %v956 = vpop.xlane.xlu0 %955
  %v957 = vsub.f32 %v945, %v950
  %v958 = vsub.f32 %v946, %v953
  %v959 = vsub.f32 %v947, %v956
  %v960 = vmul.f32 %v957, 1.442695
  %v961 = vpow.pop %v960
  %v962 = vmul.f32 %v958, 1.442695
  %v963 = vpow.pop %v962
  %v964 = vmul.f32 %v959, 1.442695
  %v965 = vpow.pop %v964
  %v966 = vsel %vm427, %v961, 0.0
  %967 = vadd.xlane.f32.xlu0 %v966
  %v968 = vpop.xlane.xlu0 %967
  %v969 = vsel %vm427, %v963, 0.0
  %970 = vadd.xlane.f32.xlu0 %v969
  %v971 = vpop.xlane.xlu0 %970
  %v972 = vsel %vm434, %v965, 0.0
  %973 = vadd.xlane.f32.xlu0 %v972
  %v974 = vpop.xlane.xlu0 %973
  %v975 = vrcp.pop %v968
  %v976 = vrcp.pop %v971
  %v977 = vrcp.pop %v974
  %v978 = vmul.f32 %v961, %v975
  %v979 = vmul.f32 %v963, %v976
  %v980 = vmul.f32 %v965, %v977
  %vm981 = vcmp.ge.f32.partialorder %v978, 0.1
  %vm982 = vcmp.ge.f32.partialorder %v979, 0.1
  %vm983 = vcmp.ge.f32.partialorder %v980, 0.1
  %v984 = vsel %vm981, %v978, 0.0
  %v985 = vsel %vm982, %v979, 0.0
  %v986 = vsel %vm983, %v980, 0.0
  %v987 = vpack.c.bf16 %v985, %v984
  %v988 = vpack.c.bf16 %v986, %v986
  %v991 = vrot.slane %v903, 1
  %v992 = vrot.slane %v904, 1
  %v993 = vsel %vm517, %v991, %v992
  %v996 = vsel %vm427, %v987, 0
  %v999 = vsel %vm427, %v988, 0
  %v1002 = vsel %vm146, %v992, 0
  %1004 = vmatpush.bf16.msra.mxu0 0
  %1005 = vmatpush.bf16.msra.mxu0 0
  %1006 = vmatpush.bf16.msra.mxu0 0
  %1007 = vmatpush.bf16.msra.mxu0 0
  %1008 = vmatpush.bf16.msra.mxu0 0
  %1009 = vmatpush.bf16.msra.mxu0 0
  %1010 = vmatpush.bf16.msra.mxu0 %v1002
  %1011 = vmatpush.bf16.msra.mxu0 %v993
  %1012 = vmatmul.bf16.gmra.mxu0 %v996
  %v1013 = vpop.f32.mrf.mxu0
  %v1014 = vadd.f32 0.0, %v1013
  %v1015 = vpop.f32.mrf.mxu0
  %v1016 = vadd.f32 0.0, %v1015
  %1017 = vmatmul.bf16.gmra.mxu0 %v999
  %v1018 = vpop.f32.mrf.mxu0
  %v1019 = vadd.f32 0.0, %v1018
  %v1020 = vpop.f32.mrf.mxu0
  %1021 = vdwg.mxu0
  %v1022 = vadd.f32 %v633, %v978
  %v1023 = vadd.f32 %v634, %v979
  %v1024 = vadd.f32 %v635, %v980
  %v1025 = vsel %vm981, 1, 0
  %v1026 = vsel %vm982, 1, 0
  %v1027 = vsel %vm983, 1, 0
  %v1028 = vcvt.s32.f32 %v1025
  %v1029 = vcvt.s32.f32 %v1026
  %v1030 = vcvt.s32.f32 %v1027
  %v1031 = vadd.f32 %v642, %v1028
  %v1032 = vadd.f32 %v643, %v1029
  %v1033 = vadd.f32 %v644, %v1030
  %1037 = vrot.lane.b32.xlu0 %v879, 16
  %v1038 = vpop.permute.xlu0 %1037
  %1039 = vrot.lane.b32.xlu0 %v881, 16
  %v1040 = vpop.permute.xlu0 %1039
  %1041 = vrot.lane.b32.xlu0 %v884, 16
  %v1042 = vpop.permute.xlu0 %1041
  %v1046 = vsel %vm393, %v489, %v1038
  %v1047 = vsel %vm393, %v491, %v1040
  %v1048 = vsel %vm393, %v494, %v1042
  %1052 = vrot.lane.b32.xlu0 %v1014, 16
  %v1053 = vpop.permute.xlu0 %1052
  %1054 = vrot.lane.b32.xlu0 %v1016, 16
  %v1055 = vpop.permute.xlu0 %1054
  %1056 = vrot.lane.b32.xlu0 %v1019, 16
  %v1057 = vpop.permute.xlu0 %1056
  %v1061 = vsel %vm393, %v625, %v1053
  %v1062 = vsel %vm393, %v627, %v1055
  %v1063 = vsel %vm393, %v630, %v1057
  %v1067 = vrot.slane %v1061, 6
  %v1068 = vrot.slane %v1062, 6
  %v1069 = vsel %vm147, %v1067, %v1068
  %v1070 = vrot.slane %v1063, 6
  %v1071 = vsel %vm147, %v1068, %v1070
  %v1075 = vsel %vm147, %v1048, %v1067
  %v1076 = vpack.c.bf16 %v1047, %v1046
  %v1077 = vpack.c.bf16 %v1069, %v1075
  %v1078 = vpack.c.bf16 %v1071, %v1071
  %v1079 = vld [vmem:[%s29] sm:$0xf]
  %v1080 = vld [vmem:[%s29 + $0x4] sm:$0xf]
  %v1081 = vld [vmem:[%s29 + $0x8] sm:$0xf]
  %v1082 = vld [vmem:[%s29 + $0xc] sm:$0xf]
  %v1083 = vld [vmem:[%s31] sm:$0x1]
  %v1085 = vperm.slane %v1083, 0
  %v1091 = vunpack.c.l.b16 %v1079
  %v1092 = vunpack.c.l.b16 %v1080
  %v1093 = vunpack.c.l.b16 %v1081
  %v1094 = vunpack.c.l.b16 %v1082
  %v1095 = vpack.c.b16 %v1092, %v1091
  %v1096 = vpack.c.b16 %v1094, %v1093
  %v1100 = vsel %vm268, %v1076, 0
  %v1103 = vsel %vm268, %v1077, 0
  %v1106 = vsel %vm268, %v1078, 0
  %1108 = vmatpush.bf16.msra.mxu0 0
  %1109 = vmatpush.bf16.msra.mxu0 0
  %1110 = vmatpush.bf16.msra.mxu0 0
  %1111 = vmatpush.bf16.msra.mxu0 0
  %1112 = vmatpush.bf16.msra.mxu0 0
  %1113 = vmatpush.bf16.msra.mxu0 0
  %1114 = vmatpush.bf16.msra.mxu0 %v1096
  %1115 = vmatpush.bf16.msra.mxu0 %v1095
  %1116 = vmatmul.bf16.gmra.mxu0 %v1100
  %v1117 = vpop.f32.mrf.mxu0
  %v1118 = vadd.f32 %v1085, %v1117
  %v1119 = vpop.f32.mrf.mxu0
  %v1120 = vadd.f32 %v1085, %v1119
  %1121 = vmatmul.bf16.gmra.mxu0 %v1103
  %v1122 = vpop.f32.mrf.mxu0
  %v1123 = vadd.f32 %v1085, %v1122
  %v1124 = vpop.f32.mrf.mxu0
  %v1125 = vadd.f32 %v1085, %v1124
  %1126 = vmatmul.bf16.gmra.mxu0 %v1106
  %v1127 = vpop.f32.mrf.mxu0
  %v1128 = vadd.f32 %v1085, %v1127
  %v1129 = vpop.f32.mrf.mxu0
  %1130 = vdwg.mxu0
  %v1131 = vadd.f32 %v208, %v1118
  %v1132 = vadd.f32 %v209, %v1120
  %v1133 = vadd.f32 %v229, %v1123
  %v1134 = vadd.f32 %v223, %v1125
  %v1135 = vadd.f32 %v225, %v1128
  %v1136 = vld [vmem:[%s33] sm:$0x1]
  %v1137 = vld [vmem:[%s35] sm:$0x1]
  %v1138 = vsel %vm268, %v1131, 0.0
  %1139 = vadd.xlane.f32.xlu0 %v1138
  %v1140 = vpop.xlane.xlu0 %1139
  %v1141 = vsel %vm268, %v1132, 0.0
  %1142 = vadd.xlane.f32.xlu0 %v1141
  %v1143 = vpop.xlane.xlu0 %1142
  %v1144 = vsel %vm268, %v1133, 0.0
  %1145 = vadd.xlane.f32.xlu0 %v1144
  %v1146 = vpop.xlane.xlu0 %1145
  %v1147 = vsel %vm268, %v1134, 0.0
  %1148 = vadd.xlane.f32.xlu0 %v1147
  %v1149 = vpop.xlane.xlu0 %1148
  %vm1150 = vcmask 257024
  %v1151 = vsel %vm1150, %v1135, 0.0
  %1152 = vadd.xlane.f32.xlu0 %v1151
  %v1153 = vpop.xlane.xlu0 %1152
  %v1154 = vrcp.pop 32.0
  %v1155 = vmul.f32 32.0, %v1154
  %v1156 = vsub.f32 1.0, %v1155
  %v1157 = vmul.f32 %v1154, %v1156
  %v1158 = vadd.f32 %v1154, %v1157
  %vm1159 = vweird.f32 %v1154
  %v1160 = vsel %vm1159, %v1154, %v1158
  %v1161 = vmul.f32 %v1140, %v1160
  %v1162 = vmul.f32 %v1143, %v1160
  %v1163 = vmul.f32 %v1146, %v1160
  %v1164 = vmul.f32 %v1149, %v1160
  %v1165 = vmul.f32 %v1153, %v1160
  %v1166 = vsub.f32 %v1131, %v1161
  %v1167 = vsub.f32 %v1132, %v1162
  %v1168 = vsub.f32 %v1133, %v1163
  %v1169 = vsub.f32 %v1134, %v1164
  %v1170 = vsub.f32 %v1135, %v1165
  %v1171 = vmul.f32 %v1166, %v1166
  %v1172 = vmul.f32 %v1167, %v1167
  %v1173 = vmul.f32 %v1168, %v1168
  %v1174 = vmul.f32 %v1169, %v1169
  %v1175 = vmul.f32 %v1170, %v1170
  %v1176 = vsel %vm268, %v1171, 0.0
  %1177 = vadd.xlane.f32.xlu0 %v1176
  %v1178 = vpop.xlane.xlu0 %1177
  %v1179 = vsel %vm268, %v1172, 0.0
  %1180 = vadd.xlane.f32.xlu0 %v1179
  %v1181 = vpop.xlane.xlu0 %1180
  %v1182 = vsel %vm268, %v1173, 0.0
  %1183 = vadd.xlane.f32.xlu0 %v1182
  %v1184 = vpop.xlane.xlu0 %1183
  %v1185 = vsel %vm268, %v1174, 0.0
  %1186 = vadd.xlane.f32.xlu0 %v1185
  %v1187 = vpop.xlane.xlu0 %1186
  %v1188 = vsel %vm1150, %v1175, 0.0
  %1189 = vadd.xlane.f32.xlu0 %v1188
  %v1190 = vpop.xlane.xlu0 %1189
  %v1191 = vmul.f32 %v1178, %v1160
  %v1192 = vmul.f32 %v1181, %v1160
  %v1193 = vmul.f32 %v1184, %v1160
  %v1194 = vmul.f32 %v1187, %v1160
  %v1195 = vmul.f32 %v1190, %v1160
  %v1196 = vadd.f32 %v1191, 1e-05
  %v1197 = vadd.f32 %v1192, 1e-05
  %v1198 = vadd.f32 %v1193, 1e-05
  %v1199 = vadd.f32 %v1194, 1e-05
  %v1200 = vadd.f32 %v1195, 1e-05
  %v1201 = vrsqrt.pop %v1196
  %v1202 = vmul.f32 %v1201, %v1196
  %v1203 = vmul.f32 %v1202, %v1201
  %v1204 = vmul.f32 0.5, %v1203
  %v1205 = vsub.f32 1.5, %v1204
  %v1206 = vmul.f32 %v1201, %v1205
  %vm1207 = vweird.f32 %v1196
  %vm1208 = vweird.f32 %v1201
  %vm1209 = vmor %vm1207, %vm1208
  %v1210 = vsel %vm1209, %v1201, %v1206
  %v1211 = vrsqrt.pop %v1197
  %v1212 = vmul.f32 %v1211, %v1197
  %v1213 = vmul.f32 %v1212, %v1211
  %v1214 = vmul.f32 0.5, %v1213
  %v1215 = vsub.f32 1.5, %v1214
  %v1216 = vmul.f32 %v1211, %v1215
  %vm1217 = vweird.f32 %v1197
  %vm1218 = vweird.f32 %v1211
  %vm1219 = vmor %vm1217, %vm1218
  %v1220 = vsel %vm1219, %v1211, %v1216
  %v1221 = vrsqrt.pop %v1198
  %v1222 = vmul.f32 %v1221, %v1198
  %v1223 = vmul.f32 %v1222, %v1221
  %v1224 = vmul.f32 0.5, %v1223
  %v1225 = vsub.f32 1.5, %v1224
  %v1226 = vmul.f32 %v1221, %v1225
  %vm1227 = vweird.f32 %v1198
  %vm1228 = vweird.f32 %v1221
  %vm1229 = vmor %vm1227, %vm1228
  %v1230 = vsel %vm1229, %v1221, %v1226
  %v1231 = vrsqrt.pop %v1199
  %v1232 = vmul.f32 %v1231, %v1199
  %v1233 = vmul.f32 %v1232, %v1231
  %v1234 = vmul.f32 0.5, %v1233
  %v1235 = vsub.f32 1.5, %v1234
  %v1236 = vmul.f32 %v1231, %v1235
  %vm1237 = vweird.f32 %v1199
  %vm1238 = vweird.f32 %v1231
  %vm1239 = vmor %vm1237, %vm1238
  %v1240 = vsel %vm1239, %v1231, %v1236
  %v1241 = vrsqrt.pop %v1200
  %v1242 = vmul.f32 %v1241, %v1200
  %v1243 = vmul.f32 %v1242, %v1241
  %v1244 = vmul.f32 0.5, %v1243
  %v1245 = vsub.f32 1.5, %v1244
  %v1246 = vmul.f32 %v1241, %v1245
  %vm1247 = vweird.f32 %v1200
  %vm1248 = vweird.f32 %v1241
  %vm1249 = vmor %vm1247, %vm1248
  %v1250 = vsel %vm1249, %v1241, %v1246
  %v1251 = vmul.f32 %v1166, %v1210
  %v1252 = vmul.f32 %v1167, %v1220
  %v1253 = vmul.f32 %v1168, %v1230
  %v1254 = vmul.f32 %v1169, %v1240
  %v1255 = vmul.f32 %v1170, %v1250
  %v1257 = vperm.slane %v1136, 0
  %v1259 = vmul.f32 %v1251, %v1257
  %v1260 = vmul.f32 %v1252, %v1257
  %v1261 = vmul.f32 %v1253, %v1257
  %v1262 = vmul.f32 %v1254, %v1257
  %v1263 = vmul.f32 %v1255, %v1257
  %v1265 = vperm.slane %v1137, 0
  %v1267 = vadd.f32 %v1259, %v1265
  %v1268 = vadd.f32 %v1260, %v1265
  %v1269 = vadd.f32 %v1261, %v1265
  %v1270 = vadd.f32 %v1262, %v1265
  %v1271 = vadd.f32 %v1263, %v1265
  %v1272 = vpack.c.bf16 %v1268, %v1267
  %v1273 = vpack.c.bf16 %v1270, %v1269
  %v1274 = vpack.c.bf16 %v1271, %v1271
  %v1275 = vld [vmem:[%s37] sm:$0xf]
  %v1276 = vld [vmem:[%s37 + $0x4] sm:$0xf]
  %v1277 = vld [vmem:[%s37 + $0x8] sm:$0xf]
  %v1278 = vld [vmem:[%s37 + $0xc] sm:$0xf]
  %v1279 = vld [vmem:[%s39] sm:$0x1]
  %v1281 = vperm.slane %v1279, 0
  %v1287 = vunpack.c.l.b16 %v1275
  %v1288 = vunpack.c.l.b16 %v1276
  %v1289 = vunpack.c.l.b16 %v1277
  %v1290 = vunpack.c.l.b16 %v1278
  %v1291 = vpack.c.b16 %v1288, %v1287
  %v1292 = vpack.c.b16 %v1290, %v1289
  %v1296 = vsel %vm268, %v1272, 0
  %v1299 = vsel %vm268, %v1273, 0
  %v1302 = vsel %vm268, %v1274, 0
  %1304 = vmatpush.bf16.msra.mxu0 0
  %1305 = vmatpush.bf16.msra.mxu0 0
  %1306 = vmatpush.bf16.msra.mxu0 0
  %1307 = vmatpush.bf16.msra.mxu0 0
  %1308 = vmatpush.bf16.msra.mxu0 0
  %1309 = vmatpush.bf16.msra.mxu0 0
  %1310 = vmatpush.bf16.msra.mxu0 %v1292
  %1311 = vmatpush.bf16.msra.mxu0 %v1291
  %1312 = vmatmul.bf16.gmra.mxu0 %v1296
  %v1313 = vpop.f32.mrf.mxu0
  %v1314 = vadd.f32 %v1281, %v1313
  %v1315 = vpop.f32.mrf.mxu0
  %v1316 = vadd.f32 %v1281, %v1315
  %1317 = vmatmul.bf16.gmra.mxu0 %v1299
  %v1318 = vpop.f32.mrf.mxu0
  %v1319 = vadd.f32 %v1281, %v1318
  %v1320 = vpop.f32.mrf.mxu0
  %v1321 = vadd.f32 %v1281, %v1320
  %1322 = vmatmul.bf16.gmra.mxu0 %v1302
  %v1323 = vpop.f32.mrf.mxu0
  %v1324 = vadd.f32 %v1281, %v1323
  %v1325 = vpop.f32.mrf.mxu0
  %1326 = vdwg.mxu0
  %v1327 = vmax.f32 %v1314, 0.0
  %v1328 = vmax.f32 %v1316, 0.0
  %v1329 = vmax.f32 %v1319, 0.0
  %v1330 = vmax.f32 %v1321, 0.0
  %v1331 = vmax.f32 %v1324, 0.0
  %v1332 = vpack.c.bf16 %v1328, %v1327
  %v1333 = vpack.c.bf16 %v1330, %v1329
  %v1334 = vpack.c.bf16 %v1331, %v1331
  %v1335 = vld [vmem:[%s41] sm:$0xf]
  %v1336 = vld [vmem:[%s41 + $0x4] sm:$0xf]
  %v1337 = vld [vmem:[%s41 + $0x8] sm:$0xf]
  %v1338 = vld [vmem:[%s41 + $0xc] sm:$0xf]
  %v1339 = vld [vmem:[%s41 + $0x10] sm:$0xf]
  %v1340 = vld [vmem:[%s41 + $0x14] sm:$0xf]
  %v1341 = vld [vmem:[%s41 + $0x18] sm:$0xf]
  %v1342 = vld [vmem:[%s41 + $0x1c] sm:$0xf]
  %v1343 = vld [vmem:[%s43] sm:$0x1]
  %v1345 = vperm.slane %v1343, 0
  %v1355 = vunpack.c.l.b16 %v1335
  %v1356 = vunpack.c.l.b16 %v1336
  %v1357 = vunpack.c.l.b16 %v1337
  %v1358 = vunpack.c.l.b16 %v1338
  %v1359 = vunpack.c.l.b16 %v1339
  %v1360 = vunpack.c.l.b16 %v1340
  %v1361 = vunpack.c.l.b16 %v1341
  %v1362 = vunpack.c.l.b16 %v1342
  %v1363 = vpack.c.b16 %v1356, %v1355
  %v1364 = vpack.c.b16 %v1358, %v1357
  %v1365 = vpack.c.b16 %v1360, %v1359
  %v1366 = vpack.c.b16 %v1362, %v1361
  %vm1371 = vcmask 523264
  %v1373 = vsel %vm1371, %v1332, 0
  %v1376 = vsel %vm1371, %v1333, 0
  %v1379 = vsel %vm1371, %v1334, 0
  %1381 = vmatpush.bf16.msra.mxu0 0
  %1382 = vmatpush.bf16.msra.mxu0 0
  %1383 = vmatpush.bf16.msra.mxu0 0
  %1384 = vmatpush.bf16.msra.mxu0 0
  %1385 = vmatpush.bf16.msra.mxu0 %v1366
  %1386 = vmatpush.bf16.msra.mxu0 %v1365
  %1387 = vmatpush.bf16.msra.mxu0 %v1364
  %1388 = vmatpush.bf16.msra.mxu0 %v1363
  %1389 = vmatmul.bf16.gmra.mxu0 %v1373
  %v1390 = vpop.f32.mrf.mxu0
  %v1391 = vadd.f32 %v1345, %v1390
  %v1392 = vpop.f32.mrf.mxu0
  %v1393 = vadd.f32 %v1345, %v1392
  %1394 = vmatmul.bf16.gmra.mxu0 %v1376
  %v1395 = vpop.f32.mrf.mxu0
  %v1396 = vadd.f32 %v1345, %v1395
  %v1397 = vpop.f32.mrf.mxu0
  %v1398 = vadd.f32 %v1345, %v1397
  %1399 = vmatmul.bf16.gmra.mxu0 %v1379
  %v1400 = vpop.f32.mrf.mxu0
  %v1401 = vadd.f32 %v1345, %v1400
  %v1402 = vpop.f32.mrf.mxu0
  %1403 = vdwg.mxu0
  %v1404 = vadd.f32 %v1267, %v1391
  %v1405 = vadd.f32 %v1268, %v1393
  %v1406 = vadd.f32 %v1269, %v1396
  %v1407 = vadd.f32 %v1270, %v1398
  %v1408 = vadd.f32 %v1271, %v1401
  %v1409 = vld [vmem:[%s45] sm:$0x1]
  %v1410 = vld [vmem:[%s47] sm:$0x1]
  %v1411 = vsel %vm268, %v1404, 0.0
  %1412 = vadd.xlane.f32.xlu0 %v1411
  %v1413 = vpop.xlane.xlu0 %1412
  %v1414 = vsel %vm268, %v1405, 0.0
  %1415 = vadd.xlane.f32.xlu0 %v1414
  %v1416 = vpop.xlane.xlu0 %1415
  %v1417 = vsel %vm268, %v1406, 0.0
  %1418 = vadd.xlane.f32.xlu0 %v1417
  %v1419 = vpop.xlane.xlu0 %1418
  %v1420 = vsel %vm268, %v1407, 0.0
  %1421 = vadd.xlane.f32.xlu0 %v1420
  %v1422 = vpop.xlane.xlu0 %1421
  %v1423 = vsel %vm1150, %v1408, 0.0
  %1424 = vadd.xlane.f32.xlu0 %v1423
  %v1425 = vpop.xlane.xlu0 %1424
  %v1426 = vmul.f32 %v1413, %v1160
  %v1427 = vmul.f32 %v1416, %v1160
  %v1428 = vmul.f32 %v1419, %v1160
  %v1429 = vmul.f32 %v1422, %v1160
  %v1430 = vmul.f32 %v1425, %v1160
  %v1431 = vsub.f32 %v1404, %v1426
  %v1432 = vsub.f32 %v1405, %v1427
  %v1433 = vsub.f32 %v1406, %v1428
  %v1434 = vsub.f32 %v1407, %v1429
  %v1435 = vsub.f32 %v1408, %v1430
  %v1436 = vmul.f32 %v1431, %v1431
  %v1437 = vmul.f32 %v1432, %v1432
  %v1438 = vmul.f32 %v1433, %v1433
  %v1439 = vmul.f32 %v1434, %v1434
  %v1440 = vmul.f32 %v1435, %v1435
  %v1441 = vsel %vm268, %v1436, 0.0
  %1442 = vadd.xlane.f32.xlu0 %v1441
  %v1443 = vpop.xlane.xlu0 %1442
  %v1444 = vsel %vm268, %v1437, 0.0
  %1445 = vadd.xlane.f32.xlu0 %v1444
  %v1446 = vpop.xlane.xlu0 %1445
  %v1447 = vsel %vm268, %v1438, 0.0
  %1448 = vadd.xlane.f32.xlu0 %v1447
  %v1449 = vpop.xlane.xlu0 %1448
  %v1450 = vsel %vm268, %v1439, 0.0
  %1451 = vadd.xlane.f32.xlu0 %v1450
  %v1452 = vpop.xlane.xlu0 %1451
  %v1453 = vsel %vm1150, %v1440, 0.0
  %1454 = vadd.xlane.f32.xlu0 %v1453
  %v1455 = vpop.xlane.xlu0 %1454
  %v1456 = vmul.f32 %v1443, %v1160
  %v1457 = vmul.f32 %v1446, %v1160
  %v1458 = vmul.f32 %v1449, %v1160
  %v1459 = vmul.f32 %v1452, %v1160
  %v1460 = vmul.f32 %v1455, %v1160
  %v1461 = vadd.f32 %v1456, 1e-05
  %v1462 = vadd.f32 %v1457, 1e-05
  %v1463 = vadd.f32 %v1458, 1e-05
  %v1464 = vadd.f32 %v1459, 1e-05
  %v1465 = vadd.f32 %v1460, 1e-05
  %v1466 = vrsqrt.pop %v1461
  %v1467 = vmul.f32 %v1466, %v1461
  %v1468 = vmul.f32 %v1467, %v1466
  %v1469 = vmul.f32 0.5, %v1468
  %v1470 = vsub.f32 1.5, %v1469
  %v1471 = vmul.f32 %v1466, %v1470
  %vm1472 = vweird.f32 %v1461
  %vm1473 = vweird.f32 %v1466
  %vm1474 = vmor %vm1472, %vm1473
  %v1475 = vsel %vm1474, %v1466, %v1471
  %v1476 = vrsqrt.pop %v1462
  %v1477 = vmul.f32 %v1476, %v1462
  %v1478 = vmul.f32 %v1477, %v1476
  %v1479 = vmul.f32 0.5, %v1478
  %v1480 = vsub.f32 1.5, %v1479
  %v1481 = vmul.f32 %v1476, %v1480
  %vm1482 = vweird.f32 %v1462
  %vm1483 = vweird.f32 %v1476
  %vm1484 = vmor %vm1482, %vm1483
  %v1485 = vsel %vm1484, %v1476, %v1481
  %v1486 = vrsqrt.pop %v1463
  %v1487 = vmul.f32 %v1486, %v1463
  %v1488 = vmul.f32 %v1487, %v1486
  %v1489 = vmul.f32 0.5, %v1488
  %v1490 = vsub.f32 1.5, %v1489
  %v1491 = vmul.f32 %v1486, %v1490
  %vm1492 = vweird.f32 %v1463
  %vm1493 = vweird.f32 %v1486
  %vm1494 = vmor %vm1492, %vm1493
  %v1495 = vsel %vm1494, %v1486, %v1491
  %v1496 = vrsqrt.pop %v1464
  %v1497 = vmul.f32 %v1496, %v1464
  %v1498 = vmul.f32 %v1497, %v1496
  %v1499 = vmul.f32 0.5, %v1498
  %v1500 = vsub.f32 1.5, %v1499
  %v1501 = vmul.f32 %v1496, %v1500
  %vm1502 = vweird.f32 %v1464
  %vm1503 = vweird.f32 %v1496
  %vm1504 = vmor %vm1502, %vm1503
  %v1505 = vsel %vm1504, %v1496, %v1501
  %v1506 = vrsqrt.pop %v1465
  %v1507 = vmul.f32 %v1506, %v1465
  %v1508 = vmul.f32 %v1507, %v1506
  %v1509 = vmul.f32 0.5, %v1508
  %v1510 = vsub.f32 1.5, %v1509
  %v1511 = vmul.f32 %v1506, %v1510
  %vm1512 = vweird.f32 %v1465
  %vm1513 = vweird.f32 %v1506
  %vm1514 = vmor %vm1512, %vm1513
  %v1515 = vsel %vm1514, %v1506, %v1511
  %v1516 = vmul.f32 %v1431, %v1475
  %v1517 = vmul.f32 %v1432, %v1485
  %v1518 = vmul.f32 %v1433, %v1495
  %v1519 = vmul.f32 %v1434, %v1505
  %v1520 = vmul.f32 %v1435, %v1515
  %v1522 = vperm.slane %v1409, 0
  %v1524 = vmul.f32 %v1516, %v1522
  %v1525 = vmul.f32 %v1517, %v1522
  %v1526 = vmul.f32 %v1518, %v1522
  %v1527 = vmul.f32 %v1519, %v1522
  %v1528 = vmul.f32 %v1520, %v1522
  %v1530 = vperm.slane %v1410, 0
  %v1532 = vadd.f32 %v1524, %v1530
  %v1533 = vadd.f32 %v1525, %v1530
  %v1534 = vadd.f32 %v1526, %v1530
  %v1535 = vadd.f32 %v1527, %v1530
  %v1536 = vadd.f32 %v1528, %v1530
  %v1538 = vsel %vm427, %v896, 0
  %v1541 = vsel %vm427, %v897, 0
  %v1544 = vsel %vm427, %v898, 0
  %v1547 = vsel %vm147, %v244, 0
  %1549 = vmatpush.msra.mxu0 0.0
  %1550 = vmatpush.msra.mxu0 0.0
  %1551 = vmatpush.msra.mxu0 0.0
  %1552 = vmatpush.msra.mxu0 0.0
  %1553 = vmatpush.msra.mxu0 0.0
  %1554 = vmatpush.msra.mxu0 0.0
  %1555 = vmatpush.msra.mxu0 0.0
  %1556 = vmatpush.msra.mxu0 0.0
  %1557 = vmatpush.msra.mxu0 0.0
  %1558 = vmatpush.msra.mxu0 0.0
  %1559 = vmatpush.msra.mxu0 0.0
  %1560 = vmatpush.msra.mxu0 0.0
  %1561 = vmatpush.msra.mxu0 0.0
  %1562 = vmatpush.msra.mxu0 %v1547
  %1563 = vmatpush.msra.mxu0 %v243
  %1564 = vmatpush.msra.mxu0 %v242
  %1565 = vmatmul.f32.gmra.mxu0 %v1538
  %v1566 = vpop.f32.mrf.mxu0
  %v1567 = vadd.f32 0.0, %v1566
  %1568 = vmatmul.f32.gmra.mxu0 %v1541
  %v1569 = vpop.f32.mrf.mxu0
  %v1570 = vadd.f32 0.0, %v1569
  %1571 = vmatmul.f32.gmra.mxu0 %v1544
  %v1572 = vpop.f32.mrf.mxu0
  %v1573 = vadd.f32 0.0, %v1572
  %1574 = vdwg.mxu0
  %v1575 = vadd.f32 %v242, %v1567
  %v1576 = vadd.f32 %v243, %v1570
  %v1577 = vadd.f32 %v244, %v1573
  %vm1578 = vcmp.ne.f32.partialorder %v1575, 0.0
  %vm1579 = vcmp.ne.f32.partialorder %v1576, 0.0
  %vm1580 = vcmp.ne.f32.partialorder %v1577, 0.0
  %v1581 = vsel %vm1578, 1.0, %v1575
  %v1582 = vsel %vm1579, 1.0, %v1576
  %v1583 = vsel %vm1580, 1.0, %v1577
  %v1585 = vsel %vm427, %v1031, 0
  %v1588 = vsel %vm427, %v1032, 0
  %v1591 = vsel %vm427, %v1033, 0
  %1593 = vmatpush.msra.mxu0 0.0
  %1594 = vmatpush.msra.mxu0 0.0
  %1595 = vmatpush.msra.mxu0 0.0
  %1596 = vmatpush.msra.mxu0 0.0
  %1597 = vmatpush.msra.mxu0 0.0
  %1598 = vmatpush.msra.mxu0 0.0
  %1599 = vmatpush.msra.mxu0 0.0
  %1600 = vmatpush.msra.mxu0 0.0
  %1601 = vmatpush.msra.mxu0 0.0
  %1602 = vmatpush.msra.mxu0 0.0
  %1603 = vmatpush.msra.mxu0 0.0
  %1604 = vmatpush.msra.mxu0 0.0
  %1605 = vmatpush.msra.mxu0 0.0
  %1606 = vmatpush.msra.mxu0 %v1547
  %1607 = vmatpush.msra.mxu0 %v243
  %1608 = vmatpush.msra.mxu0 %v242
  %1609 = vmatmul.f32.gmra.mxu0 %v1585
  %v1610 = vpop.f32.mrf.mxu0
  %v1611 = vadd.f32 0.0, %v1610
  %1612 = vmatmul.f32.gmra.mxu0 %v1588
  %v1613 = vpop.f32.mrf.mxu0
  %v1614 = vadd.f32 0.0, %v1613
  %1615 = vmatmul.f32.gmra.mxu0 %v1591
  %v1616 = vpop.f32.mrf.mxu0
  %v1617 = vadd.f32 0.0, %v1616
  %1618 = vdwg.mxu0
  %v1619 = vadd.f32 %v242, %v1611
  %v1620 = vadd.f32 %v243, %v1614
  %v1621 = vadd.f32 %v244, %v1617
  %vm1622 = vcmp.ne.f32.partialorder %v1619, 0.0
  %vm1623 = vcmp.ne.f32.partialorder %v1620, 0.0
  %vm1624 = vcmp.ne.f32.partialorder %v1621, 0.0
  %v1625 = vsel %vm1622, 1.0, %v1619
  %v1626 = vsel %vm1623, 1.0, %v1620
  %v1627 = vsel %vm1624, 1.0, %v1621
  %v1628 = vpack.c.bf16 %v1533, %v1532
  %v1629 = vpack.c.bf16 %v1535, %v1534
  %v1630 = vpack.c.bf16 %v1536, %v1536
  %s1631 = scalar_lea.vmem %s17, 32
  %v1632 = vld [vmem:[%s1631] sm:$0xf]
  %v1633 = vld [vmem:[%s1631 + $0x4] sm:$0xf]
  %v1634 = vld [vmem:[%s1631 + $0x8] sm:$0xf]
  %v1635 = vld [vmem:[%s1631 + $0xc] sm:$0xf]
  %s1636 = scalar_lea.vmem %s19, 2
  %v1637 = vld [vmem:[%s1636] sm:$0x1]
  %v1639 = vperm.slane %v1637, 0
  %v1645 = vunpack.c.l.b16 %v1632
  %v1646 = vunpack.c.l.b16 %v1633
  %v1647 = vunpack.c.l.b16 %v1634
  %v1648 = vunpack.c.l.b16 %v1635
  %v1649 = vpack.c.b16 %v1646, %v1645
  %v1650 = vpack.c.b16 %v1648, %v1647
  %v1654 = vsel %vm268, %v1628, 0
  %v1657 = vsel %vm268, %v1629, 0
  %v1660 = vsel %vm268, %v1630, 0
  %1662 = vmatpush.bf16.msra.mxu0 0
  %1663 = vmatpush.bf16.msra.mxu0 0
  %1664 = vmatpush.bf16.msra.mxu0 0
  %1665 = vmatpush.bf16.msra.mxu0 0
  %1666 = vmatpush.bf16.msra.mxu0 0
  %1667 = vmatpush.bf16.msra.mxu0 0
  %1668 = vmatpush.bf16.msra.mxu0 %v1650
  %1669 = vmatpush.bf16.msra.mxu0 %v1649
  %1670 = vmatmul.bf16.gmra.mxu0 %v1654
  %v1671 = vpop.f32.mrf.mxu0
  %v1672 = vadd.f32 %v1639, %v1671
  %v1673 = vpop.f32.mrf.mxu0
  %v1674 = vadd.f32 %v1639, %v1673
  %1675 = vmatmul.bf16.gmra.mxu0 %v1657
  %v1676 = vpop.f32.mrf.mxu0
  %v1677 = vadd.f32 %v1639, %v1676
  %v1678 = vpop.f32.mrf.mxu0
  %v1679 = vadd.f32 %v1639, %v1678
  %1680 = vmatmul.bf16.gmra.mxu0 %v1660
  %v1681 = vpop.f32.mrf.mxu0
  %v1682 = vadd.f32 %v1639, %v1681
  %v1683 = vpop.f32.mrf.mxu0
  %1684 = vdwg.mxu0
  %s1685 = scalar_lea.vmem %s21, 32
  %v1686 = vld [vmem:[%s1685] sm:$0xf]
  %v1687 = vld [vmem:[%s1685 + $0x4] sm:$0xf]
  %v1688 = vld [vmem:[%s1685 + $0x8] sm:$0xf]
  %v1689 = vld [vmem:[%s1685 + $0xc] sm:$0xf]
  %s1690 = scalar_lea.vmem %s23, 2
  %v1691 = vld [vmem:[%s1690] sm:$0x1]
  %v1693 = vperm.slane %v1691, 0
  %v1699 = vunpack.c.l.b16 %v1686
  %v1700 = vunpack.c.l.b16 %v1687
  %v1701 = vunpack.c.l.b16 %v1688
  %v1702 = vunpack.c.l.b16 %v1689
  %v1703 = vpack.c.b16 %v1700, %v1699
  %v1704 = vpack.c.b16 %v1702, %v1701
  %1707 = vmatpush.bf16.msra.mxu0 0
  %1708 = vmatpush.bf16.msra.mxu0 0
  %1709 = vmatpush.bf16.msra.mxu0 0
  %1710 = vmatpush.bf16.msra.mxu0 0
  %1711 = vmatpush.bf16.msra.mxu0 0
  %1712 = vmatpush.bf16.msra.mxu0 0
  %1713 = vmatpush.bf16.msra.mxu0 %v1704
  %1714 = vmatpush.bf16.msra.mxu0 %v1703
  %1715 = vmatmul.bf16.gmra.mxu0 %v1654
  %v1716 = vpop.f32.mrf.mxu0
  %v1717 = vadd.f32 %v1693, %v1716
  %v1718 = vpop.f32.mrf.mxu0
  %v1719 = vadd.f32 %v1693, %v1718
  %1720 = vmatmul.bf16.gmra.mxu0 %v1657
  %v1721 = vpop.f32.mrf.mxu0
  %v1722 = vadd.f32 %v1693, %v1721
  %v1723 = vpop.f32.mrf.mxu0
  %v1724 = vadd.f32 %v1693, %v1723
  %1725 = vmatmul.bf16.gmra.mxu0 %v1660
  %v1726 = vpop.f32.mrf.mxu0
  %v1727 = vadd.f32 %v1693, %v1726
  %v1728 = vpop.f32.mrf.mxu0
  %1729 = vdwg.mxu0
  %s1730 = scalar_lea.vmem %s25, 32
  %v1731 = vld [vmem:[%s1730] sm:$0xf]
  %v1732 = vld [vmem:[%s1730 + $0x4] sm:$0xf]
  %v1733 = vld [vmem:[%s1730 + $0x8] sm:$0xf]
  %v1734 = vld [vmem:[%s1730 + $0xc] sm:$0xf]
  %s1735 = scalar_lea.vmem %s27, 2
  %v1736 = vld [vmem:[%s1735] sm:$0x1]
  %v1738 = vperm.slane %v1736, 0
  %v1744 = vunpack.c.l.b16 %v1731
  %v1745 = vunpack.c.l.b16 %v1732
  %v1746 = vunpack.c.l.b16 %v1733
  %v1747 = vunpack.c.l.b16 %v1734
  %v1748 = vpack.c.b16 %v1745, %v1744
  %v1749 = vpack.c.b16 %v1747, %v1746
  %1752 = vmatpush.bf16.msra.mxu0 0
  %1753 = vmatpush.bf16.msra.mxu0 0
  %1754 = vmatpush.bf16.msra.mxu0 0
  %1755 = vmatpush.bf16.msra.mxu0 0
  %1756 = vmatpush.bf16.msra.mxu0 0
  %1757 = vmatpush.bf16.msra.mxu0 0
  %1758 = vmatpush.bf16.msra.mxu0 %v1749
  %1759 = vmatpush.bf16.msra.mxu0 %v1748
  %1760 = vmatmul.bf16.gmra.mxu0 %v1654
  %v1761 = vpop.f32.mrf.mxu0
  %v1762 = vadd.f32 %v1738, %v1761
  %v1763 = vpop.f32.mrf.mxu0
  %v1764 = vadd.f32 %v1738, %v1763
  %1765 = vmatmul.bf16.gmra.mxu0 %v1657
  %v1766 = vpop.f32.mrf.mxu0
  %v1767 = vadd.f32 %v1738, %v1766
  %v1768 = vpop.f32.mrf.mxu0
  %v1769 = vadd.f32 %v1738, %v1768
  %1770 = vmatmul.bf16.gmra.mxu0 %v1660
  %v1771 = vpop.f32.mrf.mxu0
  %v1772 = vadd.f32 %v1738, %v1771
  %v1773 = vpop.f32.mrf.mxu0
  %1774 = vdwg.mxu0
  %v1775 = vpack.c.bf16 %v1674, %v1672
  %v1776 = vpack.c.bf16 %v1677, %v1677
  %v1777 = vpack.c.bf16 %v1719, %v1717
  %v1778 = vpack.c.bf16 %v1722, %v1722
  %v1779 = vpack.c.bf16 %v1764, %v1762
  %v1780 = vpack.c.bf16 %v1767, %v1767
  %v1782 = vsel %vm393, %v1775, 0
  %v1785 = vsel %vm393, %v1776, 0
  %v1788 = vsel %vm393, %v1777, 0
  %v1791 = vsel %vm393, %v1778, 0
  %1793 = vmatpush.bf16.xpose.msra.mxu0 0
  %1794 = vmatpush.bf16.xpose.msra.mxu0 0
  %1795 = vmatpush.bf16.xpose.msra.mxu0 0
  %1796 = vmatpush.bf16.xpose.msra.mxu0 0
  %1797 = vmatpush.bf16.xpose.msra.mxu0 0
  %1798 = vmatpush.bf16.xpose.msra.mxu0 0
  %1799 = vmatpush.bf16.xpose.msra.mxu0 %v1791
  %1800 = vmatpush.bf16.xpose.msra.mxu0 %v1788
  %1801 = vmatmul.bf16.gmra.mxu0 %v1782
  %v1802 = vpop.f32.mrf.mxu0
  %v1803 = vadd.f32 0.0, %v1802
  %v1804 = vpop.f32.mrf.mxu0
  %v1805 = vadd.f32 0.0, %v1804
  %1806 = vmatmul.bf16.gmra.mxu0 %v1785
  %v1807 = vpop.f32.mrf.mxu0
  %v1808 = vadd.f32 0.0, %v1807
  %v1809 = vpop.f32.mrf.mxu0
  %1810 = vdwg.mxu0
  %v1811 = vmul.f32 %v1803, 0.25
  %v1812 = vmul.f32 %v1805, 0.25
  %v1813 = vmul.f32 %v1808, 0.25
  %v1814 = vsel %vm427, %v1811, -inf
  %1815 = vmax.xlane.f32.xlu0 %v1814
  %v1816 = vpop.xlane.xlu0 %1815
  %v1817 = vsel %vm427, %v1812, -inf
  %1818 = vmax.xlane.f32.xlu0 %v1817
  %v1819 = vpop.xlane.xlu0 %1818
  %v1820 = vsel %vm434, %v1813, -inf
  %1821 = vmax.xlane.f32.xlu0 %v1820
  %v1822 = vpop.xlane.xlu0 %1821
  %v1823 = vsub.f32 %v1811, %v1816
  %v1824 = vsub.f32 %v1812, %v1819
  %v1825 = vsub.f32 %v1813, %v1822
  %v1826 = vmul.f32 %v1823, 1.442695
  %v1827 = vpow.pop %v1826
  %v1828 = vmul.f32 %v1824, 1.442695
  %v1829 = vpow.pop %v1828
  %v1830 = vmul.f32 %v1825, 1.442695
  %v1831 = vpow.pop %v1830
  %v1832 = vsel %vm427, %v1827, 0.0
  %1833 = vadd.xlane.f32.xlu0 %v1832
  %v1834 = vpop.xlane.xlu0 %1833
  %v1835 = vsel %vm427, %v1829, 0.0
  %1836 = vadd.xlane.f32.xlu0 %v1835
  %v1837 = vpop.xlane.xlu0 %1836
  %v1838 = vsel %vm434, %v1831, 0.0
  %1839 = vadd.xlane.f32.xlu0 %v1838
  %v1840 = vpop.xlane.xlu0 %1839
  %v1841 = vrcp.pop %v1834
  %v1842 = vrcp.pop %v1837
  %v1843 = vrcp.pop %v1840
  %v1844 = vmul.f32 %v1827, %v1841
  %v1845 = vmul.f32 %v1829, %v1842
  %v1846 = vmul.f32 %v1831, %v1843
  %vm1847 = vcmp.ge.f32.partialorder %v1844, 0.1
  %vm1848 = vcmp.ge.f32.partialorder %v1845, 0.1
  %vm1849 = vcmp.ge.f32.partialorder %v1846, 0.1
  %v1850 = vsel %vm1847, %v1844, 0.0
  %v1851 = vsel %vm1848, %v1845, 0.0
  %v1852 = vsel %vm1849, %v1846, 0.0
  %v1853 = vpack.c.bf16 %v1851, %v1850
  %v1854 = vpack.c.bf16 %v1852, %v1852
  %v1856 = vsel %vm427, %v1853, 0
  %v1859 = vsel %vm427, %v1854, 0
  %v1862 = vsel %vm146, %v1780, 0
  %1864 = vmatpush.bf16.msra.mxu0 0
  %1865 = vmatpush.bf16.msra.mxu0 0
  %1866 = vmatpush.bf16.msra.mxu0 0
  %1867 = vmatpush.bf16.msra.mxu0 0
  %1868 = vmatpush.bf16.msra.mxu0 0
  %1869 = vmatpush.bf16.msra.mxu0 0
  %1870 = vmatpush.bf16.msra.mxu0 %v1862
  %1871 = vmatpush.bf16.msra.mxu0 %v1779
  %1872 = vmatmul.bf16.gmra.mxu0 %v1856
  %v1873 = vpop.f32.mrf.mxu0
  %v1874 = vadd.f32 0.0, %v1873
  %v1875 = vpop.f32.mrf.mxu0
  %v1876 = vadd.f32 0.0, %v1875
  %1877 = vmatmul.bf16.gmra.mxu0 %v1859
  %v1878 = vpop.f32.mrf.mxu0
  %v1879 = vadd.f32 0.0, %v1878
  %v1880 = vpop.f32.mrf.mxu0
  %1881 = vdwg.mxu0
  %v1882 = vadd.f32 %v887, %v1844
  %v1883 = vadd.f32 %v888, %v1845
  %v1884 = vadd.f32 %v889, %v1846
  %v1885 = vsel %vm1847, 1, 0
  %v1886 = vsel %vm1848, 1, 0
  %v1887 = vsel %vm1849, 1, 0
  %v1888 = vcvt.s32.f32 %v1885
  %v1889 = vcvt.s32.f32 %v1886
  %v1890 = vcvt.s32.f32 %v1887
  %v1891 = vadd.f32 %v1888, 0.0
  %v1892 = vadd.f32 %v1889, 0.0
  %v1893 = vadd.f32 %v1890, 0.0
  %v1894 = vpack.c.bf16 %v1679, %v1677
  %v1895 = vpack.c.bf16 %v1682, %v1682
  %v1896 = vpack.c.bf16 %v1724, %v1722
  %v1897 = vpack.c.bf16 %v1727, %v1727
  %v1898 = vpack.c.bf16 %v1769, %v1767
  %v1899 = vpack.c.bf16 %v1772, %v1772
  %v1902 = vrot.slane %v1894, 1
  %v1903 = vrot.slane %v1895, 1
  %v1904 = vsel %vm517, %v1902, %v1903
  %v1907 = vrot.slane %v1896, 1
  %v1908 = vrot.slane %v1897, 1
  %v1909 = vsel %vm517, %v1907, %v1908
  %v1911 = vsel %vm393, %v1904, 0
  %v1914 = vsel %vm393, %v1903, 0
  %v1917 = vsel %vm393, %v1909, 0
  %v1920 = vsel %vm393, %v1908, 0
  %1922 = vmatpush.bf16.xpose.msra.mxu0 0
  %1923 = vmatpush.bf16.xpose.msra.mxu0 0
  %1924 = vmatpush.bf16.xpose.msra.mxu0 0
  %1925 = vmatpush.bf16.xpose.msra.mxu0 0
  %1926 = vmatpush.bf16.xpose.msra.mxu0 0
  %1927 = vmatpush.bf16.xpose.msra.mxu0 0
  %1928 = vmatpush.bf16.xpose.msra.mxu0 %v1920
  %1929 = vmatpush.bf16.xpose.msra.mxu0 %v1917
  %1930 = vmatmul.bf16.gmra.mxu0 %v1911
  %v1931 = vpop.f32.mrf.mxu0
  %v1932 = vadd.f32 0.0, %v1931
  %v1933 = vpop.f32.mrf.mxu0
  %v1934 = vadd.f32 0.0, %v1933
  %1935 = vmatmul.bf16.gmra.mxu0 %v1914
  %v1936 = vpop.f32.mrf.mxu0
  %v1937 = vadd.f32 0.0, %v1936
  %v1938 = vpop.f32.mrf.mxu0
  %1939 = vdwg.mxu0
  %v1940 = vmul.f32 %v1932, 0.25
  %v1941 = vmul.f32 %v1934, 0.25
  %v1942 = vmul.f32 %v1937, 0.25
  %v1943 = vsel %vm427, %v1940, -inf
  %1944 = vmax.xlane.f32.xlu0 %v1943
  %v1945 = vpop.xlane.xlu0 %1944
  %v1946 = vsel %vm427, %v1941, -inf
  %1947 = vmax.xlane.f32.xlu0 %v1946
  %v1948 = vpop.xlane.xlu0 %1947
  %v1949 = vsel %vm434, %v1942, -inf
  %1950 = vmax.xlane.f32.xlu0 %v1949
  %v1951 = vpop.xlane.xlu0 %1950
  %v1952 = vsub.f32 %v1940, %v1945
  %v1953 = vsub.f32 %v1941, %v1948
  %v1954 = vsub.f32 %v1942, %v1951
  %v1955 = vmul.f32 %v1952, 1.442695
  %v1956 = vpow.pop %v1955
  %v1957 = vmul.f32 %v1953, 1.442695
  %v1958 = vpow.pop %v1957
  %v1959 = vmul.f32 %v1954, 1.442695
  %v1960 = vpow.pop %v1959
  %v1961 = vsel %vm427, %v1956, 0.0
  %1962 = vadd.xlane.f32.xlu0 %v1961
  %v1963 = vpop.xlane.xlu0 %1962
  %v1964 = vsel %vm427, %v1958, 0.0
  %1965 = vadd.xlane.f32.xlu0 %v1964
  %v1966 = vpop.xlane.xlu0 %1965
  %v1967 = vsel %vm434, %v1960, 0.0
  %1968 = vadd.xlane.f32.xlu0 %v1967
  %v1969 = vpop.xlane.xlu0 %1968
  %v1970 = vrcp.pop %v1963
  %v1971 = vrcp.pop %v1966
  %v1972 = vrcp.pop %v1969
  %v1973 = vmul.f32 %v1956, %v1970
  %v1974 = vmul.f32 %v1958, %v1971
  %v1975 = vmul.f32 %v1960, %v1972
  %vm1976 = vcmp.ge.f32.partialorder %v1973, 0.1
  %vm1977 = vcmp.ge.f32.partialorder %v1974, 0.1
  %vm1978 = vcmp.ge.f32.partialorder %v1975, 0.1
  %v1979 = vsel %vm1976, %v1973, 0.0
  %v1980 = vsel %vm1977, %v1974, 0.0
  %v1981 = vsel %vm1978, %v1975, 0.0
  %v1982 = vpack.c.bf16 %v1980, %v1979
  %v1983 = vpack.c.bf16 %v1981, %v1981
  %v1986 = vrot.slane %v1898, 1
  %v1987 = vrot.slane %v1899, 1
  %v1988 = vsel %vm517, %v1986, %v1987
  %v1991 = vsel %vm427, %v1982, 0
  %v1994 = vsel %vm427, %v1983, 0
  %v1997 = vsel %vm146, %v1987, 0
  %1999 = vmatpush.bf16.msra.mxu0 0
  %2000 = vmatpush.bf16.msra.mxu0 0
  %2001 = vmatpush.bf16.msra.mxu0 0
  %2002 = vmatpush.bf16.msra.mxu0 0
  %2003 = vmatpush.bf16.msra.mxu0 0
  %2004 = vmatpush.bf16.msra.mxu0 0
  %2005 = vmatpush.bf16.msra.mxu0 %v1997
  %2006 = vmatpush.bf16.msra.mxu0 %v1988
  %2007 = vmatmul.bf16.gmra.mxu0 %v1991
  %v2008 = vpop.f32.mrf.mxu0
  %v2009 = vadd.f32 0.0, %v2008
  %v2010 = vpop.f32.mrf.mxu0
  %v2011 = vadd.f32 0.0, %v2010
  %2012 = vmatmul.bf16.gmra.mxu0 %v1994
  %v2013 = vpop.f32.mrf.mxu0
  %v2014 = vadd.f32 0.0, %v2013
  %v2015 = vpop.f32.mrf.mxu0
  %2016 = vdwg.mxu0
  %v2017 = vadd.f32 %v1022, %v1973
  %v2018 = vadd.f32 %v1023, %v1974
  %v2019 = vadd.f32 %v1024, %v1975
  %v2020 = vsel %vm1976, 1, 0
  %v2021 = vsel %vm1977, 1, 0
  %v2022 = vsel %vm1978, 1, 0
  %v2023 = vcvt.s32.f32 %v2020
  %v2024 = vcvt.s32.f32 %v2021
  %v2025 = vcvt.s32.f32 %v2022
  %v2026 = vadd.f32 %v2023, 0.0
  %v2027 = vadd.f32 %v2024, 0.0
  %v2028 = vadd.f32 %v2025, 0.0
  %s2029 = scalar_lea.vmem %s17, 48
  %v2030 = vld [vmem:[%s2029] sm:$0xf]
  %v2031 = vld [vmem:[%s2029 + $0x4] sm:$0xf]
  %v2032 = vld [vmem:[%s2029 + $0x8] sm:$0xf]
  %v2033 = vld [vmem:[%s2029 + $0xc] sm:$0xf]
  %s2034 = scalar_lea.vmem %s19, 3
  %v2035 = vld [vmem:[%s2034] sm:$0x1]
  %v2037 = vperm.slane %v2035, 0
  %v2043 = vunpack.c.l.b16 %v2030
  %v2044 = vunpack.c.l.b16 %v2031
  %v2045 = vunpack.c.l.b16 %v2032
  %v2046 = vunpack.c.l.b16 %v2033
  %v2047 = vpack.c.b16 %v2044, %v2043
  %v2048 = vpack.c.b16 %v2046, %v2045
  %2051 = vmatpush.bf16.msra.mxu0 0
  %2052 = vmatpush.bf16.msra.mxu0 0
  %2053 = vmatpush.bf16.msra.mxu0 0
  %2054 = vmatpush.bf16.msra.mxu0 0
  %2055 = vmatpush.bf16.msra.mxu0 0
  %2056 = vmatpush.bf16.msra.mxu0 0
  %2057 = vmatpush.bf16.msra.mxu0 %v2048
  %2058 = vmatpush.bf16.msra.mxu0 %v2047
  %2059 = vmatmul.bf16.gmra.mxu0 %v1654
  %v2060 = vpop.f32.mrf.mxu0
  %v2061 = vadd.f32 %v2037, %v2060
  %v2062 = vpop.f32.mrf.mxu0
  %v2063 = vadd.f32 %v2037, %v2062
  %2064 = vmatmul.bf16.gmra.mxu0 %v1657
  %v2065 = vpop.f32.mrf.mxu0
  %v2066 = vadd.f32 %v2037, %v2065
  %v2067 = vpop.f32.mrf.mxu0
  %v2068 = vadd.f32 %v2037, %v2067
  %2069 = vmatmul.bf16.gmra.mxu0 %v1660
  %v2070 = vpop.f32.mrf.mxu0
  %v2071 = vadd.f32 %v2037, %v2070
  %v2072 = vpop.f32.mrf.mxu0
  %2073 = vdwg.mxu0
  %s2074 = scalar_lea.vmem %s21, 48
  %v2075 = vld [vmem:[%s2074] sm:$0xf]
  %v2076 = vld [vmem:[%s2074 + $0x4] sm:$0xf]
  %v2077 = vld [vmem:[%s2074 + $0x8] sm:$0xf]
  %v2078 = vld [vmem:[%s2074 + $0xc] sm:$0xf]
  %s2079 = scalar_lea.vmem %s23, 3
  %v2080 = vld [vmem:[%s2079] sm:$0x1]
  %v2082 = vperm.slane %v2080, 0
  %v2088 = vunpack.c.l.b16 %v2075
  %v2089 = vunpack.c.l.b16 %v2076
  %v2090 = vunpack.c.l.b16 %v2077
  %v2091 = vunpack.c.l.b16 %v2078
  %v2092 = vpack.c.b16 %v2089, %v2088
  %v2093 = vpack.c.b16 %v2091, %v2090
  %2096 = vmatpush.bf16.msra.mxu0 0
  %2097 = vmatpush.bf16.msra.mxu0 0
  %2098 = vmatpush.bf16.msra.mxu0 0
  %2099 = vmatpush.bf16.msra.mxu0 0
  %2100 = vmatpush.bf16.msra.mxu0 0
  %2101 = vmatpush.bf16.msra.mxu0 0
  %2102 = vmatpush.bf16.msra.mxu0 %v2093
  %2103 = vmatpush.bf16.msra.mxu0 %v2092
  %2104 = vmatmul.bf16.gmra.mxu0 %v1654
  %v2105 = vpop.f32.mrf.mxu0
  %v2106 = vadd.f32 %v2082, %v2105
  %v2107 = vpop.f32.mrf.mxu0
  %v2108 = vadd.f32 %v2082, %v2107
  %2109 = vmatmul.bf16.gmra.mxu0 %v1657
  %v2110 = vpop.f32.mrf.mxu0
  %v2111 = vadd.f32 %v2082, %v2110
  %v2112 = vpop.f32.mrf.mxu0
  %v2113 = vadd.f32 %v2082, %v2112
  %2114 = vmatmul.bf16.gmra.mxu0 %v1660
  %v2115 = vpop.f32.mrf.mxu0
  %v2116 = vadd.f32 %v2082, %v2115
  %v2117 = vpop.f32.mrf.mxu0
  %2118 = vdwg.mxu0
  %s2119 = scalar_lea.vmem %s25, 48
  %v2120 = vld [vmem:[%s2119] sm:$0xf]
  %v2121 = vld [vmem:[%s2119 + $0x4] sm:$0xf]
  %v2122 = vld [vmem:[%s2119 + $0x8] sm:$0xf]
  %v2123 = vld [vmem:[%s2119 + $0xc] sm:$0xf]
  %s2124 = scalar_lea.vmem %s27, 3
  %v2125 = vld [vmem:[%s2124] sm:$0x1]
  %v2127 = vperm.slane %v2125, 0
  %v2133 = vunpack.c.l.b16 %v2120
  %v2134 = vunpack.c.l.b16 %v2121
  %v2135 = vunpack.c.l.b16 %v2122
  %v2136 = vunpack.c.l.b16 %v2123
  %v2137 = vpack.c.b16 %v2134, %v2133
  %v2138 = vpack.c.b16 %v2136, %v2135
  %2141 = vmatpush.bf16.msra.mxu0 0
  %2142 = vmatpush.bf16.msra.mxu0 0
  %2143 = vmatpush.bf16.msra.mxu0 0
  %2144 = vmatpush.bf16.msra.mxu0 0
  %2145 = vmatpush.bf16.msra.mxu0 0
  %2146 = vmatpush.bf16.msra.mxu0 0
  %2147 = vmatpush.bf16.msra.mxu0 %v2138
  %2148 = vmatpush.bf16.msra.mxu0 %v2137
  %2149 = vmatmul.bf16.gmra.mxu0 %v1654
  %v2150 = vpop.f32.mrf.mxu0
  %v2151 = vadd.f32 %v2127, %v2150
  %v2152 = vpop.f32.mrf.mxu0
  %v2153 = vadd.f32 %v2127, %v2152
  %2154 = vmatmul.bf16.gmra.mxu0 %v1657
  %v2155 = vpop.f32.mrf.mxu0
  %v2156 = vadd.f32 %v2127, %v2155
  %v2157 = vpop.f32.mrf.mxu0
  %v2158 = vadd.f32 %v2127, %v2157
  %2159 = vmatmul.bf16.gmra.mxu0 %v1660
  %v2160 = vpop.f32.mrf.mxu0
  %v2161 = vadd.f32 %v2127, %v2160
  %v2162 = vpop.f32.mrf.mxu0
  %2163 = vdwg.mxu0
  %v2164 = vpack.c.bf16 %v2063, %v2061
  %v2165 = vpack.c.bf16 %v2066, %v2066
  %v2166 = vpack.c.bf16 %v2108, %v2106
  %v2167 = vpack.c.bf16 %v2111, %v2111
  %v2168 = vpack.c.bf16 %v2153, %v2151
  %v2169 = vpack.c.bf16 %v2156, %v2156
  %v2171 = vsel %vm393, %v2164, 0
  %v2174 = vsel %vm393, %v2165, 0
  %v2177 = vsel %vm393, %v2166, 0
  %v2180 = vsel %vm393, %v2167, 0
  %2182 = vmatpush.bf16.xpose.msra.mxu0 0
  %2183 = vmatpush.bf16.xpose.msra.mxu0 0
  %2184 = vmatpush.bf16.xpose.msra.mxu0 0
  %2185 = vmatpush.bf16.xpose.msra.mxu0 0
  %2186 = vmatpush.bf16.xpose.msra.mxu0 0
  %2187 = vmatpush.bf16.xpose.msra.mxu0 0
  %2188 = vmatpush.bf16.xpose.msra.mxu0 %v2180
  %2189 = vmatpush.bf16.xpose.msra.mxu0 %v2177
  %2190 = vmatmul.bf16.gmra.mxu0 %v2171
  %v2191 = vpop.f32.mrf.mxu0
  %v2192 = vadd.f32 0.0, %v2191
  %v2193 = vpop.f32.mrf.mxu0
  %v2194 = vadd.f32 0.0, %v2193
  %2195 = vmatmul.bf16.gmra.mxu0 %v2174
  %v2196 = vpop.f32.mrf.mxu0
  %v2197 = vadd.f32 0.0, %v2196
  %v2198 = vpop.f32.mrf.mxu0
  %2199 = vdwg.mxu0
  %v2200 = vmul.f32 %v2192, 0.25
  %v2201 = vmul.f32 %v2194, 0.25
  %v2202 = vmul.f32 %v2197, 0.25
  %v2203 = vsel %vm427, %v2200, -inf
  %2204 = vmax.xlane.f32.xlu0 %v2203
  %v2205 = vpop.xlane.xlu0 %2204
  %v2206 = vsel %vm427, %v2201, -inf
  %2207 = vmax.xlane.f32.xlu0 %v2206
  %v2208 = vpop.xlane.xlu0 %2207
  %v2209 = vsel %vm434, %v2202, -inf
  %2210 = vmax.xlane.f32.xlu0 %v2209
  %v2211 = vpop.xlane.xlu0 %2210
  %v2212 = vsub.f32 %v2200, %v2205
  %v2213 = vsub.f32 %v2201, %v2208
  %v2214 = vsub.f32 %v2202, %v2211
  %v2215 = vmul.f32 %v2212, 1.442695
  %v2216 = vpow.pop %v2215
  %v2217 = vmul.f32 %v2213, 1.442695
  %v2218 = vpow.pop %v2217
  %v2219 = vmul.f32 %v2214, 1.442695
  %v2220 = vpow.pop %v2219
  %v2221 = vsel %vm427, %v2216, 0.0
  %2222 = vadd.xlane.f32.xlu0 %v2221
  %v2223 = vpop.xlane.xlu0 %2222
  %v2224 = vsel %vm427, %v2218, 0.0
  %2225 = vadd.xlane.f32.xlu0 %v2224
  %v2226 = vpop.xlane.xlu0 %2225
  %v2227 = vsel %vm434, %v2220, 0.0
  %2228 = vadd.xlane.f32.xlu0 %v2227
  %v2229 = vpop.xlane.xlu0 %2228
  %v2230 = vrcp.pop %v2223
  %v2231 = vrcp.pop %v2226
  %v2232 = vrcp.pop %v2229
  %v2233 = vmul.f32 %v2216, %v2230
  %v2234 = vmul.f32 %v2218, %v2231
  %v2235 = vmul.f32 %v2220, %v2232
  %vm2236 = vcmp.ge.f32.partialorder %v2233, 0.1
  %vm2237 = vcmp.ge.f32.partialorder %v2234, 0.1
  %vm2238 = vcmp.ge.f32.partialorder %v2235, 0.1
  %v2239 = vsel %vm2236, %v2233, 0.0
  %v2240 = vsel %vm2237, %v2234, 0.0
  %v2241 = vsel %vm2238, %v2235, 0.0
  %v2242 = vpack.c.bf16 %v2240, %v2239
  %v2243 = vpack.c.bf16 %v2241, %v2241
  %v2245 = vsel %vm427, %v2242, 0
  %v2248 = vsel %vm427, %v2243, 0
  %v2251 = vsel %vm146, %v2169, 0
  %2253 = vmatpush.bf16.msra.mxu0 0
  %2254 = vmatpush.bf16.msra.mxu0 0
  %2255 = vmatpush.bf16.msra.mxu0 0
  %2256 = vmatpush.bf16.msra.mxu0 0
  %2257 = vmatpush.bf16.msra.mxu0 0
  %2258 = vmatpush.bf16.msra.mxu0 0
  %2259 = vmatpush.bf16.msra.mxu0 %v2251
  %2260 = vmatpush.bf16.msra.mxu0 %v2168
  %2261 = vmatmul.bf16.gmra.mxu0 %v2245
  %v2262 = vpop.f32.mrf.mxu0
  %v2263 = vadd.f32 0.0, %v2262
  %v2264 = vpop.f32.mrf.mxu0
  %v2265 = vadd.f32 0.0, %v2264
  %2266 = vmatmul.bf16.gmra.mxu0 %v2248
  %v2267 = vpop.f32.mrf.mxu0
  %v2268 = vadd.f32 0.0, %v2267
  %v2269 = vpop.f32.mrf.mxu0
  %2270 = vdwg.mxu0
  %v2271 = vadd.f32 %v1882, %v2233
  %v2272 = vadd.f32 %v1883, %v2234
  %v2273 = vadd.f32 %v1884, %v2235
  %v2274 = vsel %vm2236, 1, 0
  %v2275 = vsel %vm2237, 1, 0
  %v2276 = vsel %vm2238, 1, 0
  %v2277 = vcvt.s32.f32 %v2274
  %v2278 = vcvt.s32.f32 %v2275
  %v2279 = vcvt.s32.f32 %v2276
  %v2280 = vadd.f32 %v1891, %v2277
  %v2281 = vadd.f32 %v1892, %v2278
  %v2282 = vadd.f32 %v1893, %v2279
  %v2283 = vpack.c.bf16 %v2068, %v2066
  %v2284 = vpack.c.bf16 %v2071, %v2071
  %v2285 = vpack.c.bf16 %v2113, %v2111
  %v2286 = vpack.c.bf16 %v2116, %v2116
  %v2287 = vpack.c.bf16 %v2158, %v2156
  %v2288 = vpack.c.bf16 %v2161, %v2161
  %v2291 = vrot.slane %v2283, 1
  %v2292 = vrot.slane %v2284, 1
  %v2293 = vsel %vm517, %v2291, %v2292
  %v2296 = vrot.slane %v2285, 1
  %v2297 = vrot.slane %v2286, 1
  %v2298 = vsel %vm517, %v2296, %v2297
  %v2300 = vsel %vm393, %v2293, 0
  %v2303 = vsel %vm393, %v2292, 0
  %v2306 = vsel %vm393, %v2298, 0
  %v2309 = vsel %vm393, %v2297, 0
  %2311 = vmatpush.bf16.xpose.msra.mxu0 0
  %2312 = vmatpush.bf16.xpose.msra.mxu0 0
  %2313 = vmatpush.bf16.xpose.msra.mxu0 0
  %2314 = vmatpush.bf16.xpose.msra.mxu0 0
  %2315 = vmatpush.bf16.xpose.msra.mxu0 0
  %2316 = vmatpush.bf16.xpose.msra.mxu0 0
  %2317 = vmatpush.bf16.xpose.msra.mxu0 %v2309
  %2318 = vmatpush.bf16.xpose.msra.mxu0 %v2306
  %2319 = vmatmul.bf16.gmra.mxu0 %v2300
  %v2320 = vpop.f32.mrf.mxu0
  %v2321 = vadd.f32 0.0, %v2320
  %v2322 = vpop.f32.mrf.mxu0
  %v2323 = vadd.f32 0.0, %v2322
  %2324 = vmatmul.bf16.gmra.mxu0 %v2303
  %v2325 = vpop.f32.mrf.mxu0
  %v2326 = vadd.f32 0.0, %v2325
  %v2327 = vpop.f32.mrf.mxu0
  %2328 = vdwg.mxu0
  %v2329 = vmul.f32 %v2321, 0.25
  %v2330 = vmul.f32 %v2323, 0.25
  %v2331 = vmul.f32 %v2326, 0.25
  %v2332 = vsel %vm427, %v2329, -inf
  %2333 = vmax.xlane.f32.xlu0 %v2332
  %v2334 = vpop.xlane.xlu0 %2333
  %v2335 = vsel %vm427, %v2330, -inf
  %2336 = vmax.xlane.f32.xlu0 %v2335
  %v2337 = vpop.xlane.xlu0 %2336
  %v2338 = vsel %vm434, %v2331, -inf
  %2339 = vmax.xlane.f32.xlu0 %v2338
  %v2340 = vpop.xlane.xlu0 %2339
  %v2341 = vsub.f32 %v2329, %v2334
  %v2342 = vsub.f32 %v2330, %v2337
  %v2343 = vsub.f32 %v2331, %v2340
  %v2344 = vmul.f32 %v2341, 1.442695
  %v2345 = vpow.pop %v2344
  %v2346 = vmul.f32 %v2342, 1.442695
  %v2347 = vpow.pop %v2346
  %v2348 = vmul.f32 %v2343, 1.442695
  %v2349 = vpow.pop %v2348
  %v2350 = vsel %vm427, %v2345, 0.0
  %2351 = vadd.xlane.f32.xlu0 %v2350
  %v2352 = vpop.xlane.xlu0 %2351
  %v2353 = vsel %vm427, %v2347, 0.0
  %2354 = vadd.xlane.f32.xlu0 %v2353
  %v2355 = vpop.xlane.xlu0 %2354
  %v2356 = vsel %vm434, %v2349, 0.0
  %2357 = vadd.xlane.f32.xlu0 %v2356
  %v2358 = vpop.xlane.xlu0 %2357
  %v2359 = vrcp.pop %v2352
  %v2360 = vrcp.pop %v2355
  %v2361 = vrcp.pop %v2358
  %v2362 = vmul.f32 %v2345, %v2359
  %v2363 = vmul.f32 %v2347, %v2360
  %v2364 = vmul.f32 %v2349, %v2361
  %vm2365 = vcmp.ge.f32.partialorder %v2362, 0.1
  %vm2366 = vcmp.ge.f32.partialorder %v2363, 0.1
  %vm2367 = vcmp.ge.f32.partialorder %v2364, 0.1
  %v2368 = vsel %vm2365, %v2362, 0.0
  %v2369 = vsel %vm2366, %v2363, 0.0
  %v2370 = vsel %vm2367, %v2364, 0.0
  %v2371 = vpack.c.bf16 %v2369, %v2368
  %v2372 = vpack.c.bf16 %v2370, %v2370
  %v2375 = vrot.slane %v2287, 1
  %v2376 = vrot.slane %v2288, 1
  %v2377 = vsel %vm517, %v2375, %v2376
  %v2380 = vsel %vm427, %v2371, 0
  %v2383 = vsel %vm427, %v2372, 0
  %v2386 = vsel %vm146, %v2376, 0
  %2388 = vmatpush.bf16.msra.mxu0 0
  %2389 = vmatpush.bf16.msra.mxu0 0
  %2390 = vmatpush.bf16.msra.mxu0 0
  %2391 = vmatpush.bf16.msra.mxu0 0
  %2392 = vmatpush.bf16.msra.mxu0 0
  %2393 = vmatpush.bf16.msra.mxu0 0
  %2394 = vmatpush.bf16.msra.mxu0 %v2386
  %2395 = vmatpush.bf16.msra.mxu0 %v2377
  %2396 = vmatmul.bf16.gmra.mxu0 %v2380
  %v2397 = vpop.f32.mrf.mxu0
  %v2398 = vadd.f32 0.0, %v2397
  %v2399 = vpop.f32.mrf.mxu0
  %v2400 = vadd.f32 0.0, %v2399
  %2401 = vmatmul.bf16.gmra.mxu0 %v2383
  %v2402 = vpop.f32.mrf.mxu0
  %v2403 = vadd.f32 0.0, %v2402
  %v2404 = vpop.f32.mrf.mxu0
  %2405 = vdwg.mxu0
  %v2406 = vadd.f32 %v2017, %v2362
  %v2407 = vadd.f32 %v2018, %v2363
  %v2408 = vadd.f32 %v2019, %v2364
  %v2409 = vsel %vm2365, 1, 0
  %v2410 = vsel %vm2366, 1, 0
  %v2411 = vsel %vm2367, 1, 0
  %v2412 = vcvt.s32.f32 %v2409
  %v2413 = vcvt.s32.f32 %v2410
  %v2414 = vcvt.s32.f32 %v2411
  %v2415 = vadd.f32 %v2026, %v2412
  %v2416 = vadd.f32 %v2027, %v2413
  %v2417 = vadd.f32 %v2028, %v2414
  %2421 = vrot.lane.b32.xlu0 %v2263, 16
  %v2422 = vpop.permute.xlu0 %2421
  %2423 = vrot.lane.b32.xlu0 %v2265, 16
  %v2424 = vpop.permute.xlu0 %2423
  %2425 = vrot.lane.b32.xlu0 %v2268, 16
  %v2426 = vpop.permute.xlu0 %2425
  %v2430 = vsel %vm393, %v1874, %v2422
  %v2431 = vsel %vm393, %v1876, %v2424
  %v2432 = vsel %vm393, %v1879, %v2426
  %2436 = vrot.lane.b32.xlu0 %v2398, 16
  %v2437 = vpop.permute.xlu0 %2436
  %2438 = vrot.lane.b32.xlu0 %v2400, 16
  %v2439 = vpop.permute.xlu0 %2438
  %2440 = vrot.lane.b32.xlu0 %v2403, 16
  %v2441 = vpop.permute.xlu0 %2440
  %v2445 = vsel %vm393, %v2009, %v2437
  %v2446 = vsel %vm393, %v2011, %v2439
  %v2447 = vsel %vm393, %v2014, %v2441
  %v2451 = vrot.slane %v2445, 6
  %v2452 = vrot.slane %v2446, 6
  %v2453 = vsel %vm147, %v2451, %v2452
  %v2454 = vrot.slane %v2447, 6
  %v2455 = vsel %vm147, %v2452, %v2454
  %v2459 = vsel %vm147, %v2432, %v2451
  %v2460 = vpack.c.bf16 %v2431, %v2430
  %v2461 = vpack.c.bf16 %v2453, %v2459
  %v2462 = vpack.c.bf16 %v2455, %v2455
  %s2463 = scalar_lea.vmem %s29, 16
  %v2464 = vld [vmem:[%s2463] sm:$0xf]
  %v2465 = vld [vmem:[%s2463 + $0x4] sm:$0xf]
  %v2466 = vld [vmem:[%s2463 + $0x8] sm:$0xf]
  %v2467 = vld [vmem:[%s2463 + $0xc] sm:$0xf]
  %s2468 = scalar_lea.vmem %s31, 1
  %v2469 = vld [vmem:[%s2468] sm:$0x1]
  %v2471 = vperm.slane %v2469, 0
  %v2477 = vunpack.c.l.b16 %v2464
  %v2478 = vunpack.c.l.b16 %v2465
  %v2479 = vunpack.c.l.b16 %v2466
  %v2480 = vunpack.c.l.b16 %v2467
  %v2481 = vpack.c.b16 %v2478, %v2477
  %v2482 = vpack.c.b16 %v2480, %v2479
  %v2486 = vsel %vm268, %v2460, 0
  %v2489 = vsel %vm268, %v2461, 0
  %v2492 = vsel %vm268, %v2462, 0
  %2494 = vmatpush.bf16.msra.mxu0 0
  %2495 = vmatpush.bf16.msra.mxu0 0
  %2496 = vmatpush.bf16.msra.mxu0 0
  %2497 = vmatpush.bf16.msra.mxu0 0
  %2498 = vmatpush.bf16.msra.mxu0 0
  %2499 = vmatpush.bf16.msra.mxu0 0
  %2500 = vmatpush.bf16.msra.mxu0 %v2482
  %2501 = vmatpush.bf16.msra.mxu0 %v2481
  %2502 = vmatmul.bf16.gmra.mxu0 %v2486
  %v2503 = vpop.f32.mrf.mxu0
  %v2504 = vadd.f32 %v2471, %v2503
  %v2505 = vpop.f32.mrf.mxu0
  %v2506 = vadd.f32 %v2471, %v2505
  %2507 = vmatmul.bf16.gmra.mxu0 %v2489
  %v2508 = vpop.f32.mrf.mxu0
  %v2509 = vadd.f32 %v2471, %v2508
  %v2510 = vpop.f32.mrf.mxu0
  %v2511 = vadd.f32 %v2471, %v2510
  %2512 = vmatmul.bf16.gmra.mxu0 %v2492
  %v2513 = vpop.f32.mrf.mxu0
  %v2514 = vadd.f32 %v2471, %v2513
  %v2515 = vpop.f32.mrf.mxu0
  %2516 = vdwg.mxu0
  %v2517 = vadd.f32 %v1532, %v2504
  %v2518 = vadd.f32 %v1533, %v2506
  %v2519 = vadd.f32 %v1534, %v2509
  %v2520 = vadd.f32 %v1535, %v2511
  %v2521 = vadd.f32 %v1536, %v2514
  %s2522 = scalar_lea.vmem %s33, 1
  %v2523 = vld [vmem:[%s2522] sm:$0x1]
  %s2524 = scalar_lea.vmem %s35, 1
  %v2525 = vld [vmem:[%s2524] sm:$0x1]
  %v2526 = vsel %vm268, %v2517, 0.0
  %2527 = vadd.xlane.f32.xlu0 %v2526
  %v2528 = vpop.xlane.xlu0 %2527
  %v2529 = vsel %vm268, %v2518, 0.0
  %2530 = vadd.xlane.f32.xlu0 %v2529
  %v2531 = vpop.xlane.xlu0 %2530
  %v2532 = vsel %vm268, %v2519, 0.0
  %2533 = vadd.xlane.f32.xlu0 %v2532
  %v2534 = vpop.xlane.xlu0 %2533
  %v2535 = vsel %vm268, %v2520, 0.0
  %2536 = vadd.xlane.f32.xlu0 %v2535
  %v2537 = vpop.xlane.xlu0 %2536
  %v2538 = vsel %vm1150, %v2521, 0.0
  %2539 = vadd.xlane.f32.xlu0 %v2538
  %v2540 = vpop.xlane.xlu0 %2539
  %v2541 = vmul.f32 %v2528, %v1160
  %v2542 = vmul.f32 %v2531, %v1160
  %v2543 = vmul.f32 %v2534, %v1160
  %v2544 = vmul.f32 %v2537, %v1160
  %v2545 = vmul.f32 %v2540, %v1160
  %v2546 = vsub.f32 %v2517, %v2541
  %v2547 = vsub.f32 %v2518, %v2542
  %v2548 = vsub.f32 %v2519, %v2543
  %v2549 = vsub.f32 %v2520, %v2544
  %v2550 = vsub.f32 %v2521, %v2545
  %v2551 = vmul.f32 %v2546, %v2546
  %v2552 = vmul.f32 %v2547, %v2547
  %v2553 = vmul.f32 %v2548, %v2548
  %v2554 = vmul.f32 %v2549, %v2549
  %v2555 = vmul.f32 %v2550, %v2550
  %v2556 = vsel %vm268, %v2551, 0.0
  %2557 = vadd.xlane.f32.xlu0 %v2556
  %v2558 = vpop.xlane.xlu0 %2557
  %v2559 = vsel %vm268, %v2552, 0.0
  %2560 = vadd.xlane.f32.xlu0 %v2559
  %v2561 = vpop.xlane.xlu0 %2560
  %v2562 = vsel %vm268, %v2553, 0.0
  %2563 = vadd.xlane.f32.xlu0 %v2562
  %v2564 = vpop.xlane.xlu0 %2563
  %v2565 = vsel %vm268, %v2554, 0.0
  %2566 = vadd.xlane.f32.xlu0 %v2565
  %v2567 = vpop.xlane.xlu0 %2566
  %v2568 = vsel %vm1150, %v2555, 0.0
  %2569 = vadd.xlane.f32.xlu0 %v2568
  %v2570 = vpop.xlane.xlu0 %2569
  %v2571 = vmul.f32 %v2558, %v1160
  %v2572 = vmul.f32 %v2561, %v1160
  %v2573 = vmul.f32 %v2564, %v1160
  %v2574 = vmul.f32 %v2567, %v1160
  %v2575 = vmul.f32 %v2570, %v1160
  %v2576 = vadd.f32 %v2571, 1e-05
  %v2577 = vadd.f32 %v2572, 1e-05
  %v2578 = vadd.f32 %v2573, 1e-05
  %v2579 = vadd.f32 %v2574, 1e-05
  %v2580 = vadd.f32 %v2575, 1e-05
  %v2581 = vrsqrt.pop %v2576
  %v2582 = vmul.f32 %v2581, %v2576
  %v2583 = vmul.f32 %v2582, %v2581
  %v2584 = vmul.f32 0.5, %v2583
  %v2585 = vsub.f32 1.5, %v2584
  %v2586 = vmul.f32 %v2581, %v2585
  %vm2587 = vweird.f32 %v2576
  %vm2588 = vweird.f32 %v2581
  %vm2589 = vmor %vm2587, %vm2588
  %v2590 = vsel %vm2589, %v2581, %v2586
  %v2591 = vrsqrt.pop %v2577
  %v2592 = vmul.f32 %v2591, %v2577
  %v2593 = vmul.f32 %v2592, %v2591
  %v2594 = vmul.f32 0.5, %v2593
  %v2595 = vsub.f32 1.5, %v2594
  %v2596 = vmul.f32 %v2591, %v2595
  %vm2597 = vweird.f32 %v2577
  %vm2598 = vweird.f32 %v2591
  %vm2599 = vmor %vm2597, %vm2598
  %v2600 = vsel %vm2599, %v2591, %v2596
  %v2601 = vrsqrt.pop %v2578
  %v2602 = vmul.f32 %v2601, %v2578
  %v2603 = vmul.f32 %v2602, %v2601
  %v2604 = vmul.f32 0.5, %v2603
  %v2605 = vsub.f32 1.5, %v2604
  %v2606 = vmul.f32 %v2601, %v2605
  %vm2607 = vweird.f32 %v2578
  %vm2608 = vweird.f32 %v2601
  %vm2609 = vmor %vm2607, %vm2608
  %v2610 = vsel %vm2609, %v2601, %v2606
  %v2611 = vrsqrt.pop %v2579
  %v2612 = vmul.f32 %v2611, %v2579
  %v2613 = vmul.f32 %v2612, %v2611
  %v2614 = vmul.f32 0.5, %v2613
  %v2615 = vsub.f32 1.5, %v2614
  %v2616 = vmul.f32 %v2611, %v2615
  %vm2617 = vweird.f32 %v2579
  %vm2618 = vweird.f32 %v2611
  %vm2619 = vmor %vm2617, %vm2618
  %v2620 = vsel %vm2619, %v2611, %v2616
  %v2621 = vrsqrt.pop %v2580
  %v2622 = vmul.f32 %v2621, %v2580
  %v2623 = vmul.f32 %v2622, %v2621
  %v2624 = vmul.f32 0.5, %v2623
  %v2625 = vsub.f32 1.5, %v2624
  %v2626 = vmul.f32 %v2621, %v2625
  %vm2627 = vweird.f32 %v2580
  %vm2628 = vweird.f32 %v2621
  %vm2629 = vmor %vm2627, %vm2628
  %v2630 = vsel %vm2629, %v2621, %v2626
  %v2631 = vmul.f32 %v2546, %v2590
  %v2632 = vmul.f32 %v2547, %v2600
  %v2633 = vmul.f32 %v2548, %v2610
  %v2634 = vmul.f32 %v2549, %v2620
  %v2635 = vmul.f32 %v2550, %v2630
  %v2637 = vperm.slane %v2523, 0
  %v2639 = vmul.f32 %v2631, %v2637
  %v2640 = vmul.f32 %v2632, %v2637
  %v2641 = vmul.f32 %v2633, %v2637
  %v2642 = vmul.f32 %v2634, %v2637
  %v2643 = vmul.f32 %v2635, %v2637
  %v2645 = vperm.slane %v2525, 0
  %v2647 = vadd.f32 %v2639, %v2645
  %v2648 = vadd.f32 %v2640, %v2645
  %v2649 = vadd.f32 %v2641, %v2645
  %v2650 = vadd.f32 %v2642, %v2645
  %v2651 = vadd.f32 %v2643, %v2645
  %v2652 = vpack.c.bf16 %v2648, %v2647
  %v2653 = vpack.c.bf16 %v2650, %v2649
  %v2654 = vpack.c.bf16 %v2651, %v2651
  %s2655 = scalar_lea.vmem %s37, 16
  %v2656 = vld [vmem:[%s2655] sm:$0xf]
  %v2657 = vld [vmem:[%s2655 + $0x4] sm:$0xf]
  %v2658 = vld [vmem:[%s2655 + $0x8] sm:$0xf]
  %v2659 = vld [vmem:[%s2655 + $0xc] sm:$0xf]
  %s2660 = scalar_lea.vmem %s39, 1
  %v2661 = vld [vmem:[%s2660] sm:$0x1]
  %v2663 = vperm.slane %v2661, 0
  %v2669 = vunpack.c.l.b16 %v2656
  %v2670 = vunpack.c.l.b16 %v2657
  %v2671 = vunpack.c.l.b16 %v2658
  %v2672 = vunpack.c.l.b16 %v2659
  %v2673 = vpack.c.b16 %v2670, %v2669
  %v2674 = vpack.c.b16 %v2672, %v2671
  %v2678 = vsel %vm268, %v2652, 0
  %v2681 = vsel %vm268, %v2653, 0
  %v2684 = vsel %vm268, %v2654, 0
  %2686 = vmatpush.bf16.msra.mxu0 0
  %2687 = vmatpush.bf16.msra.mxu0 0
  %2688 = vmatpush.bf16.msra.mxu0 0
  %2689 = vmatpush.bf16.msra.mxu0 0
  %2690 = vmatpush.bf16.msra.mxu0 0
  %2691 = vmatpush.bf16.msra.mxu0 0
  %2692 = vmatpush.bf16.msra.mxu0 %v2674
  %2693 = vmatpush.bf16.msra.mxu0 %v2673
  %2694 = vmatmul.bf16.gmra.mxu0 %v2678
  %v2695 = vpop.f32.mrf.mxu0
  %v2696 = vadd.f32 %v2663, %v2695
  %v2697 = vpop.f32.mrf.mxu0
  %v2698 = vadd.f32 %v2663, %v2697
  %2699 = vmatmul.bf16.gmra.mxu0 %v2681
  %v2700 = vpop.f32.mrf.mxu0
  %v2701 = vadd.f32 %v2663, %v2700
  %v2702 = vpop.f32.mrf.mxu0
  %v2703 = vadd.f32 %v2663, %v2702
  %2704 = vmatmul.bf16.gmra.mxu0 %v2684
  %v2705 = vpop.f32.mrf.mxu0
  %v2706 = vadd.f32 %v2663, %v2705
  %v2707 = vpop.f32.mrf.mxu0
  %2708 = vdwg.mxu0
  %v2709 = vmax.f32 %v2696, 0.0
  %v2710 = vmax.f32 %v2698, 0.0
  %v2711 = vmax.f32 %v2701, 0.0
  %v2712 = vmax.f32 %v2703, 0.0
  %v2713 = vmax.f32 %v2706, 0.0
  %v2714 = vpack.c.bf16 %v2710, %v2709
  %v2715 = vpack.c.bf16 %v2712, %v2711
  %v2716 = vpack.c.bf16 %v2713, %v2713
  %s2717 = scalar_lea.vmem %s41, 32
  %v2718 = vld [vmem:[%s2717] sm:$0xf]
  %v2719 = vld [vmem:[%s2717 + $0x4] sm:$0xf]
  %v2720 = vld [vmem:[%s2717 + $0x8] sm:$0xf]
  %v2721 = vld [vmem:[%s2717 + $0xc] sm:$0xf]
  %v2722 = vld [vmem:[%s2717 + $0x10] sm:$0xf]
  %v2723 = vld [vmem:[%s2717 + $0x14] sm:$0xf]
  %v2724 = vld [vmem:[%s2717 + $0x18] sm:$0xf]
  %v2725 = vld [vmem:[%s2717 + $0x1c] sm:$0xf]
  %s2726 = scalar_lea.vmem %s43, 1
  %v2727 = vld [vmem:[%s2726] sm:$0x1]
  %v2729 = vperm.slane %v2727, 0
  %v2739 = vunpack.c.l.b16 %v2718
  %v2740 = vunpack.c.l.b16 %v2719
  %v2741 = vunpack.c.l.b16 %v2720
  %v2742 = vunpack.c.l.b16 %v2721
  %v2743 = vunpack.c.l.b16 %v2722
  %v2744 = vunpack.c.l.b16 %v2723
  %v2745 = vunpack.c.l.b16 %v2724
  %v2746 = vunpack.c.l.b16 %v2725
  %v2747 = vpack.c.b16 %v2740, %v2739
  %v2748 = vpack.c.b16 %v2742, %v2741
  %v2749 = vpack.c.b16 %v2744, %v2743
  %v2750 = vpack.c.b16 %v2746, %v2745
  %v2756 = vsel %vm1371, %v2714, 0
  %v2759 = vsel %vm1371, %v2715, 0
  %v2762 = vsel %vm1371, %v2716, 0
  %2764 = vmatpush.bf16.msra.mxu0 0
  %2765 = vmatpush.bf16.msra.mxu0 0
  %2766 = vmatpush.bf16.msra.mxu0 0
  %2767 = vmatpush.bf16.msra.mxu0 0
  %2768 = vmatpush.bf16.msra.mxu0 %v2750
  %2769 = vmatpush.bf16.msra.mxu0 %v2749
  %2770 = vmatpush.bf16.msra.mxu0 %v2748
  %2771 = vmatpush.bf16.msra.mxu0 %v2747
  %2772 = vmatmul.bf16.gmra.mxu0 %v2756
  %v2773 = vpop.f32.mrf.mxu0
  %v2774 = vadd.f32 %v2729, %v2773
  %v2775 = vpop.f32.mrf.mxu0
  %v2776 = vadd.f32 %v2729, %v2775
  %2777 = vmatmul.bf16.gmra.mxu0 %v2759
  %v2778 = vpop.f32.mrf.mxu0
  %v2779 = vadd.f32 %v2729, %v2778
  %v2780 = vpop.f32.mrf.mxu0
  %v2781 = vadd.f32 %v2729, %v2780
  %2782 = vmatmul.bf16.gmra.mxu0 %v2762
  %v2783 = vpop.f32.mrf.mxu0
  %v2784 = vadd.f32 %v2729, %v2783
  %v2785 = vpop.f32.mrf.mxu0
  %2786 = vdwg.mxu0
  %v2787 = vadd.f32 %v2647, %v2774
  %v2788 = vadd.f32 %v2648, %v2776
  %v2789 = vadd.f32 %v2649, %v2779
  %v2790 = vadd.f32 %v2650, %v2781
  %v2791 = vadd.f32 %v2651, %v2784
  %s2792 = scalar_lea.vmem %s45, 1
  %v2793 = vld [vmem:[%s2792] sm:$0x1]
  %s2794 = scalar_lea.vmem %s47, 1
  %v2795 = vld [vmem:[%s2794] sm:$0x1]
  %v2796 = vsel %vm268, %v2787, 0.0
  %2797 = vadd.xlane.f32.xlu0 %v2796
  %v2798 = vpop.xlane.xlu0 %2797
  %v2799 = vsel %vm268, %v2788, 0.0
  %2800 = vadd.xlane.f32.xlu0 %v2799
  %v2801 = vpop.xlane.xlu0 %2800
  %v2802 = vsel %vm268, %v2789, 0.0
  %2803 = vadd.xlane.f32.xlu0 %v2802
  %v2804 = vpop.xlane.xlu0 %2803
  %v2805 = vsel %vm268, %v2790, 0.0
  %2806 = vadd.xlane.f32.xlu0 %v2805
  %v2807 = vpop.xlane.xlu0 %2806
  %v2808 = vsel %vm1150, %v2791, 0.0
  %2809 = vadd.xlane.f32.xlu0 %v2808
  %v2810 = vpop.xlane.xlu0 %2809
  %v2811 = vmul.f32 %v2798, %v1160
  %v2812 = vmul.f32 %v2801, %v1160
  %v2813 = vmul.f32 %v2804, %v1160
  %v2814 = vmul.f32 %v2807, %v1160
  %v2815 = vmul.f32 %v2810, %v1160
  %v2816 = vsub.f32 %v2787, %v2811
  %v2817 = vsub.f32 %v2788, %v2812
  %v2818 = vsub.f32 %v2789, %v2813
  %v2819 = vsub.f32 %v2790, %v2814
  %v2820 = vsub.f32 %v2791, %v2815
  %v2821 = vmul.f32 %v2816, %v2816
  %v2822 = vmul.f32 %v2817, %v2817
  %v2823 = vmul.f32 %v2818, %v2818
  %v2824 = vmul.f32 %v2819, %v2819
  %v2825 = vmul.f32 %v2820, %v2820
  %v2826 = vsel %vm268, %v2821, 0.0
  %2827 = vadd.xlane.f32.xlu0 %v2826
  %v2828 = vpop.xlane.xlu0 %2827
  %v2829 = vsel %vm268, %v2822, 0.0
  %2830 = vadd.xlane.f32.xlu0 %v2829
  %v2831 = vpop.xlane.xlu0 %2830
  %v2832 = vsel %vm268, %v2823, 0.0
  %2833 = vadd.xlane.f32.xlu0 %v2832
  %v2834 = vpop.xlane.xlu0 %2833
  %v2835 = vsel %vm268, %v2824, 0.0
  %2836 = vadd.xlane.f32.xlu0 %v2835
  %v2837 = vpop.xlane.xlu0 %2836
  %v2838 = vsel %vm1150, %v2825, 0.0
  %2839 = vadd.xlane.f32.xlu0 %v2838
  %v2840 = vpop.xlane.xlu0 %2839
  %v2841 = vmul.f32 %v2828, %v1160
  %v2842 = vmul.f32 %v2831, %v1160
  %v2843 = vmul.f32 %v2834, %v1160
  %v2844 = vmul.f32 %v2837, %v1160
  %v2845 = vmul.f32 %v2840, %v1160
  %v2846 = vadd.f32 %v2841, 1e-05
  %v2847 = vadd.f32 %v2842, 1e-05
  %v2848 = vadd.f32 %v2843, 1e-05
  %v2849 = vadd.f32 %v2844, 1e-05
  %v2850 = vadd.f32 %v2845, 1e-05
  %v2851 = vrsqrt.pop %v2846
  %v2852 = vmul.f32 %v2851, %v2846
  %v2853 = vmul.f32 %v2852, %v2851
  %v2854 = vmul.f32 0.5, %v2853
  %v2855 = vsub.f32 1.5, %v2854
  %v2856 = vmul.f32 %v2851, %v2855
  %vm2857 = vweird.f32 %v2846
  %vm2858 = vweird.f32 %v2851
  %vm2859 = vmor %vm2857, %vm2858
  %v2860 = vsel %vm2859, %v2851, %v2856
  %v2861 = vrsqrt.pop %v2847
  %v2862 = vmul.f32 %v2861, %v2847
  %v2863 = vmul.f32 %v2862, %v2861
  %v2864 = vmul.f32 0.5, %v2863
  %v2865 = vsub.f32 1.5, %v2864
  %v2866 = vmul.f32 %v2861, %v2865
  %vm2867 = vweird.f32 %v2847
  %vm2868 = vweird.f32 %v2861
  %vm2869 = vmor %vm2867, %vm2868
  %v2870 = vsel %vm2869, %v2861, %v2866
  %v2871 = vrsqrt.pop %v2848
  %v2872 = vmul.f32 %v2871, %v2848
  %v2873 = vmul.f32 %v2872, %v2871
  %v2874 = vmul.f32 0.5, %v2873
  %v2875 = vsub.f32 1.5, %v2874
  %v2876 = vmul.f32 %v2871, %v2875
  %vm2877 = vweird.f32 %v2848
  %vm2878 = vweird.f32 %v2871
  %vm2879 = vmor %vm2877, %vm2878
  %v2880 = vsel %vm2879, %v2871, %v2876
  %v2881 = vrsqrt.pop %v2849
  %v2882 = vmul.f32 %v2881, %v2849
  %v2883 = vmul.f32 %v2882, %v2881
  %v2884 = vmul.f32 0.5, %v2883
  %v2885 = vsub.f32 1.5, %v2884
  %v2886 = vmul.f32 %v2881, %v2885
  %vm2887 = vweird.f32 %v2849
  %vm2888 = vweird.f32 %v2881
  %vm2889 = vmor %vm2887, %vm2888
  %v2890 = vsel %vm2889, %v2881, %v2886
  %v2891 = vrsqrt.pop %v2850
  %v2892 = vmul.f32 %v2891, %v2850
  %v2893 = vmul.f32 %v2892, %v2891
  %v2894 = vmul.f32 0.5, %v2893
  %v2895 = vsub.f32 1.5, %v2894
  %v2896 = vmul.f32 %v2891, %v2895
  %vm2897 = vweird.f32 %v2850
  %vm2898 = vweird.f32 %v2891
  %vm2899 = vmor %vm2897, %vm2898
  %v2900 = vsel %vm2899, %v2891, %v2896
  %v2901 = vmul.f32 %v2816, %v2860
  %v2902 = vmul.f32 %v2817, %v2870
  %v2903 = vmul.f32 %v2818, %v2880
  %v2904 = vmul.f32 %v2819, %v2890
  %v2905 = vmul.f32 %v2820, %v2900
  %v2907 = vperm.slane %v2793, 0
  %v2909 = vmul.f32 %v2901, %v2907
  %v2910 = vmul.f32 %v2902, %v2907
  %v2911 = vmul.f32 %v2903, %v2907
  %v2912 = vmul.f32 %v2904, %v2907
  %v2913 = vmul.f32 %v2905, %v2907
  %v2915 = vperm.slane %v2795, 0
  %v2917 = vadd.f32 %v2909, %v2915
  %v2918 = vadd.f32 %v2910, %v2915
  %v2919 = vadd.f32 %v2911, %v2915
  %v2920 = vadd.f32 %v2912, %v2915
  %v2921 = vadd.f32 %v2913, %v2915
  %v2923 = vsel %vm427, %v2280, 0
  %v2926 = vsel %vm427, %v2281, 0
  %v2929 = vsel %vm427, %v2282, 0
  %v2932 = vsel %vm147, %v1583, 0
  %2934 = vmatpush.msra.mxu0 0.0
  %2935 = vmatpush.msra.mxu0 0.0
  %2936 = vmatpush.msra.mxu0 0.0
  %2937 = vmatpush.msra.mxu0 0.0
  %2938 = vmatpush.msra.mxu0 0.0
  %2939 = vmatpush.msra.mxu0 0.0
  %2940 = vmatpush.msra.mxu0 0.0
  %2941 = vmatpush.msra.mxu0 0.0
  %2942 = vmatpush.msra.mxu0 0.0
  %2943 = vmatpush.msra.mxu0 0.0
  %2944 = vmatpush.msra.mxu0 0.0
  %2945 = vmatpush.msra.mxu0 0.0
  %2946 = vmatpush.msra.mxu0 0.0
  %2947 = vmatpush.msra.mxu0 %v2932
  %2948 = vmatpush.msra.mxu0 %v1582
  %2949 = vmatpush.msra.mxu0 %v1581
  %2950 = vmatmul.f32.gmra.mxu0 %v2923
  %v2951 = vpop.f32.mrf.mxu0
  %v2952 = vadd.f32 0.0, %v2951
  %2953 = vmatmul.f32.gmra.mxu0 %v2926
  %v2954 = vpop.f32.mrf.mxu0
  %v2955 = vadd.f32 0.0, %v2954
  %2956 = vmatmul.f32.gmra.mxu0 %v2929
  %v2957 = vpop.f32.mrf.mxu0
  %v2958 = vadd.f32 0.0, %v2957
  %2959 = vdwg.mxu0
  %v2960 = vadd.f32 %v1581, %v2952
  %v2961 = vadd.f32 %v1582, %v2955
  %v2962 = vadd.f32 %v1583, %v2958
  %vm2963 = vcmp.ne.f32.partialorder %v2960, 0.0
  %vm2964 = vcmp.ne.f32.partialorder %v2961, 0.0
  %vm2965 = vcmp.ne.f32.partialorder %v2962, 0.0
  %v2966 = vsel %vm2963, 1.0, %v2960
  %v2967 = vsel %vm2964, 1.0, %v2961
  %v2968 = vsel %vm2965, 1.0, %v2962
  %v2970 = vsel %vm427, %v2415, 0
  %v2973 = vsel %vm427, %v2416, 0
  %v2976 = vsel %vm427, %v2417, 0
  %v2979 = vsel %vm147, %v1627, 0
  %2981 = vmatpush.msra.mxu0 0.0
  %2982 = vmatpush.msra.mxu0 0.0
  %2983 = vmatpush.msra.mxu0 0.0
  %2984 = vmatpush.msra.mxu0 0.0
  %2985 = vmatpush.msra.mxu0 0.0
  %2986 = vmatpush.msra.mxu0 0.0
  %2987 = vmatpush.msra.mxu0 0.0
  %2988 = vmatpush.msra.mxu0 0.0
  %2989 = vmatpush.msra.mxu0 0.0
  %2990 = vmatpush.msra.mxu0 0.0
  %2991 = vmatpush.msra.mxu0 0.0
  %2992 = vmatpush.msra.mxu0 0.0
  %2993 = vmatpush.msra.mxu0 0.0
  %2994 = vmatpush.msra.mxu0 %v2979
  %2995 = vmatpush.msra.mxu0 %v1626
  %2996 = vmatpush.msra.mxu0 %v1625
  %2997 = vmatmul.f32.gmra.mxu0 %v2970
  %v2998 = vpop.f32.mrf.mxu0
  %v2999 = vadd.f32 0.0, %v2998
  %3000 = vmatmul.f32.gmra.mxu0 %v2973
  %v3001 = vpop.f32.mrf.mxu0
  %v3002 = vadd.f32 0.0, %v3001
  %3003 = vmatmul.f32.gmra.mxu0 %v2976
  %v3004 = vpop.f32.mrf.mxu0
  %v3005 = vadd.f32 0.0, %v3004
  %3006 = vdwg.mxu0
  %v3007 = vadd.f32 %v1625, %v2999
  %v3008 = vadd.f32 %v1626, %v3002
  %v3009 = vadd.f32 %v1627, %v3005
  %vm3010 = vcmp.ne.f32.partialorder %v3007, 0.0
  %vm3011 = vcmp.ne.f32.partialorder %v3008, 0.0
  %vm3012 = vcmp.ne.f32.partialorder %v3009, 0.0
  %v3013 = vsel %vm3010, 1.0, %v3007
  %v3014 = vsel %vm3011, 1.0, %v3008
  %v3015 = vsel %vm3012, 1.0, %v3009
  %vm3019 = vcmask 1045504
  %v3020 = vrot.slane %v2919, 2
  %v3021 = vrot.slane %v2920, 2
  %v3022 = vsel %vm3019, %v3020, %v3021
  %v3023 = vrot.slane %v2921, 2
  %v3024 = vsel %vm3019, %v3021, %v3023
  %v3027 = vrot.slane %v2919, 1
  %v3030 = vsel %vm146, %v3027, %v3023
  %v3031 = vpack.c.bf16 %v2918, %v2917
  %v3032 = vpack.c.bf16 %v3024, %v3022
  %v3033 = vld [vmem:[%s49] sm:$0xf]
  %v3034 = vld [vmem:[%s49 + $0x4] sm:$0xf]
  %v3035 = vld [vmem:[%s49 + $0x8] sm:$0xf]
  %v3036 = vld [vmem:[%s49 + $0xc] sm:$0xf]
  %v3037 = vld [vmem:[%s51] sm:$0x1]
  %v3039 = vperm.slane %v3037, 0
  %v3045 = vunpack.c.l.b16 %v3033
  %v3046 = vunpack.c.l.b16 %v3034
  %v3047 = vunpack.c.l.b16 %v3035
  %v3048 = vunpack.c.l.b16 %v3036
  %v3049 = vpack.c.b16 %v3046, %v3045
  %v3050 = vpack.c.b16 %v3048, %v3047
  %v3054 = vsel %vm268, %v3031, 0
  %v3057 = vsel %vm268, %v3032, 0
  %3059 = vmatpush.bf16.msra.mxu0 0
  %3060 = vmatpush.bf16.msra.mxu0 0
  %3061 = vmatpush.bf16.msra.mxu0 0
  %3062 = vmatpush.bf16.msra.mxu0 0
  %3063 = vmatpush.bf16.msra.mxu0 0
  %3064 = vmatpush.bf16.msra.mxu0 0
  %3065 = vmatpush.bf16.msra.mxu0 %v3050
  %3066 = vmatpush.bf16.msra.mxu0 %v3049
  %3067 = vmatmul.bf16.gmra.mxu0 %v3054
  %v3068 = vpop.f32.mrf.mxu0
  %v3069 = vadd.f32 %v3039, %v3068
  %v3070 = vpop.f32.mrf.mxu0
  %v3071 = vadd.f32 %v3039, %v3070
  %3072 = vmatmul.bf16.gmra.mxu0 %v3057
  %v3073 = vpop.f32.mrf.mxu0
  %v3074 = vadd.f32 %v3039, %v3073
  %v3075 = vpop.f32.mrf.mxu0
  %v3076 = vadd.f32 %v3039, %v3075
  %3077 = vdwg.mxu0
  %3078 = vst.msk [vmem:[%s57] sm:$0xff] %vm139, %v3069
  %3079 = vst.msk [vmem:[%s57 + $0x8] sm:$0xff] %vm139, %v3071
  %3080 = vst.msk [vmem:[%s57 + $0x10] sm:$0xff] %vm139, %v3074
  %3081 = vst.msk [vmem:[%s57 + $0x18] sm:$0xff] %vm139, %v3076
  %v3082 = vpack.c.bf16 %v3030, %v3030
  %v3083 = vld [vmem:[%s53] sm:$0xf]
  %v3084 = vld [vmem:[%s53 + $0x4] sm:$0xf]
  %v3085 = vld [vmem:[%s53 + $0x8] sm:$0xf]
  %v3086 = vld [vmem:[%s53 + $0xc] sm:$0xf]
  %v3087 = vld [vmem:[#allocation2] sm:$0x1]
  %v3089 = vperm.slane %v3087, 0
  %v3095 = vunpack.c.l.b16 %v3083
  %v3096 = vunpack.c.l.b16 %v3084
  %v3097 = vunpack.c.l.b16 %v3085
  %v3098 = vunpack.c.l.b16 %v3086
  %v3099 = vpack.c.b16 %v3096, %v3095
  %v3100 = vpack.c.b16 %v3098, %v3097
  %v3104 = vsel %vm268, %v3082, 0
  %3106 = vmatpush.bf16.msra.mxu0 0
  %3107 = vmatpush.bf16.msra.mxu0 0
  %3108 = vmatpush.bf16.msra.mxu0 0
  %3109 = vmatpush.bf16.msra.mxu0 0
  %3110 = vmatpush.bf16.msra.mxu0 0
  %3111 = vmatpush.bf16.msra.mxu0 0
  %3112 = vmatpush.bf16.msra.mxu0 %v3100
  %3113 = vmatpush.bf16.msra.mxu0 %v3099
  %3114 = vmatmul.bf16.gmra.mxu0 %v3104
  %v3115 = vpop.f32.mrf.mxu0
  %v3116 = vadd.f32 %v3089, %v3115
  %v3117 = vpop.f32.mrf.mxu0
  %3118 = vdwg.mxu0
  %vm3119 = vcmask 1024
  %3120 = vst.msk [vmem:[%s59] sm:$0x3] %vm3119, %v3116
  %3121 = vst.msk [vmem:[%s61] sm:$0xff] %vm427, %v2966
  %3122 = vst.msk [vmem:[%s61 + $0x8] sm:$0xff] %vm427, %v2967
  %3123 = vst.msk [vmem:[%s61 + $0x10] sm:$0x3] %vm434, %v2968
  %3124 = vst.msk [vmem:[%s63] sm:$0xff] %vm427, %v2271
  %3125 = vst.msk [vmem:[%s63 + $0x8] sm:$0xff] %vm427, %v2272
  %3126 = vst.msk [vmem:[%s63 + $0x10] sm:$0x3] %vm434, %v2273
  %s3127 = scalar_lea.vmem %s61, 24
  %3128 = vst.msk [vmem:[%s3127] sm:$0xff] %vm427, %v3013
  %3129 = vst.msk [vmem:[%s3127 + $0x8] sm:$0xff] %vm427, %v3014
  %3130 = vst.msk [vmem:[%s3127 + $0x10] sm:$0x3] %vm434, %v3015
  %s3131 = scalar_lea.vmem %s63, 24
  %3132 = vst.msk [vmem:[%s3131] sm:$0xff] %vm427, %v2406
  %3133 = vst.msk [vmem:[%s3131 + $0x8] sm:$0xff] %vm427, %v2407
  %3134 = vst.msk [vmem:[%s3131 + $0x10] sm:$0x3] %vm434, %v2408
  // Predicated region
  $region114: #{tpu_custom_call.1} parent=0 // pred_check
    _
  $region115: #{tpu_custom_call.1} parent=0 // pred_check_branch
    %3136 = sbr.rel (0) target = $region117
  $region116: #{tpu_custom_call.1} parent=0 // pred_region
    _
  $region117: #{tpu_custom_call.1} parent=0 // pred_fallthru
    _
  // Predicated region
  $region118: #{tpu_custom_call.1} parent=0 // pred_check
    _
  $region119: #{tpu_custom_call.1} parent=0 // pred_check_branch
    %3138 = sbr.rel (0) target = $region121
  $region120: #{tpu_custom_call.1} parent=0 // pred_region
    _
  $region121: #{tpu_custom_call.1} parent=0 // pred_fallthru
    _
  // Predicated region
  $region122: #{tpu_custom_call.1} parent=0 // pred_check
    _
  $region123: #{tpu_custom_call.1} parent=0 // pred_check_branch
    %3140 = sbr.rel (0) target = $region125
  $region124: #{tpu_custom_call.1} parent=0 // pred_region
    _
  $region125: #{tpu_custom_call.1} parent=0 // pred_fallthru
    _
  // Predicated region
  $region126: #{tpu_custom_call.1} parent=0 // pred_check
    _
  $region127: #{tpu_custom_call.1} parent=0 // pred_check_branch
    %3142 = sbr.rel (0) target = $region129
  $region128: #{tpu_custom_call.1} parent=0 // pred_region
    _
  $region129: #{tpu_custom_call.1} parent=0 // pred_fallthru
    _
  // Predicated region
  $region130: #{tpu_custom_call.1} parent=0 // pred_check
    _
  $region131: #{tpu_custom_call.1} parent=0 // pred_check_branch
    %3144 = sbr.rel (0) target = $region133
  $region132: #{tpu_custom_call.1} parent=0 // pred_region
    _
  $region133: #{tpu_custom_call.1} parent=0 // pred_fallthru
    _
  // Predicated region
  $region134: #{tpu_custom_call.1} parent=0 // pred_check
    _
  $region135: #{tpu_custom_call.1} parent=0 // pred_check_branch
    %3146 = sbr.rel (0) target = $region137
  $region136: #{tpu_custom_call.1} parent=0 // pred_region
    _
  $region137: #{tpu_custom_call.1} parent=0 // pred_fallthru
    _
  // Predicated region
  $region138: #{tpu_custom_call.1} parent=0 // pred_check
    _
  $region139: #{tpu_custom_call.1} parent=0 // pred_check_branch
    %3148 = sbr.rel (0) target = $region141
  $region140: #{tpu_custom_call.1} parent=0 // pred_region
    _
  $region141: #{tpu_custom_call.1} parent=0 // pred_fallthru
    _
  // Predicated region
  $region142: #{tpu_custom_call.1} parent=0 // pred_check
    _
  $region143: #{tpu_custom_call.1} parent=0 // pred_check_branch
    %3150 = sbr.rel (0) target = $region145
  $region144: #{tpu_custom_call.1} parent=0 // pred_region
    _
  $region145: #{tpu_custom_call.1} parent=0 // pred_fallthru
    _

</llo_original>
